<compile_context>
chip_gen: v7x
topology: tpu7x:2x2x1
jax: 0.10.0
libtpu: 0.0.40
codegen_flags: <defaults>
</compile_context>

<pallas_src>
import functools
import warnings

import numpy as np
import jax
import jax.numpy as jnp
from jax.experimental import pallas as pl
from jax.experimental.pallas import tpu as pltpu

_EPS = 1e-8


# --------------------------------------------------------------------------
# Kernel
# --------------------------------------------------------------------------
def _gather_scaled(oh_ref, sd_ref):
    """Row-gather scaled_data[vids] for this node block via one-hot matmul."""
    oh = oh_ref[...].astype(jnp.bfloat16)            # exact: entries are 0/1
    sd = sd_ref[...]                                 # (D_pad, tb) f32
    # 3-way bf16 split of the f32 values (exact partition of the mantissa).
    hi = sd.astype(jnp.bfloat16)
    r1 = sd - hi.astype(jnp.float32)
    md = r1.astype(jnp.bfloat16)
    lo = (r1 - md.astype(jnp.float32)).astype(jnp.bfloat16)
    g_hi = jnp.dot(oh, hi, preferred_element_type=jnp.float32)
    g_md = jnp.dot(oh, md, preferred_element_type=jnp.float32)
    g_lo = jnp.dot(oh, lo, preferred_element_type=jnp.float32)
    # The MXU accumulates in f32, so this reconstructs the original f32 x.
    return g_hi + (g_md + g_lo)


def _compute_mars(x, hb, mu, ls):
    """x: (tn, tb) scaled data; hb / mu / ls: (tn, 1) per-node columns."""
    ls = jnp.maximum(ls, -5.0)                 # log_scales.clip(min=-5.0)
    inv = jnp.exp(-ls)                         # 1/scale on the tiny column
    t = (x - mu) * inv                         # multiply instead of divide
    d = hb * inv
    l_b = t - d
    r_b = t + d
    # logsigmoid(z) = min(z, 0) - log1p(exp(-|z|)); share the exp/log1p pieces.
    lp_l = jnp.log1p(jnp.exp(-jnp.abs(l_b)))
    lp_r = jnp.log1p(jnp.exp(-jnp.abs(r_b)))
    lsig_l = jnp.minimum(l_b, 0.0) - lp_l
    lsig_r = jnp.minimum(r_b, 0.0) - lp_r
    # _log_min_exp(a, b) = a + log(1 - exp(b - a) + eps); eps kept exactly as
    # in the reference module (so saturated tails floor at log(eps)).
    mars = lsig_r + jnp.log(1.0 - jnp.exp(lsig_l - lsig_r) + _EPS)
    mars = jnp.where(x < 0.01, lsig_l, mars)
    mars = jnp.where(x > 0.99, jnp.log(1.0 - jnp.exp(lsig_r) + _EPS), mars)
    return mars


def _kernel(sd_ref, oh_ref, pp_ref, o_ref):
    x = _gather_scaled(oh_ref, sd_ref)
    pp = pp_ref[...]
    o_ref[...] = _compute_mars(x, pp[:, 0:1], pp[:, 1:2], pp[:, 2:3])


def _kernel_aliased(sd_ref, oh_ref, pp_ref, nm_ref, o_ref):
    del nm_ref        # raw HBM ref aliased with o_ref; never read, no DMA
    _kernel(sd_ref, oh_ref, pp_ref, o_ref)


# --------------------------------------------------------------------------
# Tiling helpers
# --------------------------------------------------------------------------
def _pick_node_tile(n, sid=0, target=256):
    """Largest multiple of 8 <= target dividing n with sid % tile == 0
    (0 if none)."""
    t = min(int(n), target)
    t -= t % 8
    while t >= 8:
        if n % t == 0 and sid % t == 0:
            return t
        t -= 8
    return 0


def _pick_batch_tile(b, target=512):
    """Full-width block if small, else the largest multiple of 128 dividing b
    (falls back to a single full-width block)."""
    b = int(b)
    if b <= target:
        return b
    t = (target // 128) * 128
    while t >= 128:
        if b % t == 0:
            return t
        t -= 128
    return b


# --------------------------------------------------------------------------
# Forward wrapper (jitted; node_mars is donated so the write is in place)
# --------------------------------------------------------------------------
@functools.partial(jax.jit,
                   static_argnames=("sid", "tn", "tb", "aligned"),
                   donate_argnums=(8,))
def _forward(data, d2vids, rlow, rhigh, onehot, hb_nodes, mus, log_scales,
             node_mars, *, sid, tn, tb, aligned):
    Np, D_pad = onehot.shape
    N = mus.shape[0]
    M, B = node_mars.shape

    # Per-distribution rescaling -- tiny ([num_dists, B]); the big per-node
    # gather happens inside the kernel.
    scaled = (data[d2vids].astype(jnp.float32) - rlow) / (rhigh - rlow)
    D = scaled.shape[0]
    if D_pad > D:
        scaled = jnp.pad(scaled, ((0, D_pad - D), (0, 0)))

    if Np > N:                                     # fallback path: pad node axis
        mus = jnp.pad(mus, (0, Np - N))
        log_scales = jnp.pad(log_scales, (0, Np - N))
    params = jnp.stack([hb_nodes, mus, log_scales], axis=1)      # [Np, 3]

    grid = (Np // tn, B // tb)
    nb, bb = grid
    cost = pl.CostEstimate(
        flops=Np * B * (6 * D_pad + 30),
        transcendentals=8 * Np * B,
        bytes_accessed=4 * (Np * B                       # output writes
                            + nb * D_pad * B             # scaled_data re-reads
                            + bb * Np * (D_pad + 3)),    # one-hot + params
    )
    cparams = pltpu.CompilerParams(
        dimension_semantics=("parallel", "parallel"),
        vmem_limit_bytes=32 * 1024 * 1024,
    )
    sd_spec = pl.BlockSpec((D_pad, tb), lambda i, j: (0, j))
    oh_spec = pl.BlockSpec((tn, D_pad), lambda i, j: (i, 0))
    pp_spec = pl.BlockSpec((tn, 3), lambda i, j: (i, 0))

    if aligned:
        # Direct write into node_mars: the aliased input/output share the HBM
        # buffer.  The aliased input stays in HBM (pl.ANY, never DMA'd); only
        # rows [sid, sid+N) are overwritten by the blocked output, the rest of
        # the buffer is preserved.
        blk = sid // tn
        nm_in_spec = pl.BlockSpec(memory_space=pl.ANY)
        nm_out_spec = pl.BlockSpec((tn, tb), lambda i, j: (i + blk, j))
        return pl.pallas_call(
            _kernel_aliased,
            out_shape=jax.ShapeDtypeStruct((M, B), node_mars.dtype),
            grid=grid,
            in_specs=[sd_spec, oh_spec, pp_spec, nm_in_spec],
            out_specs=nm_out_spec,
            input_output_aliases={3: 0},
            compiler_params=cparams,
            cost_estimate=cost,
        )(scaled, onehot, params, node_mars)

    # Fallback: node range not tile-aligned -> padded [Np, B] slab, then an
    # in-place (donated) row update of node_mars.
    mars = pl.pallas_call(
        _kernel,
        out_shape=jax.ShapeDtypeStruct((Np, B), jnp.float32),
        grid=grid,
        in_specs=[sd_spec, oh_spec, pp_spec],
        out_specs=pl.BlockSpec((tn, tb), lambda i, j: (i, j)),
        compiler_params=cparams,
        cost_estimate=cost,
    )(scaled, onehot, params)
    return node_mars.at[sid:sid + N, :].set(mars[:N].astype(node_mars.dtype))


# --------------------------------------------------------------------------
# Layer (forward only)
# --------------------------------------------------------------------------
class DiscreteLogisticLayerJAX:
    """Forward-only JAX/Pallas re-implementation of DiscreteLogisticLayer.

    node_cfg: list of (var, num_nodes, (range_lo, range_hi), bin_size).
    """

    def __init__(self, node_cfg, key, cum_nodes=0):
        self.vars = [int(c[0]) for c in node_cfg]
        self.node_sizes = [int(c[1]) for c in node_cfg]
        self.node_input_range = [c[2] for c in node_cfg]
        self.node_bin_sizes = [float(c[3]) for c in node_cfg]

        N = int(sum(self.node_sizes))
        self.num_nodes = N
        sid = int(cum_nodes)
        self._output_ind_range = (sid, sid + N)

        num_dists = len(node_cfg)
        self.d2vids = jnp.asarray(self.vars, dtype=jnp.int32)
        self.vrangeslow = jnp.asarray([r[0] for r in self.node_input_range],
                                      jnp.float32)[:, None]
        self.vrangeshigh = jnp.asarray([r[1] for r in self.node_input_range],
                                       jnp.float32)[:, None]
        vhb = np.asarray(self.node_bin_sizes, np.float32) / 2.0
        self.vhbinsizes = jnp.asarray(vhb)[:, None]

        vids = np.repeat(np.arange(num_dists, dtype=np.int32),
                         np.asarray(self.node_sizes))
        self.vids = jnp.asarray(vids)

        # Node-axis tiling: aliased fast path only when the layer's node range
        # tiles cleanly inside node_mars (tile divides both N and sid).
        tn = _pick_node_tile(N, sid)
        aligned = tn > 0
        if aligned:
            Np = N
        else:
            Np = ((N + 7) // 8) * 8
            tn = _pick_node_tile(Np)
        self._tn, self._aligned, self._Np = tn, aligned, Np

        # One-hot gather matrix (node -> distribution), contraction dim padded
        # to a multiple of 8.  Padded node rows are all-zero => finite dummy
        # outputs that are sliced away in the fallback path.
        # TODO(synk): for layers with very many distributions, a scalar-prefetch
        # per-group index_map would avoid the O(N * num_dists) one-hot matrix.
        D_pad = max(8, ((num_dists + 7) // 8) * 8)
        onehot = np.zeros((Np, D_pad), np.float32)
        onehot[np.arange(N), vids] = 1.0
        self.onehot = jnp.asarray(onehot)

        hb_nodes = np.zeros((Np,), np.float32)
        hb_nodes[:N] = vhb[vids]
        self.hb_nodes = jnp.asarray(hb_nodes)

        # _init_params(perturbation=0.2): mus ~ U[0,1), log_scales ~ -0.2*U[0,1)
        k1, k2 = jax.random.split(key)
        self.mus = jax.random.uniform(k1, (N,), jnp.float32)
        self.log_scales = jax.random.uniform(k2, (N,), jnp.float32) * -0.2

    def forward(self, data, node_mars):
        """data: [num_vars, B]; node_mars: [num_nodes_total, B] (donated).

        Returns node_mars with rows [sid:eid) overwritten by this layer.
        """
        assert data.shape[1] == node_mars.shape[1]
        sid, _ = self._output_ind_range
        tb = _pick_batch_tile(node_mars.shape[1])
        return _forward(data, self.d2vids, self.vrangeslow, self.vrangeshigh,
                        self.onehot, self.hb_nodes, self.mus, self.log_scales,
                        node_mars,
                        sid=sid, tn=self._tn, tb=tb, aligned=self._aligned)


# --------------------------------------------------------------------------
# Pure-JAX reference (mirrors the PyTorch _dense_forward_pass)
# --------------------------------------------------------------------------
def _reference_forward(layer, data, node_mars):
    eps = 1e-8
    sid, eid = layer._output_ind_range
    scaled_data = (data[layer.d2vids] - layer.vrangeslow) / (
        layer.vrangeshigh - layer.vrangeslow)
    sd = scaled_data[layer.vids]                       # [N, B]
    hb = layer.vhbinsizes[layer.vids]                  # [N, 1]
    mus = layer.mus[:, None]
    ls = jnp.maximum(layer.log_scales, -5.0)[:, None]
    scale = jnp.exp(ls)
    l_b = (sd - hb - mus) / scale
    r_b = (sd + hb - mus) / scale
    lsl = jnp.minimum(l_b, 0.0) - jnp.log1p(jnp.exp(-jnp.abs(l_b)))
    lsr = jnp.minimum(r_b, 0.0) - jnp.log1p(jnp.exp(-jnp.abs(r_b)))
    mars = lsr + jnp.log(1.0 - jnp.exp(lsl - lsr) + eps)
    mars = jnp.where(sd < 0.01, lsl, mars)
    mars = jnp.where(sd > 0.99, jnp.log(1.0 - jnp.exp(lsr) + eps), mars)
    return node_mars.at[sid:eid, :].set(mars)


def _make_data(node_cfg, B, key):
    lo = jnp.asarray([c[2][0] for c in node_cfg], jnp.float32)[:, None]
    hi = jnp.asarray([c[2][1] for c in node_cfg], jnp.float32)[:, None]
    u = jax.random.uniform(key, (len(node_cfg), B), jnp.float32)
    return lo + u * (hi - lo)


if __name__ == "__main__":
    warnings.filterwarnings(
        "ignore", message="Some donated buffers were not usable")
    root = jax.random.PRNGKey(0)
    kp1, kd1, kp2, kd2 = jax.random.split(root, 4)

    # Tolerances cover the deliberate reassociation ((x - mu) * exp(-ls) vs.
    # division by exp(ls)) amplified through the log(1 - exp(.)) cancellation;
    # everything else matches the reference to f32 ulps.
    RTOL, ATOL = 2e-3, 1e-5

    # ---- Test 1: tile-aligned layer -> aliased direct-write path, 2x2 grid.
    node_cfg1 = [
        (0, 64, (0.0, 255.0), 1.0 / 255.0),
        (1, 128, (0.0, 255.0), 1.0 / 255.0),
        (2, 64, (-1.0, 1.0), 0.05),
        (3, 64, (0.0, 1.0), 1.0 / 255.0),
    ]
    B1 = 1024
    layer1 = DiscreteLogisticLayerJAX(node_cfg1, kp1, cum_nodes=0)
    data1 = _make_data(node_cfg1, B1, kd1)
    M1 = layer1.num_nodes + 8        # extra rows owned by "other layers"
    node_mars1 = jnp.full((M1, B1), -1.2345, jnp.float32)
    nm1_init = np.asarray(node_mars1)            # snapshot (buffer is donated)
    ref1 = np.asarray(_reference_forward(layer1, data1, jnp.asarray(nm1_init)))
    out1 = np.asarray(jax.block_until_ready(layer1.forward(data1, node_mars1)))
    np.testing.assert_allclose(out1, ref1, rtol=RTOL, atol=ATOL)

    # ---- Test 2: unaligned node range / odd batch -> padded fallback path.
    node_cfg2 = [
        (0, 5, (0.0, 255.0), 1.0 / 255.0),
        (1, 6, (-2.0, 3.0), 0.1),
        (2, 2, (0.0, 1.0), 0.02),
    ]
    B2 = 10
    layer2 = DiscreteLogisticLayerJAX(node_cfg2, kp2, cum_nodes=5)
    data2 = _make_data(node_cfg2, B2, kd2)
    M2 = 24
    node_mars2 = jnp.full((M2, B2), 3.21, jnp.float32)
    nm2_init = np.asarray(node_mars2)
    ref2 = np.asarray(_reference_forward(layer2, data2, jnp.asarray(nm2_init)))
    out2 = np.asarray(jax.block_until_ready(layer2.forward(data2, node_mars2)))
    np.testing.assert_allclose(out2, ref2, rtol=RTOL, atol=ATOL)

    print("KERNEL_OK")
</pallas_src>

<mosaic_0001>
module attributes {stable_mosaic.version = 11 : i64} {
  func.func @_kernel_aliased(%arg0: i32, %arg1: i32, %arg2: memref<8x512xf32, #tpu.memory_space<vmem>>, %arg3: memref<160x8xf32, #tpu.memory_space<vmem>>, %arg4: memref<160x3xf32, #tpu.memory_space<vmem>>, %arg5: memref<328x1024xf32, #tpu.memory_space<any>>, %arg6: memref<160x512xf32, #tpu.memory_space<vmem>>) attributes {dimension_semantics = [#tpu.dimension_semantics<parallel>, #tpu.dimension_semantics<parallel>], iteration_bounds = array<i64: 2, 2>, scalar_prefetch = 0 : i64, scratch_operands = 0 : i64, tpu.core_type = #tpu.core_type<tc>, window_params = [{transform_indices = @transform_0, window_bounds = array<i64: 8, 512>}, {transform_indices = @transform_1, window_bounds = array<i64: 160, 8>}, {transform_indices = @transform_2, window_bounds = array<i64: 160, 3>}, {}, {transform_indices = @transform_4, window_bounds = array<i64: 160, 512>}]} {
    %c0 = arith.constant 0 : index
    %c0_0 = arith.constant 0 : index
    %0 = vector.load %arg3[%c0, %c0_0] : memref<160x8xf32, #tpu.memory_space<vmem>>, vector<160x8xf32>
    %1 = arith.truncf %0 : vector<160x8xf32> to vector<160x8xbf16>
    %c0_1 = arith.constant 0 : index
    %c0_2 = arith.constant 0 : index
    %2 = vector.load %arg2[%c0_1, %c0_2] : memref<8x512xf32, #tpu.memory_space<vmem>>, vector<8x512xf32>
    %3 = arith.truncf %2 : vector<8x512xf32> to vector<8x512xbf16>
    %4 = arith.extf %3 : vector<8x512xbf16> to vector<8x512xf32>
    %5 = arith.subf %2, %4 : vector<8x512xf32>
    %6 = arith.truncf %5 : vector<8x512xf32> to vector<8x512xbf16>
    %7 = arith.extf %6 : vector<8x512xbf16> to vector<8x512xf32>
    %8 = arith.subf %5, %7 : vector<8x512xf32>
    %9 = arith.truncf %8 : vector<8x512xf32> to vector<8x512xbf16>
    %cst = arith.constant dense<0.000000e+00> : vector<160x512xf32>
    %10 = tpu.matmul %1, %3, %cst {dimension_numbers = #tpu.dot_dimension_numbers<[1], [0], [0], [1], [0, 0, 1, 1], [], []>} : vector<160x8xbf16>, vector<8x512xbf16>, vector<160x512xf32> -> vector<160x512xf32>
    %cst_3 = arith.constant dense<0.000000e+00> : vector<160x512xf32>
    %11 = tpu.matmul %1, %6, %cst_3 {dimension_numbers = #tpu.dot_dimension_numbers<[1], [0], [0], [1], [0, 0, 1, 1], [], []>} : vector<160x8xbf16>, vector<8x512xbf16>, vector<160x512xf32> -> vector<160x512xf32>
    %cst_4 = arith.constant dense<0.000000e+00> : vector<160x512xf32>
    %12 = tpu.matmul %1, %9, %cst_4 {dimension_numbers = #tpu.dot_dimension_numbers<[1], [0], [0], [1], [0, 0, 1, 1], [], []>} : vector<160x8xbf16>, vector<8x512xbf16>, vector<160x512xf32> -> vector<160x512xf32>
    %13 = arith.addf %11, %12 : vector<160x512xf32>
    %14 = arith.addf %10, %13 : vector<160x512xf32>
    %c0_5 = arith.constant 0 : index
    %c0_6 = arith.constant 0 : index
    %15 = vector.load %arg4[%c0_5, %c0_6] : memref<160x3xf32, #tpu.memory_space<vmem>>, vector<160x3xf32>
    %16 = vector.extract_strided_slice %15 {offsets = [0, 0], sizes = [160, 1], strides = [1, 1]} : vector<160x3xf32> to vector<160x1xf32>
    %17 = vector.extract_strided_slice %15 {offsets = [0, 1], sizes = [160, 1], strides = [1, 1]} : vector<160x3xf32> to vector<160x1xf32>
    %18 = vector.extract_strided_slice %15 {offsets = [0, 2], sizes = [160, 1], strides = [1, 1]} : vector<160x3xf32> to vector<160x1xf32>
    %cst_7 = arith.constant -5.000000e+00 : f32
    %19 = vector.broadcast %cst_7 : f32 to vector<160x1xf32>
    %20 = arith.maximumf %18, %19 : vector<160x1xf32>
    %cst_8 = arith.constant 0.000000e+00 : f32
    %21 = vector.broadcast %cst_8 : f32 to vector<160x1xf32>
    %22 = arith.subf %21, %20 : vector<160x1xf32>
    %23 = math.exp %22 : vector<160x1xf32>
    %24 = vector.broadcast %17 : vector<160x1xf32> to vector<160x512xf32>
    %25 = arith.subf %14, %24 : vector<160x512xf32>
    %26 = vector.broadcast %23 : vector<160x1xf32> to vector<160x512xf32>
    %27 = arith.mulf %25, %26 : vector<160x512xf32>
    %28 = arith.mulf %16, %23 : vector<160x1xf32>
    %29 = vector.broadcast %28 : vector<160x1xf32> to vector<160x512xf32>
    %30 = arith.subf %27, %29 : vector<160x512xf32>
    %31 = vector.broadcast %28 : vector<160x1xf32> to vector<160x512xf32>
    %32 = arith.addf %27, %31 : vector<160x512xf32>
    %33 = math.absf %30 : vector<160x512xf32>
    %cst_9 = arith.constant 0.000000e+00 : f32
    %34 = vector.broadcast %cst_9 : f32 to vector<160x512xf32>
    %35 = arith.subf %34, %33 : vector<160x512xf32>
    %36 = math.exp %35 : vector<160x512xf32>
    %37 = math.log1p %36 : vector<160x512xf32>
    %38 = math.absf %32 : vector<160x512xf32>
    %cst_10 = arith.constant 0.000000e+00 : f32
    %39 = vector.broadcast %cst_10 : f32 to vector<160x512xf32>
    %40 = arith.subf %39, %38 : vector<160x512xf32>
    %41 = math.exp %40 : vector<160x512xf32>
    %42 = math.log1p %41 : vector<160x512xf32>
    %cst_11 = arith.constant 0.000000e+00 : f32
    %43 = vector.broadcast %cst_11 : f32 to vector<160x512xf32>
    %44 = arith.minimumf %30, %43 : vector<160x512xf32>
    %45 = arith.subf %44, %37 : vector<160x512xf32>
    %cst_12 = arith.constant 0.000000e+00 : f32
    %46 = vector.broadcast %cst_12 : f32 to vector<160x512xf32>
    %47 = arith.minimumf %32, %46 : vector<160x512xf32>
    %48 = arith.subf %47, %42 : vector<160x512xf32>
    %49 = arith.subf %45, %48 : vector<160x512xf32>
    %50 = math.exp %49 : vector<160x512xf32>
    %cst_13 = arith.constant 1.000000e+00 : f32
    %51 = vector.broadcast %cst_13 : f32 to vector<160x512xf32>
    %52 = arith.subf %51, %50 : vector<160x512xf32>
    %cst_14 = arith.constant 9.99999993E-9 : f32
    %53 = vector.broadcast %cst_14 : f32 to vector<160x512xf32>
    %54 = arith.addf %52, %53 : vector<160x512xf32>
    %55 = math.log %54 : vector<160x512xf32>
    %56 = arith.addf %48, %55 : vector<160x512xf32>
    %cst_15 = arith.constant 0.00999999977 : f32
    %57 = vector.broadcast %cst_15 : f32 to vector<160x512xf32>
    %58 = arith.cmpf olt, %14, %57 : vector<160x512xf32>
    %59 = arith.select %58, %45, %56 : vector<160x512xi1>, vector<160x512xf32>
    %cst_16 = arith.constant 9.900000e-01 : f32
    %60 = vector.broadcast %cst_16 : f32 to vector<160x512xf32>
    %61 = arith.cmpf ogt, %14, %60 : vector<160x512xf32>
    %62 = math.exp %48 : vector<160x512xf32>
    %cst_17 = arith.constant 1.000000e+00 : f32
    %63 = vector.broadcast %cst_17 : f32 to vector<160x512xf32>
    %64 = arith.subf %63, %62 : vector<160x512xf32>
    %cst_18 = arith.constant 9.99999993E-9 : f32
    %65 = vector.broadcast %cst_18 : f32 to vector<160x512xf32>
    %66 = arith.addf %64, %65 : vector<160x512xf32>
    %67 = math.log %66 : vector<160x512xf32>
    %68 = arith.select %61, %67, %59 : vector<160x512xi1>, vector<160x512xf32>
    %c0_19 = arith.constant 0 : index
    %c0_20 = arith.constant 0 : index
    %69 = vector.load %arg6[%c0_19, %c0_20] : memref<160x512xf32, #tpu.memory_space<vmem>>, vector<160x512xf32>
    tpu.vector_store %arg6[%c0_19, %c0_20], %68 {strides = array<i32>} : memref<160x512xf32, #tpu.memory_space<vmem>>, vector<160x512xf32>,
    return
  }
  func.func @transform_0(%arg0: i32, %arg1: i32) -> (i32, i32) {
    %c0_i32 = arith.constant 0 : i32
    %c0_i32_0 = arith.constant 0 : i32
    return %c0_i32, %arg1 : i32, i32
  }
  func.func @transform_1(%arg0: i32, %arg1: i32) -> (i32, i32) {
    %c0_i32 = arith.constant 0 : i32
    %c0_i32_0 = arith.constant 0 : i32
    return %arg0, %c0_i32 : i32, i32
  }
  func.func @transform_2(%arg0: i32, %arg1: i32) -> (i32, i32) {
    %c0_i32 = arith.constant 0 : i32
    %c0_i32_0 = arith.constant 0 : i32
    return %arg0, %c0_i32 : i32, i32
  }
  func.func @transform_4(%arg0: i32, %arg1: i32) -> (i32, i32) {
    %c0_i32 = arith.constant 0 : i32
    %0 = arith.addi %arg0, %c0_i32 : i32
    %c0_i32_0 = arith.constant 0 : i32
    return %0, %arg1 : i32, i32
  }
}

</mosaic_0001>

<llo_original>
// kernel: _forward.1
$region0: #{_forward.1}
  #allocation0 [shape = 'u32[]', space=smem, size = 0x4, offset = 0x4, fixed_abs, tag = 'smem constant byte address 0x4 - core index']
  #allocation1 [shape = 'u32[144,128]{1,0:T(1,128)}', space=vmem, size = 0x12000, scoped, tag = 'internal scratch']
  %s0 = inlined_call_operand.vmem [shape: f32[8,1024], index: 0, kind: input, shape index: {}]
  %s1 = inlined_call_operand.vmem [shape: f32[320,8], index: 1, kind: input, shape index: {}]
  %s2 = inlined_call_operand.vmem [shape: f32[320,3], index: 2, kind: input, shape index: {}]
  %s3 = inlined_call_operand.hbm [shape: f32[328,1024], index: 3, kind: input, shape index: {}, may-alias: {3,4}]
  %s4 = inlined_call_operand.hbm [shape: f32[328,1024], index: 4, kind: output, shape index: {}, may-alias: {3,4}]
  %s5 = sld [smem:[#allocation0]]
  $region45: #{_forward.1} parent=0
    _
  %s7 = ssub.s32 1, %s5
  %s8 = scalar_select 0, %s7, %s5
  $region1: #{_forward.1} parent=0
    #allocation2 [shape = 'u8[655360]{0}', space=vmem, size = 0xa0000, scoped, tag = 'output window, operand 0']
    #allocation3 [shape = 's32[2]{0}', space=sflag, size = 0x8, scoped, tag = 'scoped memory for _forward.1']
    %9 = vsyncpa [#allocation3], 0
    %s10 = scalar_lea.sflag [#allocation3], 1
    %11 = vsyncpa %s10, 0
    loop: start=0, step=1, limit=6
    $region2: #{_forward.1} parent=1 // loop_pre_header
      _
    $region3: #{_forward.1} parent=1 // loop_header
      %s13 = sphi 0, %s17
      %p14 = scmp.ge.s32.totalorder %s13, 6
      %s20 = sphi 0, %s32
      %s21 = sphi 0, %s28
      %s22 = sphi 0, %s20
      %s23 = sphi 0, %s21
      %s24 = sphi 0, %s22
      %s25 = sphi 0, %s23
      %s35 = sphi 0, %s37
      %s38 = sphi 0, %s35
      %s39 = sphi 0, %s38
      %s55 = sphi 0, %s39
      %s61 = sphi 0, %s63
      %s64 = sphi 0, %s61
      %s65 = sphi 0, %s64
      %s81 = sphi 0, %s65
      %s87 = sphi 0, %s89
      %s90 = sphi 0, %s87
      %s91 = sphi 0, %s90
      %s107 = sphi 0, %s91
      %s115 = sphi 0, %s117
      %s118 = sphi 0, %s115
      %s119 = sphi 0, %s118
      %s135 = sphi 0, %s119
    $region4: #{_forward.1} parent=1 // loop_header_branch
      %16 = sbr.rel (%p14) target = $region8
    $region5: #{_forward.1} parent=1 // loop_body
      %s18 = ssub.s32 %s13, 1
      %s19 = ssub.s32 %s13, 2
      %s26 = sadd.s32 1, %s21
      %p27 = scmp.ge.s32.totalorder %s26, 2
      %s28 = scalar_select %p27, 0, %s26
      %s29 = sadd.s32 1, %s20
      %s30 = scalar_select %p27, %s29, %s20
      %p31 = scmp.ge.s32.totalorder %s30, 2
      %s32 = scalar_select %p31, 0, %s30
      %s33 = ssub.s32 %s21, %s28
      %p34 = scmp.eq.s32.totalorder %s33, 0
      %s36 = sadd.s32 %s35, 1
      %s37 = scalar_select %p34, %s35, %s36
      %p40 = pneg %p34
      %p41 = scmp.eq.s32.totalorder %s13, 3
      %p42 = por %p40, %p41
      %p43 = scmp.ne.s32.totalorder %s35, %s38
      %p44 = scmp.eq.s32.totalorder %s13, 0
      %p45 = por %p43, %p44
      %p46 = scmp.ne.s32.totalorder %s35, %s38
      %p47 = scmp.eq.s32.totalorder %s18, 3
      %p48 = por %p46, %p47
      %p49 = scmp.ne.s32.totalorder %s38, %s39
      %p50 = scmp.eq.s32.totalorder %s18, 0
      %p51 = por %p49, %p50
      %p52 = scmp.ne.s32.totalorder %s38, %s39
      %p53 = scmp.eq.s32.totalorder %s19, 3
      %p54 = por %p52, %p53
      %p56 = scmp.ne.s32.totalorder %s39, %s55
      %p57 = scmp.eq.s32.totalorder %s19, 0
      %p58 = por %p56, %p57
      %s59 = ssub.s32 %s20, %s32
      %p60 = scmp.eq.s32.totalorder %s59, 0
      %s62 = sadd.s32 %s61, 1
      %s63 = scalar_select %p60, %s61, %s62
      %p66 = pneg %p60
      %p67 = scmp.eq.s32.totalorder %s13, 3
      %p68 = por %p66, %p67
      %p69 = scmp.ne.s32.totalorder %s61, %s64
      %p70 = scmp.eq.s32.totalorder %s13, 0
      %p71 = por %p69, %p70
      %p72 = scmp.ne.s32.totalorder %s61, %s64
      %p73 = scmp.eq.s32.totalorder %s18, 3
      %p74 = por %p72, %p73
      %p75 = scmp.ne.s32.totalorder %s64, %s65
      %p76 = scmp.eq.s32.totalorder %s18, 0
      %p77 = por %p75, %p76
      %p78 = scmp.ne.s32.totalorder %s64, %s65
      %p79 = scmp.eq.s32.totalorder %s19, 3
      %p80 = por %p78, %p79
      %p82 = scmp.ne.s32.totalorder %s65, %s81
      %p83 = scmp.eq.s32.totalorder %s19, 0
      %p84 = por %p82, %p83
      %s85 = ssub.s32 %s20, %s32
      %p86 = scmp.eq.s32.totalorder %s85, 0
      %s88 = sadd.s32 %s87, 1
      %s89 = scalar_select %p86, %s87, %s88
      %p92 = pneg %p86
      %p93 = scmp.eq.s32.totalorder %s13, 3
      %p94 = por %p92, %p93
      %p95 = scmp.ne.s32.totalorder %s87, %s90
      %p96 = scmp.eq.s32.totalorder %s13, 0
      %p97 = por %p95, %p96
      %p98 = scmp.ne.s32.totalorder %s87, %s90
      %p99 = scmp.eq.s32.totalorder %s18, 3
      %p100 = por %p98, %p99
      %p101 = scmp.ne.s32.totalorder %s90, %s91
      %p102 = scmp.eq.s32.totalorder %s18, 0
      %p103 = por %p101, %p102
      %p104 = scmp.ne.s32.totalorder %s90, %s91
      %p105 = scmp.eq.s32.totalorder %s19, 3
      %p106 = por %p104, %p105
      %p108 = scmp.ne.s32.totalorder %s91, %s107
      %p109 = scmp.eq.s32.totalorder %s19, 0
      %p110 = por %p108, %p109
      %s111 = ssub.s32 %s20, %s32
      %s112 = ssub.s32 %s21, %s28
      %s113 = sor.u32 %s111, %s112
      %p114 = scmp.eq.s32.totalorder %s113, 0
      %s116 = sadd.s32 %s115, 1
      %s117 = scalar_select %p114, %s115, %s116
      %p120 = pneg %p114
      %p121 = scmp.eq.s32.totalorder %s13, 3
      %p122 = por %p120, %p121
      %p123 = scmp.ne.s32.totalorder %s115, %s118
      %p124 = scmp.eq.s32.totalorder %s13, 0
      %p125 = por %p123, %p124
      %p126 = scmp.ne.s32.totalorder %s115, %s118
      %p127 = scmp.eq.s32.totalorder %s18, 3
      %p128 = por %p126, %p127
      %p129 = scmp.ne.s32.totalorder %s118, %s119
      %p130 = scmp.eq.s32.totalorder %s18, 0
      %p131 = por %p129, %p130
      %p132 = scmp.ne.s32.totalorder %s118, %s119
      %p133 = scmp.eq.s32.totalorder %s19, 3
      %p134 = por %p132, %p133
      %p136 = scmp.ne.s32.totalorder %s119, %s135
      %p137 = scmp.eq.s32.totalorder %s19, 0
      %p138 = por %p136, %p137
      %p139 = scmp.le.s32.totalorder 1, %s13
      %p140 = scmp.lt.s32.totalorder %s13, 5
      %p141 = pnand %p139, %p140
      %p142 = pneg %p141
      // Predicated region
      $region9: #{_forward.1} parent=5 // pred_check
        _
      $region10: #{_forward.1} parent=5 // pred_check_branch
        %144 = sbr.rel (%p141) target = $region12
      $region11: #{_forward.1} parent=5 // pred_region
        %s145 = ssub.s32 %s13, 1
      $region12: #{_forward.1} parent=5 // pred_fallthru
        _
      %p146 = scmp.lt.s32.totalorder %s13, 4
      // Predicated region
      $region13: #{_forward.1} parent=5 // pred_check
        %p147 = pneg %p146
      $region14: #{_forward.1} parent=5 // pred_check_branch
        %149 = sbr.rel (%p147) target = $region16
      $region15: #{_forward.1} parent=5 // pred_region
        // Predicated region
        $region17: #{_forward.1} parent=15 // pred_check
          %p150 = pneg %p45
        $region18: #{_forward.1} parent=15 // pred_check_branch
          %152 = sbr.rel (%p150) target = $region20
        $region19: #{_forward.1} parent=15 // pred_region
          %s153 = smul.u32 4, %s21
          %p154 = scmp.lt.s32.totalorder %s153, 7
          %s155 = scalar_select %p154, %s153, 7
          %s156 = smul.addr %s155, 8
          %s157 = scalar_lea.vmem %s0, %s156
          %s158 = smul.u32 4, %s21
        $region20: #{_forward.1} parent=15 // pred_fallthru
          _
        // Predicated region
        $region21: #{_forward.1} parent=15 // pred_check
          %p159 = pneg %p71
        $region22: #{_forward.1} parent=15 // pred_check_branch
          %161 = sbr.rel (%p159) target = $region24
        $region23: #{_forward.1} parent=15 // pred_region
          %s162 = smul.u32 20, %s20
          %p163 = scmp.lt.s32.totalorder %s162, 39
          %s164 = scalar_select %p163, %s162, 39
          %s165 = smul.addr %s164, 8
          %s166 = scalar_lea.vmem %s1, %s165
          %s167 = smul.u32 20, %s20
        $region24: #{_forward.1} parent=15 // pred_fallthru
          _
        // Predicated region
        $region25: #{_forward.1} parent=15 // pred_check
          %p168 = pneg %p97
        $region26: #{_forward.1} parent=15 // pred_check_branch
          %170 = sbr.rel (%p168) target = $region28
        $region27: #{_forward.1} parent=15 // pred_region
          %s171 = smul.u32 20, %s20
          %p172 = scmp.lt.s32.totalorder %s171, 39
          %s173 = scalar_select %p172, %s171, 39
          %s174 = smul.addr %s173, 8
          %s175 = scalar_lea.vmem %s2, %s174
          %s176 = smul.u32 20, %s20
        $region28: #{_forward.1} parent=15 // pred_fallthru
          _
      $region16: #{_forward.1} parent=5 // pred_fallthru
        _
      %p177 = scmp.le.s32.totalorder 1, %s13
      %p178 = scmp.lt.s32.totalorder %s13, 5
      %p179 = pnand %p177, %p178
      %p180 = pneg %p179
      // Predicated region
      $region29: #{_forward.1} parent=5 // pred_check
        _
      $region30: #{_forward.1} parent=5 // pred_check_branch
        %182 = sbr.rel (%p179) target = $region32
      $region31: #{_forward.1} parent=5 // pred_region
        %s183 = ssub.s32 %s13, 1
        %s184 = smul.u32 4, %s23
        %p185 = scmp.lt.s32.totalorder %s184, 7
        %s186 = scalar_select %p185, %s184, 7
        %s187 = smul.addr %s186, 8
        %s188 = scalar_lea.vmem %s0, %s187
        %p189 = pneg %p51
        %p190 = pneg %p48
        %s191 = smul.u32 20, %s22
        %p192 = scmp.lt.s32.totalorder %s191, 39
        %s193 = scalar_select %p192, %s191, 39
        %s194 = smul.addr %s193, 8
        %s195 = scalar_lea.vmem %s1, %s194
        %p196 = pneg %p77
        %p197 = pneg %p74
        %s198 = smul.u32 20, %s22
        %p199 = scmp.lt.s32.totalorder %s198, 39
        %s200 = scalar_select %p199, %s198, 39
        %s201 = smul.addr %s200, 8
        %s202 = scalar_lea.vmem %s2, %s201
        %p203 = pneg %p103
        %p204 = pneg %p100
        %p205 = pneg %p131
        %p206 = pneg %p128
        %s207 = sand.u32 %s118, 1
        %s208 = scalar_lea.sflag [#allocation3], %s207
        %s209 = sand.u32 %s118, 1
        %s210 = smul.addr %s209, 640
        %s211 = scalar_lea.vmem [#allocation2], %s210
        %s212 = smul.u32 4, %s23
        %p213 = scmp.lt.s32.totalorder %s212, 7
        %s214 = scalar_select %p213, %s212, 7
        %s215 = smul.addr %s214, 8
        %s216 = scalar_lea.vmem %s0, %s215
        %s217 = smul.u32 4, %s23
        %s218 = smul.u32 20, %s22
        %p219 = scmp.lt.s32.totalorder %s218, 39
        %s220 = scalar_select %p219, %s218, 39
        %s221 = smul.addr %s220, 8
        %s222 = scalar_lea.vmem %s1, %s221
        %s223 = smul.u32 20, %s22
        %s224 = smul.u32 20, %s22
        %p225 = scmp.lt.s32.totalorder %s224, 39
        %s226 = scalar_select %p225, %s224, 39
        %s227 = smul.addr %s226, 8
        %s228 = scalar_lea.vmem %s2, %s227
        %s229 = smul.u32 20, %s22
        %s230 = smul.u32 20, %s22
        %s231 = smul.u32 4, %s23
        %s232 = ssub.s32 41, %s230
        %p233 = scmp.lt.s32.totalorder %s232, 20
        %s234 = scalar_select %p233, %s232, 20
        %s235 = smul.u32 128, %s234
        %s236 = smul.u32 %s235, 4
        %v238 = vld [vmem:[%s222] sm:$0xff]
        %v239 = vld [vmem:[%s222 + $0x8] sm:$0xff]
        %v240 = vld [vmem:[%s222 + $0x10] sm:$0xff]
        %v241 = vld [vmem:[%s222 + $0x18] sm:$0xff]
        %v242 = vld [vmem:[%s222 + $0x20] sm:$0xff]
        %v243 = vld [vmem:[%s222 + $0x28] sm:$0xff]
        %v244 = vld [vmem:[%s222 + $0x30] sm:$0xff]
        %v245 = vld [vmem:[%s222 + $0x38] sm:$0xff]
        %v246 = vld [vmem:[%s222 + $0x40] sm:$0xff]
        %v247 = vld [vmem:[%s222 + $0x48] sm:$0xff]
        %v248 = vld [vmem:[%s222 + $0x50] sm:$0xff]
        %v249 = vld [vmem:[%s222 + $0x58] sm:$0xff]
        %v250 = vld [vmem:[%s222 + $0x60] sm:$0xff]
        %v251 = vld [vmem:[%s222 + $0x68] sm:$0xff]
        %v252 = vld [vmem:[%s222 + $0x70] sm:$0xff]
        %v253 = vld [vmem:[%s222 + $0x78] sm:$0xff]
        %v254 = vld [vmem:[%s222 + $0x80] sm:$0xff]
        %v255 = vld [vmem:[%s222 + $0x88] sm:$0xff]
        %v256 = vld [vmem:[%s222 + $0x90] sm:$0xff]
        %v257 = vld [vmem:[%s222 + $0x98] sm:$0xff]
        %v258 = vpack.c.bf16 %v239, %v238
        %v259 = vpack.c.bf16 %v241, %v240
        %v260 = vpack.c.bf16 %v243, %v242
        %v261 = vpack.c.bf16 %v245, %v244
        %v262 = vpack.c.bf16 %v247, %v246
        %v263 = vpack.c.bf16 %v249, %v248
        %v264 = vpack.c.bf16 %v251, %v250
        %v265 = vpack.c.bf16 %v253, %v252
        %v266 = vpack.c.bf16 %v255, %v254
        %v267 = vpack.c.bf16 %v257, %v256
        %v268 = vld [vmem:[%s216] sm:$0xff]
        %v269 = vld [vmem:[%s216 + $0x8] sm:$0xff]
        %v270 = vld [vmem:[%s216 + $0x10] sm:$0xff]
        %v271 = vld [vmem:[%s216 + $0x18] sm:$0xff]
        %v272 = vpack.c.bf16 %v268, %v268
        %v273 = vpack.c.bf16 %v269, %v269
        %v274 = vpack.c.bf16 %v270, %v270
        %v275 = vpack.c.bf16 %v271, %v271
        %v276 = vunpack.c.l.bf16 %v272
        %v277 = vunpack.c.l.bf16 %v273
        %v278 = vunpack.c.l.bf16 %v274
        %v279 = vunpack.c.l.bf16 %v275
        %v280 = vsub.f32 %v268, %v276
        %v281 = vsub.f32 %v269, %v277
        %v282 = vsub.f32 %v270, %v278
        %v283 = vsub.f32 %v271, %v279
        %v284 = vpack.c.bf16 %v280, %v280
        %v285 = vpack.c.bf16 %v281, %v281
        %v286 = vpack.c.bf16 %v282, %v282
        %v287 = vpack.c.bf16 %v283, %v283
        %v288 = vunpack.c.l.bf16 %v284
        %v289 = vunpack.c.l.bf16 %v285
        %v290 = vunpack.c.l.bf16 %v286
        %v291 = vunpack.c.l.bf16 %v287
        %v292 = vsub.f32 %v280, %v288
        %v293 = vsub.f32 %v281, %v289
        %v294 = vsub.f32 %v282, %v290
        %v295 = vsub.f32 %v283, %v291
        %v296 = vpack.c.bf16 %v292, %v292
        %v297 = vpack.c.bf16 %v293, %v293
        %v298 = vpack.c.bf16 %v294, %v294
        %v299 = vpack.c.bf16 %v295, %v295
        %vm300 = vcmask 64512
        %v302 = vsel %vm300, %v258, 0
        %v305 = vsel %vm300, %v259, 0
        %v308 = vsel %vm300, %v260, 0
        %v311 = vsel %vm300, %v261, 0
        %v314 = vsel %vm300, %v262, 0
        %v317 = vsel %vm300, %v263, 0
        %v320 = vsel %vm300, %v264, 0
        %v323 = vsel %vm300, %v265, 0
        %v326 = vsel %vm300, %v266, 0
        %v329 = vsel %vm300, %v267, 0
        %vm331 = vcmask 1043456
        %v333 = vsel %vm331, %v296, 0
        %v336 = vsel %vm331, %v297, 0
        %v339 = vsel %vm331, %v298, 0
        %v342 = vsel %vm331, %v299, 0
        %344 = vmatprep.subr.bf16.mxu0 %v336
        %345 = vmatpush1.bf16.msra.mxu0 %v333
        %346 = vmatprep.subr.bf16.mxu0 0
        %347 = vmatpush1.bf16.msra.mxu0 0
        %348 = vmatprep.subr.bf16.mxu0 0
        %349 = vmatpush1.bf16.msra.mxu0 0
        %350 = vmatprep.subr.bf16.mxu0 0
        %351 = vmatpush1.bf16.msra.mxu0 0
        %352 = vmatprep.subr.bf16.mxu0 0
        %353 = vmatpush1.bf16.msra.mxu0 0
        %354 = vmatprep.subr.bf16.mxu0 0
        %355 = vmatpush1.bf16.msra.mxu0 0
        %356 = vmatprep.subr.bf16.mxu0 0
        %357 = vmatpush1.bf16.msra.mxu0 0
        %358 = vmatprep.subr.bf16.mxu0 0
        %359 = vmatpush1.bf16.msra.mxu0 0
        %360 = vmatprep.subr.bf16.mxu0 0
        %361 = vmatpush1.bf16.msra.mxu0 0
        %362 = vmatprep.subr.bf16.mxu0 0
        %363 = vmatpush1.bf16.msra.mxu0 0
        %364 = vmatprep.subr.bf16.mxu0 0
        %365 = vmatpush1.bf16.msra.mxu0 0
        %366 = vmatprep.subr.bf16.mxu0 0
        %367 = vmatpush1.bf16.msra.mxu0 0
        %368 = vmatprep.subr.bf16.mxu0 0
        %369 = vmatpush1.bf16.msra.mxu0 0
        %370 = vmatprep.subr.bf16.mxu0 0
        %371 = vmatpush1.bf16.msra.mxu0 0
        %372 = vmatprep.subr.bf16.mxu0 0
        %373 = vmatpush1.bf16.msra.mxu0 0
        %374 = vmatprep.subr.bf16.mxu0 0
        %375 = vmatpush1.bf16.msra.mxu0 0
        %376 = vmatprep.mubr.bf16.mxu0 0
        %377 = vmatmul.mubr.bf16.gmra.mrb[0].mxu0 %v302
        %v378 = vpop.f32.mrb[0].mxu0
        %v379 = vadd.f32 0.0, %v378
        %v380 = vpop.f32.mrb[0].mxu0
        %v381 = vadd.f32 0.0, %v380
        %v382 = vpop.f32.mrb[0].mxu0
        %v383 = vadd.f32 0.0, %v382
        %v384 = vpop.f32.mrb[0].mxu0
        %v385 = vadd.f32 0.0, %v384
        %386 = vmatprep.mubr.bf16.mxu0 0
        %387 = vmatmul.mubr.bf16.gmra.mrb[0].mxu0 %v305
        %v388 = vpop.f32.mrb[0].mxu0
        %v389 = vadd.f32 0.0, %v388
        %v390 = vpop.f32.mrb[0].mxu0
        %v391 = vadd.f32 0.0, %v390
        %v392 = vpop.f32.mrb[0].mxu0
        %v393 = vadd.f32 0.0, %v392
        %v394 = vpop.f32.mrb[0].mxu0
        %v395 = vadd.f32 0.0, %v394
        %396 = vmatprep.mubr.bf16.mxu0 0
        %397 = vmatmul.mubr.bf16.gmra.mrb[0].mxu0 %v308
        %v398 = vpop.f32.mrb[0].mxu0
        %v399 = vadd.f32 0.0, %v398
        %v400 = vpop.f32.mrb[0].mxu0
        %v401 = vadd.f32 0.0, %v400
        %v402 = vpop.f32.mrb[0].mxu0
        %v403 = vadd.f32 0.0, %v402
        %v404 = vpop.f32.mrb[0].mxu0
        %v405 = vadd.f32 0.0, %v404
        %406 = vmatprep.mubr.bf16.mxu0 0
        %407 = vmatmul.mubr.bf16.gmra.mrb[0].mxu0 %v311
        %v408 = vpop.f32.mrb[0].mxu0
        %v409 = vadd.f32 0.0, %v408
        %v410 = vpop.f32.mrb[0].mxu0
        %v411 = vadd.f32 0.0, %v410
        %v412 = vpop.f32.mrb[0].mxu0
        %v413 = vadd.f32 0.0, %v412
        %v414 = vpop.f32.mrb[0].mxu0
        %v415 = vadd.f32 0.0, %v414
        %416 = vmatprep.mubr.bf16.mxu0 0
        %417 = vmatmul.mubr.bf16.gmra.mrb[0].mxu0 %v314
        %v418 = vpop.f32.mrb[0].mxu0
        %v419 = vadd.f32 0.0, %v418
        %v420 = vpop.f32.mrb[0].mxu0
        %v421 = vadd.f32 0.0, %v420
        %v422 = vpop.f32.mrb[0].mxu0
        %v423 = vadd.f32 0.0, %v422
        %v424 = vpop.f32.mrb[0].mxu0
        %v425 = vadd.f32 0.0, %v424
        %426 = vmatprep.mubr.bf16.mxu0 0
        %427 = vmatmul.mubr.bf16.gmra.mrb[0].mxu0 %v317
        %v428 = vpop.f32.mrb[0].mxu0
        %v429 = vadd.f32 0.0, %v428
        %v430 = vpop.f32.mrb[0].mxu0
        %v431 = vadd.f32 0.0, %v430
        %v432 = vpop.f32.mrb[0].mxu0
        %v433 = vadd.f32 0.0, %v432
        %v434 = vpop.f32.mrb[0].mxu0
        %v435 = vadd.f32 0.0, %v434
        %436 = vmatprep.mubr.bf16.mxu0 0
        %437 = vmatmul.mubr.bf16.gmra.mrb[0].mxu0 %v320
        %v438 = vpop.f32.mrb[0].mxu0
        %v439 = vadd.f32 0.0, %v438
        %v440 = vpop.f32.mrb[0].mxu0
        %v441 = vadd.f32 0.0, %v440
        %v442 = vpop.f32.mrb[0].mxu0
        %v443 = vadd.f32 0.0, %v442
        %v444 = vpop.f32.mrb[0].mxu0
        %v445 = vadd.f32 0.0, %v444
        %446 = vmatprep.mubr.bf16.mxu0 0
        %447 = vmatmul.mubr.bf16.gmra.mrb[0].mxu0 %v323
        %v448 = vpop.f32.mrb[0].mxu0
        %v449 = vadd.f32 0.0, %v448
        %v450 = vpop.f32.mrb[0].mxu0
        %v451 = vadd.f32 0.0, %v450
        %v452 = vpop.f32.mrb[0].mxu0
        %v453 = vadd.f32 0.0, %v452
        %v454 = vpop.f32.mrb[0].mxu0
        %v455 = vadd.f32 0.0, %v454
        %456 = vmatprep.mubr.bf16.mxu0 0
        %457 = vmatmul.mubr.bf16.gmra.mrb[0].mxu0 %v326
        %v458 = vpop.f32.mrb[0].mxu0
        %v459 = vadd.f32 0.0, %v458
        %v460 = vpop.f32.mrb[0].mxu0
        %v461 = vadd.f32 0.0, %v460
        %v462 = vpop.f32.mrb[0].mxu0
        %v463 = vadd.f32 0.0, %v462
        %v464 = vpop.f32.mrb[0].mxu0
        %v465 = vadd.f32 0.0, %v464
        %466 = vmatprep.mubr.bf16.mxu0 0
        %467 = vmatmul.mubr.bf16.gmra.mrb[0].mxu0 %v329
        %v468 = vpop.f32.mrb[0].mxu0
        %v469 = vadd.f32 0.0, %v468
        %v470 = vpop.f32.mrb[0].mxu0
        %v471 = vadd.f32 0.0, %v470
        %v472 = vpop.f32.mrb[0].mxu0
        %v473 = vadd.f32 0.0, %v472
        %v474 = vpop.f32.mrb[0].mxu0
        %v475 = vadd.f32 0.0, %v474
        %476 = vdwg.mxu0
        %477 = vmatprep.subr.bf16.mxu0 %v342
        %478 = vmatpush1.bf16.msra.mxu0 %v339
        %479 = vmatprep.subr.bf16.mxu0 0
        %480 = vmatpush1.bf16.msra.mxu0 0
        %481 = vmatprep.subr.bf16.mxu0 0
        %482 = vmatpush1.bf16.msra.mxu0 0
        %483 = vmatprep.subr.bf16.mxu0 0
        %484 = vmatpush1.bf16.msra.mxu0 0
        %485 = vmatprep.subr.bf16.mxu0 0
        %486 = vmatpush1.bf16.msra.mxu0 0
        %487 = vmatprep.subr.bf16.mxu0 0
        %488 = vmatpush1.bf16.msra.mxu0 0
        %489 = vmatprep.subr.bf16.mxu0 0
        %490 = vmatpush1.bf16.msra.mxu0 0
        %491 = vmatprep.subr.bf16.mxu0 0
        %492 = vmatpush1.bf16.msra.mxu0 0
        %493 = vmatprep.subr.bf16.mxu0 0
        %494 = vmatpush1.bf16.msra.mxu0 0
        %495 = vmatprep.subr.bf16.mxu0 0
        %496 = vmatpush1.bf16.msra.mxu0 0
        %497 = vmatprep.subr.bf16.mxu0 0
        %498 = vmatpush1.bf16.msra.mxu0 0
        %499 = vmatprep.subr.bf16.mxu0 0
        %500 = vmatpush1.bf16.msra.mxu0 0
        %501 = vmatprep.subr.bf16.mxu0 0
        %502 = vmatpush1.bf16.msra.mxu0 0
        %503 = vmatprep.subr.bf16.mxu0 0
        %504 = vmatpush1.bf16.msra.mxu0 0
        %505 = vmatprep.subr.bf16.mxu0 0
        %506 = vmatpush1.bf16.msra.mxu0 0
        %507 = vmatprep.subr.bf16.mxu0 0
        %508 = vmatpush1.bf16.msra.mxu0 0
        %509 = vmatprep.mubr.bf16.mxu0 0
        %510 = vmatmul.mubr.bf16.gmra.mrb[0].mxu0 %v302
        %v511 = vpop.f32.mrb[0].mxu0
        %v512 = vadd.f32 0.0, %v511
        %v513 = vpop.f32.mrb[0].mxu0
        %v514 = vadd.f32 0.0, %v513
        %v515 = vpop.f32.mrb[0].mxu0
        %v516 = vadd.f32 0.0, %v515
        %v517 = vpop.f32.mrb[0].mxu0
        %v518 = vadd.f32 0.0, %v517
        %519 = vmatprep.mubr.bf16.mxu0 0
        %520 = vmatmul.mubr.bf16.gmra.mrb[0].mxu0 %v305
        %v521 = vpop.f32.mrb[0].mxu0
        %v522 = vadd.f32 0.0, %v521
        %v523 = vpop.f32.mrb[0].mxu0
        %v524 = vadd.f32 0.0, %v523
        %v525 = vpop.f32.mrb[0].mxu0
        %v526 = vadd.f32 0.0, %v525
        %v527 = vpop.f32.mrb[0].mxu0
        %v528 = vadd.f32 0.0, %v527
        %529 = vmatprep.mubr.bf16.mxu0 0
        %530 = vmatmul.mubr.bf16.gmra.mrb[0].mxu0 %v308
        %v531 = vpop.f32.mrb[0].mxu0
        %v532 = vadd.f32 0.0, %v531
        %v533 = vpop.f32.mrb[0].mxu0
        %v534 = vadd.f32 0.0, %v533
        %v535 = vpop.f32.mrb[0].mxu0
        %v536 = vadd.f32 0.0, %v535
        %v537 = vpop.f32.mrb[0].mxu0
        %v538 = vadd.f32 0.0, %v537
        %539 = vmatprep.mubr.bf16.mxu0 0
        %540 = vmatmul.mubr.bf16.gmra.mrb[0].mxu0 %v311
        %v541 = vpop.f32.mrb[0].mxu0
        %v542 = vadd.f32 0.0, %v541
        %v543 = vpop.f32.mrb[0].mxu0
        %v544 = vadd.f32 0.0, %v543
        %v545 = vpop.f32.mrb[0].mxu0
        %v546 = vadd.f32 0.0, %v545
        %v547 = vpop.f32.mrb[0].mxu0
        %v548 = vadd.f32 0.0, %v547
        %549 = vmatprep.mubr.bf16.mxu0 0
        %550 = vmatmul.mubr.bf16.gmra.mrb[0].mxu0 %v314
        %v551 = vpop.f32.mrb[0].mxu0
        %v552 = vadd.f32 0.0, %v551
        %v553 = vpop.f32.mrb[0].mxu0
        %v554 = vadd.f32 0.0, %v553
        %v555 = vpop.f32.mrb[0].mxu0
        %v556 = vadd.f32 0.0, %v555
        %v557 = vpop.f32.mrb[0].mxu0
        %v558 = vadd.f32 0.0, %v557
        %559 = vmatprep.mubr.bf16.mxu0 0
        %560 = vmatmul.mubr.bf16.gmra.mrb[0].mxu0 %v317
        %v561 = vpop.f32.mrb[0].mxu0
        %v562 = vadd.f32 0.0, %v561
        %v563 = vpop.f32.mrb[0].mxu0
        %v564 = vadd.f32 0.0, %v563
        %v565 = vpop.f32.mrb[0].mxu0
        %v566 = vadd.f32 0.0, %v565
        %v567 = vpop.f32.mrb[0].mxu0
        %v568 = vadd.f32 0.0, %v567
        %569 = vmatprep.mubr.bf16.mxu0 0
        %570 = vmatmul.mubr.bf16.gmra.mrb[0].mxu0 %v320
        %v571 = vpop.f32.mrb[0].mxu0
        %v572 = vadd.f32 0.0, %v571
        %v573 = vpop.f32.mrb[0].mxu0
        %v574 = vadd.f32 0.0, %v573
        %v575 = vpop.f32.mrb[0].mxu0
        %v576 = vadd.f32 0.0, %v575
        %v577 = vpop.f32.mrb[0].mxu0
        %v578 = vadd.f32 0.0, %v577
        %579 = vmatprep.mubr.bf16.mxu0 0
        %580 = vmatmul.mubr.bf16.gmra.mrb[0].mxu0 %v323
        %v581 = vpop.f32.mrb[0].mxu0
        %v582 = vadd.f32 0.0, %v581
        %v583 = vpop.f32.mrb[0].mxu0
        %v584 = vadd.f32 0.0, %v583
        %v585 = vpop.f32.mrb[0].mxu0
        %v586 = vadd.f32 0.0, %v585
        %v587 = vpop.f32.mrb[0].mxu0
        %v588 = vadd.f32 0.0, %v587
        %589 = vmatprep.mubr.bf16.mxu0 0
        %590 = vmatmul.mubr.bf16.gmra.mrb[0].mxu0 %v326
        %v591 = vpop.f32.mrb[0].mxu0
        %v592 = vadd.f32 0.0, %v591
        %v593 = vpop.f32.mrb[0].mxu0
        %v594 = vadd.f32 0.0, %v593
        %v595 = vpop.f32.mrb[0].mxu0
        %v596 = vadd.f32 0.0, %v595
        %v597 = vpop.f32.mrb[0].mxu0
        %v598 = vadd.f32 0.0, %v597
        %599 = vmatprep.mubr.bf16.mxu0 0
        %600 = vmatmul.mubr.bf16.gmra.mrb[0].mxu0 %v329
        %v601 = vpop.f32.mrb[0].mxu0
        %v602 = vadd.f32 0.0, %v601
        %v603 = vpop.f32.mrb[0].mxu0
        %v604 = vadd.f32 0.0, %v603
        %v605 = vpop.f32.mrb[0].mxu0
        %v606 = vadd.f32 0.0, %v605
        %v607 = vpop.f32.mrb[0].mxu0
        %v608 = vadd.f32 0.0, %v607
        %609 = vdwg.mxu0
        %v611 = vsel %vm331, %v284, 0
        %v614 = vsel %vm331, %v285, 0
        %v617 = vsel %vm331, %v286, 0
        %v620 = vsel %vm331, %v287, 0
        %622 = vmatprep.subr.bf16.mxu0 %v614
        %623 = vmatpush1.bf16.msra.mxu0 %v611
        %624 = vmatprep.subr.bf16.mxu0 0
        %625 = vmatpush1.bf16.msra.mxu0 0
        %626 = vmatprep.subr.bf16.mxu0 0
        %627 = vmatpush1.bf16.msra.mxu0 0
        %628 = vmatprep.subr.bf16.mxu0 0
        %629 = vmatpush1.bf16.msra.mxu0 0
        %630 = vmatprep.subr.bf16.mxu0 0
        %631 = vmatpush1.bf16.msra.mxu0 0
        %632 = vmatprep.subr.bf16.mxu0 0
        %633 = vmatpush1.bf16.msra.mxu0 0
        %634 = vmatprep.subr.bf16.mxu0 0
        %635 = vmatpush1.bf16.msra.mxu0 0
        %636 = vmatprep.subr.bf16.mxu0 0
        %637 = vmatpush1.bf16.msra.mxu0 0
        %638 = vmatprep.subr.bf16.mxu0 0
        %639 = vmatpush1.bf16.msra.mxu0 0
        %640 = vmatprep.subr.bf16.mxu0 0
        %641 = vmatpush1.bf16.msra.mxu0 0
        %642 = vmatprep.subr.bf16.mxu0 0
        %643 = vmatpush1.bf16.msra.mxu0 0
        %644 = vmatprep.subr.bf16.mxu0 0
        %645 = vmatpush1.bf16.msra.mxu0 0
        %646 = vmatprep.subr.bf16.mxu0 0
        %647 = vmatpush1.bf16.msra.mxu0 0
        %648 = vmatprep.subr.bf16.mxu0 0
        %649 = vmatpush1.bf16.msra.mxu0 0
        %650 = vmatprep.subr.bf16.mxu0 0
        %651 = vmatpush1.bf16.msra.mxu0 0
        %652 = vmatprep.subr.bf16.mxu0 0
        %653 = vmatpush1.bf16.msra.mxu0 0
        %654 = vmatprep.mubr.bf16.mxu0 0
        %655 = vmatmul.mubr.bf16.gmra.mrb[0].mxu0 %v302
        %v656 = vpop.f32.mrb[0].mxu0
        %v657 = vadd.f32 %v379, %v656
        %v658 = vpop.f32.mrb[0].mxu0
        %v659 = vadd.f32 %v381, %v658
        %v660 = vpop.f32.mrb[0].mxu0
        %v661 = vadd.f32 %v383, %v660
        %v662 = vpop.f32.mrb[0].mxu0
        %v663 = vadd.f32 %v385, %v662
        %664 = vmatprep.mubr.bf16.mxu0 0
        %665 = vmatmul.mubr.bf16.gmra.mrb[0].mxu0 %v305
        %v666 = vpop.f32.mrb[0].mxu0
        %v667 = vadd.f32 %v389, %v666
        %v668 = vpop.f32.mrb[0].mxu0
        %v669 = vadd.f32 %v391, %v668
        %v670 = vpop.f32.mrb[0].mxu0
        %v671 = vadd.f32 %v393, %v670
        %v672 = vpop.f32.mrb[0].mxu0
        %v673 = vadd.f32 %v395, %v672
        %674 = vmatprep.mubr.bf16.mxu0 0
        %675 = vmatmul.mubr.bf16.gmra.mrb[0].mxu0 %v308
        %v676 = vpop.f32.mrb[0].mxu0
        %v677 = vadd.f32 %v399, %v676
        %v678 = vpop.f32.mrb[0].mxu0
        %v679 = vadd.f32 %v401, %v678
        %v680 = vpop.f32.mrb[0].mxu0
        %v681 = vadd.f32 %v403, %v680
        %v682 = vpop.f32.mrb[0].mxu0
        %v683 = vadd.f32 %v405, %v682
        %684 = vmatprep.mubr.bf16.mxu0 0
        %685 = vmatmul.mubr.bf16.gmra.mrb[0].mxu0 %v311
        %v686 = vpop.f32.mrb[0].mxu0
        %v687 = vadd.f32 %v409, %v686
        %v688 = vpop.f32.mrb[0].mxu0
        %v689 = vadd.f32 %v411, %v688
        %v690 = vpop.f32.mrb[0].mxu0
        %v691 = vadd.f32 %v413, %v690
        %v692 = vpop.f32.mrb[0].mxu0
        %v693 = vadd.f32 %v415, %v692
        %694 = vmatprep.mubr.bf16.mxu0 0
        %695 = vmatmul.mubr.bf16.gmra.mrb[0].mxu0 %v314
        %v696 = vpop.f32.mrb[0].mxu0
        %v697 = vadd.f32 %v419, %v696
        %v698 = vpop.f32.mrb[0].mxu0
        %v699 = vadd.f32 %v421, %v698
        %v700 = vpop.f32.mrb[0].mxu0
        %v701 = vadd.f32 %v423, %v700
        %v702 = vpop.f32.mrb[0].mxu0
        %v703 = vadd.f32 %v425, %v702
        %704 = vmatprep.mubr.bf16.mxu0 0
        %705 = vmatmul.mubr.bf16.gmra.mrb[0].mxu0 %v317
        %v706 = vpop.f32.mrb[0].mxu0
        %v707 = vadd.f32 %v429, %v706
        %v708 = vpop.f32.mrb[0].mxu0
        %v709 = vadd.f32 %v431, %v708
        %v710 = vpop.f32.mrb[0].mxu0
        %v711 = vadd.f32 %v433, %v710
        %v712 = vpop.f32.mrb[0].mxu0
        %v713 = vadd.f32 %v435, %v712
        %714 = vmatprep.mubr.bf16.mxu0 0
        %715 = vmatmul.mubr.bf16.gmra.mrb[0].mxu0 %v320
        %v716 = vpop.f32.mrb[0].mxu0
        %v717 = vadd.f32 %v439, %v716
        %v718 = vpop.f32.mrb[0].mxu0
        %v719 = vadd.f32 %v441, %v718
        %v720 = vpop.f32.mrb[0].mxu0
        %v721 = vadd.f32 %v443, %v720
        %v722 = vpop.f32.mrb[0].mxu0
        %v723 = vadd.f32 %v445, %v722
        %724 = vmatprep.mubr.bf16.mxu0 0
        %725 = vmatmul.mubr.bf16.gmra.mrb[0].mxu0 %v323
        %v726 = vpop.f32.mrb[0].mxu0
        %v727 = vadd.f32 %v449, %v726
        %v728 = vpop.f32.mrb[0].mxu0
        %v729 = vadd.f32 %v451, %v728
        %v730 = vpop.f32.mrb[0].mxu0
        %v731 = vadd.f32 %v453, %v730
        %v732 = vpop.f32.mrb[0].mxu0
        %v733 = vadd.f32 %v455, %v732
        %734 = vmatprep.mubr.bf16.mxu0 0
        %735 = vmatmul.mubr.bf16.gmra.mrb[0].mxu0 %v326
        %v736 = vpop.f32.mrb[0].mxu0
        %v737 = vadd.f32 %v459, %v736
        %v738 = vpop.f32.mrb[0].mxu0
        %v739 = vadd.f32 %v461, %v738
        %v740 = vpop.f32.mrb[0].mxu0
        %v741 = vadd.f32 %v463, %v740
        %v742 = vpop.f32.mrb[0].mxu0
        %v743 = vadd.f32 %v465, %v742
        %744 = vmatprep.mubr.bf16.mxu0 0
        %745 = vmatmul.mubr.bf16.gmra.mrb[0].mxu0 %v329
        %v746 = vpop.f32.mrb[0].mxu0
        %v747 = vadd.f32 %v469, %v746
        %v748 = vpop.f32.mrb[0].mxu0
        %v749 = vadd.f32 %v471, %v748
        %v750 = vpop.f32.mrb[0].mxu0
        %v751 = vadd.f32 %v473, %v750
        %v752 = vpop.f32.mrb[0].mxu0
        %v753 = vadd.f32 %v475, %v752
        %754 = vdwg.mxu0
        %755 = vmatprep.subr.bf16.mxu0 %v620
        %756 = vmatpush1.bf16.msra.mxu0 %v617
        %757 = vmatprep.subr.bf16.mxu0 0
        %758 = vmatpush1.bf16.msra.mxu0 0
        %759 = vmatprep.subr.bf16.mxu0 0
        %760 = vmatpush1.bf16.msra.mxu0 0
        %761 = vmatprep.subr.bf16.mxu0 0
        %762 = vmatpush1.bf16.msra.mxu0 0
        %763 = vmatprep.subr.bf16.mxu0 0
        %764 = vmatpush1.bf16.msra.mxu0 0
        %765 = vmatprep.subr.bf16.mxu0 0
        %766 = vmatpush1.bf16.msra.mxu0 0
        %767 = vmatprep.subr.bf16.mxu0 0
        %768 = vmatpush1.bf16.msra.mxu0 0
        %769 = vmatprep.subr.bf16.mxu0 0
        %770 = vmatpush1.bf16.msra.mxu0 0
        %771 = vmatprep.subr.bf16.mxu0 0
        %772 = vmatpush1.bf16.msra.mxu0 0
        %773 = vmatprep.subr.bf16.mxu0 0
        %774 = vmatpush1.bf16.msra.mxu0 0
        %775 = vmatprep.subr.bf16.mxu0 0
        %776 = vmatpush1.bf16.msra.mxu0 0
        %777 = vmatprep.subr.bf16.mxu0 0
        %778 = vmatpush1.bf16.msra.mxu0 0
        %779 = vmatprep.subr.bf16.mxu0 0
        %780 = vmatpush1.bf16.msra.mxu0 0
        %781 = vmatprep.subr.bf16.mxu0 0
        %782 = vmatpush1.bf16.msra.mxu0 0
        %783 = vmatprep.subr.bf16.mxu0 0
        %784 = vmatpush1.bf16.msra.mxu0 0
        %785 = vmatprep.subr.bf16.mxu0 0
        %786 = vmatpush1.bf16.msra.mxu0 0
        %787 = vmatprep.mubr.bf16.mxu0 0
        %788 = vmatmul.mubr.bf16.gmra.mrb[0].mxu0 %v302
        %v789 = vpop.f32.mrb[0].mxu0
        %v790 = vadd.f32 %v512, %v789
        %v791 = vpop.f32.mrb[0].mxu0
        %v792 = vadd.f32 %v514, %v791
        %v793 = vpop.f32.mrb[0].mxu0
        %v794 = vadd.f32 %v516, %v793
        %v795 = vpop.f32.mrb[0].mxu0
        %v796 = vadd.f32 %v518, %v795
        %797 = vmatprep.mubr.bf16.mxu0 0
        %798 = vmatmul.mubr.bf16.gmra.mrb[0].mxu0 %v305
        %v799 = vpop.f32.mrb[0].mxu0
        %v800 = vadd.f32 %v522, %v799
        %v801 = vpop.f32.mrb[0].mxu0
        %v802 = vadd.f32 %v524, %v801
        %v803 = vpop.f32.mrb[0].mxu0
        %v804 = vadd.f32 %v526, %v803
        %v805 = vpop.f32.mrb[0].mxu0
        %v806 = vadd.f32 %v528, %v805
        %807 = vmatprep.mubr.bf16.mxu0 0
        %808 = vmatmul.mubr.bf16.gmra.mrb[0].mxu0 %v308
        %v809 = vpop.f32.mrb[0].mxu0
        %v810 = vadd.f32 %v532, %v809
        %v811 = vpop.f32.mrb[0].mxu0
        %v812 = vadd.f32 %v534, %v811
        %v813 = vpop.f32.mrb[0].mxu0
        %v814 = vadd.f32 %v536, %v813
        %v815 = vpop.f32.mrb[0].mxu0
        %v816 = vadd.f32 %v538, %v815
        %817 = vmatprep.mubr.bf16.mxu0 0
        %818 = vmatmul.mubr.bf16.gmra.mrb[0].mxu0 %v311
        %v819 = vpop.f32.mrb[0].mxu0
        %v820 = vadd.f32 %v542, %v819
        %v821 = vpop.f32.mrb[0].mxu0
        %v822 = vadd.f32 %v544, %v821
        %v823 = vpop.f32.mrb[0].mxu0
        %v824 = vadd.f32 %v546, %v823
        %v825 = vpop.f32.mrb[0].mxu0
        %v826 = vadd.f32 %v548, %v825
        %827 = vmatprep.mubr.bf16.mxu0 0
        %828 = vmatmul.mubr.bf16.gmra.mrb[0].mxu0 %v314
        %v829 = vpop.f32.mrb[0].mxu0
        %v830 = vadd.f32 %v552, %v829
        %v831 = vpop.f32.mrb[0].mxu0
        %v832 = vadd.f32 %v554, %v831
        %v833 = vpop.f32.mrb[0].mxu0
        %v834 = vadd.f32 %v556, %v833
        %v835 = vpop.f32.mrb[0].mxu0
        %v836 = vadd.f32 %v558, %v835
        %837 = vmatprep.mubr.bf16.mxu0 0
        %838 = vmatmul.mubr.bf16.gmra.mrb[0].mxu0 %v317
        %v839 = vpop.f32.mrb[0].mxu0
        %v840 = vadd.f32 %v562, %v839
        %v841 = vpop.f32.mrb[0].mxu0
        %v842 = vadd.f32 %v564, %v841
        %v843 = vpop.f32.mrb[0].mxu0
        %v844 = vadd.f32 %v566, %v843
        %v845 = vpop.f32.mrb[0].mxu0
        %v846 = vadd.f32 %v568, %v845
        %847 = vmatprep.mubr.bf16.mxu0 0
        %848 = vmatmul.mubr.bf16.gmra.mrb[0].mxu0 %v320
        %v849 = vpop.f32.mrb[0].mxu0
        %v850 = vadd.f32 %v572, %v849
        %v851 = vpop.f32.mrb[0].mxu0
        %v852 = vadd.f32 %v574, %v851
        %v853 = vpop.f32.mrb[0].mxu0
        %v854 = vadd.f32 %v576, %v853
        %v855 = vpop.f32.mrb[0].mxu0
        %v856 = vadd.f32 %v578, %v855
        %857 = vmatprep.mubr.bf16.mxu0 0
        %858 = vmatmul.mubr.bf16.gmra.mrb[0].mxu0 %v323
        %v859 = vpop.f32.mrb[0].mxu0
        %v860 = vadd.f32 %v582, %v859
        %v861 = vpop.f32.mrb[0].mxu0
        %v862 = vadd.f32 %v584, %v861
        %v863 = vpop.f32.mrb[0].mxu0
        %v864 = vadd.f32 %v586, %v863
        %v865 = vpop.f32.mrb[0].mxu0
        %v866 = vadd.f32 %v588, %v865
        %867 = vmatprep.mubr.bf16.mxu0 0
        %868 = vmatmul.mubr.bf16.gmra.mrb[0].mxu0 %v326
        %v869 = vpop.f32.mrb[0].mxu0
        %v870 = vadd.f32 %v592, %v869
        %v871 = vpop.f32.mrb[0].mxu0
        %v872 = vadd.f32 %v594, %v871
        %v873 = vpop.f32.mrb[0].mxu0
        %v874 = vadd.f32 %v596, %v873
        %v875 = vpop.f32.mrb[0].mxu0
        %v876 = vadd.f32 %v598, %v875
        %877 = vmatprep.mubr.bf16.mxu0 0
        %878 = vmatmul.mubr.bf16.gmra.mrb[0].mxu0 %v329
        %v879 = vpop.f32.mrb[0].mxu0
        %v880 = vadd.f32 %v602, %v879
        %v881 = vpop.f32.mrb[0].mxu0
        %v882 = vadd.f32 %v604, %v881
        %v883 = vpop.f32.mrb[0].mxu0
        %v884 = vadd.f32 %v606, %v883
        %v885 = vpop.f32.mrb[0].mxu0
        %v886 = vadd.f32 %v608, %v885
        %887 = vdwg.mxu0
        %v889 = vsel %vm331, %v272, 0
        %v892 = vsel %vm331, %v273, 0
        %v895 = vsel %vm331, %v274, 0
        %v898 = vsel %vm331, %v275, 0
        %900 = vmatprep.subr.bf16.mxu0 %v892
        %901 = vmatpush1.bf16.msra.mxu0 %v889
        %902 = vmatprep.subr.bf16.mxu0 0
        %903 = vmatpush1.bf16.msra.mxu0 0
        %904 = vmatprep.subr.bf16.mxu0 0
        %905 = vmatpush1.bf16.msra.mxu0 0
        %906 = vmatprep.subr.bf16.mxu0 0
        %907 = vmatpush1.bf16.msra.mxu0 0
        %908 = vmatprep.subr.bf16.mxu0 0
        %909 = vmatpush1.bf16.msra.mxu0 0
        %910 = vmatprep.subr.bf16.mxu0 0
        %911 = vmatpush1.bf16.msra.mxu0 0
        %912 = vmatprep.subr.bf16.mxu0 0
        %913 = vmatpush1.bf16.msra.mxu0 0
        %914 = vmatprep.subr.bf16.mxu0 0
        %915 = vmatpush1.bf16.msra.mxu0 0
        %916 = vmatprep.subr.bf16.mxu0 0
        %917 = vmatpush1.bf16.msra.mxu0 0
        %918 = vmatprep.subr.bf16.mxu0 0
        %919 = vmatpush1.bf16.msra.mxu0 0
        %920 = vmatprep.subr.bf16.mxu0 0
        %921 = vmatpush1.bf16.msra.mxu0 0
        %922 = vmatprep.subr.bf16.mxu0 0
        %923 = vmatpush1.bf16.msra.mxu0 0
        %924 = vmatprep.subr.bf16.mxu0 0
        %925 = vmatpush1.bf16.msra.mxu0 0
        %926 = vmatprep.subr.bf16.mxu0 0
        %927 = vmatpush1.bf16.msra.mxu0 0
        %928 = vmatprep.subr.bf16.mxu0 0
        %929 = vmatpush1.bf16.msra.mxu0 0
        %930 = vmatprep.subr.bf16.mxu0 0
        %931 = vmatpush1.bf16.msra.mxu0 0
        %932 = vmatprep.mubr.bf16.mxu0 0
        %933 = vmatmul.mubr.bf16.gmra.mrb[0].mxu0 %v302
        %v934 = vpop.f32.mrb[0].mxu0
        %v935 = vadd.f32 %v657, %v934
        %v936 = vpop.f32.mrb[0].mxu0
        %v937 = vadd.f32 %v659, %v936
        %v938 = vpop.f32.mrb[0].mxu0
        %v939 = vadd.f32 %v661, %v938
        %v940 = vpop.f32.mrb[0].mxu0
        %v941 = vadd.f32 %v663, %v940
        %942 = vmatprep.mubr.bf16.mxu0 0
        %943 = vmatmul.mubr.bf16.gmra.mrb[0].mxu0 %v305
        %v944 = vpop.f32.mrb[0].mxu0
        %v945 = vadd.f32 %v667, %v944
        %v946 = vpop.f32.mrb[0].mxu0
        %v947 = vadd.f32 %v669, %v946
        %v948 = vpop.f32.mrb[0].mxu0
        %v949 = vadd.f32 %v671, %v948
        %v950 = vpop.f32.mrb[0].mxu0
        %v951 = vadd.f32 %v673, %v950
        %952 = vmatprep.mubr.bf16.mxu0 0
        %953 = vmatmul.mubr.bf16.gmra.mrb[0].mxu0 %v308
        %v954 = vpop.f32.mrb[0].mxu0
        %v955 = vadd.f32 %v677, %v954
        %v956 = vpop.f32.mrb[0].mxu0
        %v957 = vadd.f32 %v679, %v956
        %v958 = vpop.f32.mrb[0].mxu0
        %v959 = vadd.f32 %v681, %v958
        %v960 = vpop.f32.mrb[0].mxu0
        %v961 = vadd.f32 %v683, %v960
        %962 = vmatprep.mubr.bf16.mxu0 0
        %963 = vmatmul.mubr.bf16.gmra.mrb[0].mxu0 %v311
        %v964 = vpop.f32.mrb[0].mxu0
        %v965 = vadd.f32 %v687, %v964
        %v966 = vpop.f32.mrb[0].mxu0
        %v967 = vadd.f32 %v689, %v966
        %v968 = vpop.f32.mrb[0].mxu0
        %v969 = vadd.f32 %v691, %v968
        %v970 = vpop.f32.mrb[0].mxu0
        %v971 = vadd.f32 %v693, %v970
        %972 = vmatprep.mubr.bf16.mxu0 0
        %973 = vmatmul.mubr.bf16.gmra.mrb[0].mxu0 %v314
        %v974 = vpop.f32.mrb[0].mxu0
        %v975 = vadd.f32 %v697, %v974
        %v976 = vpop.f32.mrb[0].mxu0
        %v977 = vadd.f32 %v699, %v976
        %v978 = vpop.f32.mrb[0].mxu0
        %v979 = vadd.f32 %v701, %v978
        %v980 = vpop.f32.mrb[0].mxu0
        %v981 = vadd.f32 %v703, %v980
        %982 = vmatprep.mubr.bf16.mxu0 0
        %983 = vmatmul.mubr.bf16.gmra.mrb[0].mxu0 %v317
        %v984 = vpop.f32.mrb[0].mxu0
        %v985 = vadd.f32 %v707, %v984
        %v986 = vpop.f32.mrb[0].mxu0
        %v987 = vadd.f32 %v709, %v986
        %v988 = vpop.f32.mrb[0].mxu0
        %v989 = vadd.f32 %v711, %v988
        %v990 = vpop.f32.mrb[0].mxu0
        %v991 = vadd.f32 %v713, %v990
        %992 = vmatprep.mubr.bf16.mxu0 0
        %993 = vmatmul.mubr.bf16.gmra.mrb[0].mxu0 %v320
        %v994 = vpop.f32.mrb[0].mxu0
        %v995 = vadd.f32 %v717, %v994
        %v996 = vpop.f32.mrb[0].mxu0
        %v997 = vadd.f32 %v719, %v996
        %v998 = vpop.f32.mrb[0].mxu0
        %v999 = vadd.f32 %v721, %v998
        %v1000 = vpop.f32.mrb[0].mxu0
        %v1001 = vadd.f32 %v723, %v1000
        %1002 = vmatprep.mubr.bf16.mxu0 0
        %1003 = vmatmul.mubr.bf16.gmra.mrb[0].mxu0 %v323
        %v1004 = vpop.f32.mrb[0].mxu0
        %v1005 = vadd.f32 %v727, %v1004
        %v1006 = vpop.f32.mrb[0].mxu0
        %v1007 = vadd.f32 %v729, %v1006
        %v1008 = vpop.f32.mrb[0].mxu0
        %v1009 = vadd.f32 %v731, %v1008
        %v1010 = vpop.f32.mrb[0].mxu0
        %v1011 = vadd.f32 %v733, %v1010
        %1012 = vmatprep.mubr.bf16.mxu0 0
        %1013 = vmatmul.mubr.bf16.gmra.mrb[0].mxu0 %v326
        %v1014 = vpop.f32.mrb[0].mxu0
        %v1015 = vadd.f32 %v737, %v1014
        %v1016 = vpop.f32.mrb[0].mxu0
        %v1017 = vadd.f32 %v739, %v1016
        %v1018 = vpop.f32.mrb[0].mxu0
        %v1019 = vadd.f32 %v741, %v1018
        %v1020 = vpop.f32.mrb[0].mxu0
        %v1021 = vadd.f32 %v743, %v1020
        %1022 = vmatprep.mubr.bf16.mxu0 0
        %1023 = vmatmul.mubr.bf16.gmra.mrb[0].mxu0 %v329
        %v1024 = vpop.f32.mrb[0].mxu0
        %v1025 = vadd.f32 %v747, %v1024
        %v1026 = vpop.f32.mrb[0].mxu0
        %v1027 = vadd.f32 %v749, %v1026
        %v1028 = vpop.f32.mrb[0].mxu0
        %v1029 = vadd.f32 %v751, %v1028
        %v1030 = vpop.f32.mrb[0].mxu0
        %v1031 = vadd.f32 %v753, %v1030
        %1032 = vdwg.mxu0
        %1033 = vmatprep.subr.bf16.mxu0 %v898
        %1034 = vmatpush1.bf16.msra.mxu0 %v895
        %1035 = vmatprep.subr.bf16.mxu0 0
        %1036 = vmatpush1.bf16.msra.mxu0 0
        %1037 = vmatprep.subr.bf16.mxu0 0
        %1038 = vmatpush1.bf16.msra.mxu0 0
        %1039 = vmatprep.subr.bf16.mxu0 0
        %1040 = vmatpush1.bf16.msra.mxu0 0
        %1041 = vmatprep.subr.bf16.mxu0 0
        %1042 = vmatpush1.bf16.msra.mxu0 0
        %1043 = vmatprep.subr.bf16.mxu0 0
        %1044 = vmatpush1.bf16.msra.mxu0 0
        %1045 = vmatprep.subr.bf16.mxu0 0
        %1046 = vmatpush1.bf16.msra.mxu0 0
        %1047 = vmatprep.subr.bf16.mxu0 0
        %1048 = vmatpush1.bf16.msra.mxu0 0
        %1049 = vmatprep.subr.bf16.mxu0 0
        %1050 = vmatpush1.bf16.msra.mxu0 0
        %1051 = vmatprep.subr.bf16.mxu0 0
        %1052 = vmatpush1.bf16.msra.mxu0 0
        %1053 = vmatprep.subr.bf16.mxu0 0
        %1054 = vmatpush1.bf16.msra.mxu0 0
        %1055 = vmatprep.subr.bf16.mxu0 0
        %1056 = vmatpush1.bf16.msra.mxu0 0
        %1057 = vmatprep.subr.bf16.mxu0 0
        %1058 = vmatpush1.bf16.msra.mxu0 0
        %1059 = vmatprep.subr.bf16.mxu0 0
        %1060 = vmatpush1.bf16.msra.mxu0 0
        %1061 = vmatprep.subr.bf16.mxu0 0
        %1062 = vmatpush1.bf16.msra.mxu0 0
        %1063 = vmatprep.subr.bf16.mxu0 0
        %1064 = vmatpush1.bf16.msra.mxu0 0
        %1065 = vmatprep.mubr.bf16.mxu0 0
        %1066 = vmatmul.mubr.bf16.gmra.mrb[0].mxu0 %v302
        %v1067 = vpop.f32.mrb[0].mxu0
        %v1068 = vadd.f32 %v790, %v1067
        %v1069 = vpop.f32.mrb[0].mxu0
        %v1070 = vadd.f32 %v792, %v1069
        %v1071 = vpop.f32.mrb[0].mxu0
        %v1072 = vadd.f32 %v794, %v1071
        %v1073 = vpop.f32.mrb[0].mxu0
        %v1074 = vadd.f32 %v796, %v1073
        %1075 = vmatprep.mubr.bf16.mxu0 0
        %1076 = vmatmul.mubr.bf16.gmra.mrb[0].mxu0 %v305
        %v1077 = vpop.f32.mrb[0].mxu0
        %v1078 = vadd.f32 %v800, %v1077
        %v1079 = vpop.f32.mrb[0].mxu0
        %v1080 = vadd.f32 %v802, %v1079
        %v1081 = vpop.f32.mrb[0].mxu0
        %v1082 = vadd.f32 %v804, %v1081
        %v1083 = vpop.f32.mrb[0].mxu0
        %v1084 = vadd.f32 %v806, %v1083
        %1085 = vmatprep.mubr.bf16.mxu0 0
        %1086 = vmatmul.mubr.bf16.gmra.mrb[0].mxu0 %v308
        %v1087 = vpop.f32.mrb[0].mxu0
        %v1088 = vadd.f32 %v810, %v1087
        %v1089 = vpop.f32.mrb[0].mxu0
        %v1090 = vadd.f32 %v812, %v1089
        %v1091 = vpop.f32.mrb[0].mxu0
        %v1092 = vadd.f32 %v814, %v1091
        %v1093 = vpop.f32.mrb[0].mxu0
        %v1094 = vadd.f32 %v816, %v1093
        %1095 = vmatprep.mubr.bf16.mxu0 0
        %1096 = vmatmul.mubr.bf16.gmra.mrb[0].mxu0 %v311
        %v1097 = vpop.f32.mrb[0].mxu0
        %v1098 = vadd.f32 %v820, %v1097
        %v1099 = vpop.f32.mrb[0].mxu0
        %v1100 = vadd.f32 %v822, %v1099
        %v1101 = vpop.f32.mrb[0].mxu0
        %v1102 = vadd.f32 %v824, %v1101
        %v1103 = vpop.f32.mrb[0].mxu0
        %v1104 = vadd.f32 %v826, %v1103
        %1105 = vmatprep.mubr.bf16.mxu0 0
        %1106 = vmatmul.mubr.bf16.gmra.mrb[0].mxu0 %v314
        %v1107 = vpop.f32.mrb[0].mxu0
        %v1108 = vadd.f32 %v830, %v1107
        %v1109 = vpop.f32.mrb[0].mxu0
        %v1110 = vadd.f32 %v832, %v1109
        %v1111 = vpop.f32.mrb[0].mxu0
        %v1112 = vadd.f32 %v834, %v1111
        %v1113 = vpop.f32.mrb[0].mxu0
        %v1114 = vadd.f32 %v836, %v1113
        %1115 = vmatprep.mubr.bf16.mxu0 0
        %1116 = vmatmul.mubr.bf16.gmra.mrb[0].mxu0 %v317
        %v1117 = vpop.f32.mrb[0].mxu0
        %v1118 = vadd.f32 %v840, %v1117
        %v1119 = vpop.f32.mrb[0].mxu0
        %v1120 = vadd.f32 %v842, %v1119
        %v1121 = vpop.f32.mrb[0].mxu0
        %v1122 = vadd.f32 %v844, %v1121
        %v1123 = vpop.f32.mrb[0].mxu0
        %v1124 = vadd.f32 %v846, %v1123
        %1125 = vmatprep.mubr.bf16.mxu0 0
        %1126 = vmatmul.mubr.bf16.gmra.mrb[0].mxu0 %v320
        %v1127 = vpop.f32.mrb[0].mxu0
        %v1128 = vadd.f32 %v850, %v1127
        %v1129 = vpop.f32.mrb[0].mxu0
        %v1130 = vadd.f32 %v852, %v1129
        %v1131 = vpop.f32.mrb[0].mxu0
        %v1132 = vadd.f32 %v854, %v1131
        %v1133 = vpop.f32.mrb[0].mxu0
        %v1134 = vadd.f32 %v856, %v1133
        %1135 = vmatprep.mubr.bf16.mxu0 0
        %1136 = vmatmul.mubr.bf16.gmra.mrb[0].mxu0 %v323
        %v1137 = vpop.f32.mrb[0].mxu0
        %v1138 = vadd.f32 %v860, %v1137
        %v1139 = vpop.f32.mrb[0].mxu0
        %v1140 = vadd.f32 %v862, %v1139
        %v1141 = vpop.f32.mrb[0].mxu0
        %v1142 = vadd.f32 %v864, %v1141
        %v1143 = vpop.f32.mrb[0].mxu0
        %v1144 = vadd.f32 %v866, %v1143
        %1145 = vmatprep.mubr.bf16.mxu0 0
        %1146 = vmatmul.mubr.bf16.gmra.mrb[0].mxu0 %v326
        %v1147 = vpop.f32.mrb[0].mxu0
        %v1148 = vadd.f32 %v870, %v1147
        %v1149 = vpop.f32.mrb[0].mxu0
        %v1150 = vadd.f32 %v872, %v1149
        %v1151 = vpop.f32.mrb[0].mxu0
        %v1152 = vadd.f32 %v874, %v1151
        %v1153 = vpop.f32.mrb[0].mxu0
        %v1154 = vadd.f32 %v876, %v1153
        %1155 = vmatprep.mubr.bf16.mxu0 0
        %1156 = vmatmul.mubr.bf16.gmra.mrb[0].mxu0 %v329
        %v1157 = vpop.f32.mrb[0].mxu0
        %v1158 = vadd.f32 %v880, %v1157
        %v1159 = vpop.f32.mrb[0].mxu0
        %v1160 = vadd.f32 %v882, %v1159
        %v1161 = vpop.f32.mrb[0].mxu0
        %v1162 = vadd.f32 %v884, %v1161
        %v1163 = vpop.f32.mrb[0].mxu0
        %v1164 = vadd.f32 %v886, %v1163
        %1165 = vdwg.mxu0
        %v1166 = vld [vmem:[%s228] sm:$0xff]
        %v1167 = vld [vmem:[%s228 + $0x8] sm:$0xff]
        %v1168 = vld [vmem:[%s228 + $0x10] sm:$0xff]
        %v1169 = vld [vmem:[%s228 + $0x18] sm:$0xff]
        %v1170 = vld [vmem:[%s228 + $0x20] sm:$0xff]
        %v1171 = vld [vmem:[%s228 + $0x28] sm:$0xff]
        %v1172 = vld [vmem:[%s228 + $0x30] sm:$0xff]
        %v1173 = vld [vmem:[%s228 + $0x38] sm:$0xff]
        %v1174 = vld [vmem:[%s228 + $0x40] sm:$0xff]
        %v1175 = vld [vmem:[%s228 + $0x48] sm:$0xff]
        %v1176 = vld [vmem:[%s228 + $0x50] sm:$0xff]
        %v1177 = vld [vmem:[%s228 + $0x58] sm:$0xff]
        %v1178 = vld [vmem:[%s228 + $0x60] sm:$0xff]
        %v1179 = vld [vmem:[%s228 + $0x68] sm:$0xff]
        %v1180 = vld [vmem:[%s228 + $0x70] sm:$0xff]
        %v1181 = vld [vmem:[%s228 + $0x78] sm:$0xff]
        %v1182 = vld [vmem:[%s228 + $0x80] sm:$0xff]
        %v1183 = vld [vmem:[%s228 + $0x88] sm:$0xff]
        %v1184 = vld [vmem:[%s228 + $0x90] sm:$0xff]
        %v1185 = vld [vmem:[%s228 + $0x98] sm:$0xff]
        %v1186 = vmax.f32 %v1166, -5.0
        %v1187 = vmax.f32 %v1167, -5.0
        %v1188 = vmax.f32 %v1168, -5.0
        %v1189 = vmax.f32 %v1169, -5.0
        %v1190 = vmax.f32 %v1170, -5.0
        %v1191 = vmax.f32 %v1171, -5.0
        %v1192 = vmax.f32 %v1172, -5.0
        %v1193 = vmax.f32 %v1173, -5.0
        %v1194 = vmax.f32 %v1174, -5.0
        %v1195 = vmax.f32 %v1175, -5.0
        %v1196 = vmax.f32 %v1176, -5.0
        %v1197 = vmax.f32 %v1177, -5.0
        %v1198 = vmax.f32 %v1178, -5.0
        %v1199 = vmax.f32 %v1179, -5.0
        %v1200 = vmax.f32 %v1180, -5.0
        %v1201 = vmax.f32 %v1181, -5.0
        %v1202 = vmax.f32 %v1182, -5.0
        %v1203 = vmax.f32 %v1183, -5.0
        %v1204 = vmax.f32 %v1184, -5.0
        %v1205 = vmax.f32 %v1185, -5.0
        %v1206 = vsub.f32 0.0, %v1186
        %v1207 = vsub.f32 0.0, %v1187
        %v1208 = vsub.f32 0.0, %v1188
        %v1209 = vsub.f32 0.0, %v1189
        %v1210 = vsub.f32 0.0, %v1190
        %v1211 = vsub.f32 0.0, %v1191
        %v1212 = vsub.f32 0.0, %v1192
        %v1213 = vsub.f32 0.0, %v1193
        %v1214 = vsub.f32 0.0, %v1194
        %v1215 = vsub.f32 0.0, %v1195
        %v1216 = vsub.f32 0.0, %v1196
        %v1217 = vsub.f32 0.0, %v1197
        %v1218 = vsub.f32 0.0, %v1198
        %v1219 = vsub.f32 0.0, %v1199
        %v1220 = vsub.f32 0.0, %v1200
        %v1221 = vsub.f32 0.0, %v1201
        %v1222 = vsub.f32 0.0, %v1202
        %v1223 = vsub.f32 0.0, %v1203
        %v1224 = vsub.f32 0.0, %v1204
        %v1225 = vsub.f32 0.0, %v1205
        %v1226 = vmul.f32 %v1206, 1.442695
        %v1227 = vpow.pop %v1226
        %v1228 = vmul.f32 %v1207, 1.442695
        %v1229 = vpow.pop %v1228
        %v1230 = vmul.f32 %v1208, 1.442695
        %v1231 = vpow.pop %v1230
        %v1232 = vmul.f32 %v1209, 1.442695
        %v1233 = vpow.pop %v1232
        %v1234 = vmul.f32 %v1210, 1.442695
        %v1235 = vpow.pop %v1234
        %v1236 = vmul.f32 %v1211, 1.442695
        %v1237 = vpow.pop %v1236
        %v1238 = vmul.f32 %v1212, 1.442695
        %v1239 = vpow.pop %v1238
        %v1240 = vmul.f32 %v1213, 1.442695
        %v1241 = vpow.pop %v1240
        %v1242 = vmul.f32 %v1214, 1.442695
        %v1243 = vpow.pop %v1242
        %v1244 = vmul.f32 %v1215, 1.442695
        %v1245 = vpow.pop %v1244
        %v1246 = vmul.f32 %v1216, 1.442695
        %v1247 = vpow.pop %v1246
        %v1248 = vmul.f32 %v1217, 1.442695
        %v1249 = vpow.pop %v1248
        %v1250 = vmul.f32 %v1218, 1.442695
        %v1251 = vpow.pop %v1250
        %v1252 = vmul.f32 %v1219, 1.442695
        %v1253 = vpow.pop %v1252
        %v1254 = vmul.f32 %v1220, 1.442695
        %v1255 = vpow.pop %v1254
        %v1256 = vmul.f32 %v1221, 1.442695
        %v1257 = vpow.pop %v1256
        %v1258 = vmul.f32 %v1222, 1.442695
        %v1259 = vpow.pop %v1258
        %v1260 = vmul.f32 %v1223, 1.442695
        %v1261 = vpow.pop %v1260
        %v1262 = vmul.f32 %v1224, 1.442695
        %v1263 = vpow.pop %v1262
        %v1264 = vmul.f32 %v1225, 1.442695
        %v1265 = vpow.pop %v1264
        %1267 = vset.pattern.permute.xlu0 1
        %1268 = vperm.xlu0 %1267, %v1166
        %v1269 = vpop.permute.xlu0 %1268
        %1272 = vset.pattern.permute.xlu0 1
        %1273 = vperm.xlu0 %1272, %v1167
        %v1274 = vpop.permute.xlu0 %1273
        %1277 = vset.pattern.permute.xlu0 1
        %1278 = vperm.xlu0 %1277, %v1168
        %v1279 = vpop.permute.xlu0 %1278
        %1282 = vset.pattern.permute.xlu0 1
        %1283 = vperm.xlu0 %1282, %v1169
        %v1284 = vpop.permute.xlu0 %1283
        %1287 = vset.pattern.permute.xlu0 1
        %1288 = vperm.xlu0 %1287, %v1170
        %v1289 = vpop.permute.xlu0 %1288
        %1292 = vset.pattern.permute.xlu0 1
        %1293 = vperm.xlu0 %1292, %v1171
        %v1294 = vpop.permute.xlu0 %1293
        %1297 = vset.pattern.permute.xlu0 1
        %1298 = vperm.xlu0 %1297, %v1172
        %v1299 = vpop.permute.xlu0 %1298
        %1302 = vset.pattern.permute.xlu0 1
        %1303 = vperm.xlu0 %1302, %v1173
        %v1304 = vpop.permute.xlu0 %1303
        %1307 = vset.pattern.permute.xlu0 1
        %1308 = vperm.xlu0 %1307, %v1174
        %v1309 = vpop.permute.xlu0 %1308
        %1312 = vset.pattern.permute.xlu0 1
        %1313 = vperm.xlu0 %1312, %v1175
        %v1314 = vpop.permute.xlu0 %1313
        %1317 = vset.pattern.permute.xlu0 1
        %1318 = vperm.xlu0 %1317, %v1176
        %v1319 = vpop.permute.xlu0 %1318
        %1322 = vset.pattern.permute.xlu0 1
        %1323 = vperm.xlu0 %1322, %v1177
        %v1324 = vpop.permute.xlu0 %1323
        %1327 = vset.pattern.permute.xlu0 1
        %1328 = vperm.xlu0 %1327, %v1178
        %v1329 = vpop.permute.xlu0 %1328
        %1332 = vset.pattern.permute.xlu0 1
        %1333 = vperm.xlu0 %1332, %v1179
        %v1334 = vpop.permute.xlu0 %1333
        %1337 = vset.pattern.permute.xlu0 1
        %1338 = vperm.xlu0 %1337, %v1180
        %v1339 = vpop.permute.xlu0 %1338
        %1342 = vset.pattern.permute.xlu0 1
        %1343 = vperm.xlu0 %1342, %v1181
        %v1344 = vpop.permute.xlu0 %1343
        %1347 = vset.pattern.permute.xlu0 1
        %1348 = vperm.xlu0 %1347, %v1182
        %v1349 = vpop.permute.xlu0 %1348
        %1352 = vset.pattern.permute.xlu0 1
        %1353 = vperm.xlu0 %1352, %v1183
        %v1354 = vpop.permute.xlu0 %1353
        %1357 = vset.pattern.permute.xlu0 1
        %1358 = vperm.xlu0 %1357, %v1184
        %v1359 = vpop.permute.xlu0 %1358
        %1362 = vset.pattern.permute.xlu0 1
        %1363 = vperm.xlu0 %1362, %v1185
        %v1364 = vpop.permute.xlu0 %1363
        %v1366 = vsub.f32 %v935, %v1269
        %v1367 = vsub.f32 %v937, %v1269
        %v1368 = vsub.f32 %v1068, %v1269
        %v1369 = vsub.f32 %v1070, %v1269
        %v1370 = vsub.f32 %v939, %v1274
        %v1371 = vsub.f32 %v941, %v1274
        %v1372 = vsub.f32 %v1072, %v1274
        %v1373 = vsub.f32 %v1074, %v1274
        %v1374 = vsub.f32 %v945, %v1279
        %v1375 = vsub.f32 %v947, %v1279
        %v1376 = vsub.f32 %v1078, %v1279
        %v1377 = vsub.f32 %v1080, %v1279
        %v1378 = vsub.f32 %v949, %v1284
        %v1379 = vsub.f32 %v951, %v1284
        %v1380 = vsub.f32 %v1082, %v1284
        %v1381 = vsub.f32 %v1084, %v1284
        %v1382 = vsub.f32 %v955, %v1289
        %v1383 = vsub.f32 %v957, %v1289
        %v1384 = vsub.f32 %v1088, %v1289
        %v1385 = vsub.f32 %v1090, %v1289
        %v1386 = vsub.f32 %v959, %v1294
        %v1387 = vsub.f32 %v961, %v1294
        %v1388 = vsub.f32 %v1092, %v1294
        %v1389 = vsub.f32 %v1094, %v1294
        %v1390 = vsub.f32 %v965, %v1299
        %v1391 = vsub.f32 %v967, %v1299
        %v1392 = vsub.f32 %v1098, %v1299
        %v1393 = vsub.f32 %v1100, %v1299
        %v1394 = vsub.f32 %v969, %v1304
        %v1395 = vsub.f32 %v971, %v1304
        %v1396 = vsub.f32 %v1102, %v1304
        %v1397 = vsub.f32 %v1104, %v1304
        %v1398 = vsub.f32 %v975, %v1309
        %v1399 = vsub.f32 %v977, %v1309
        %v1400 = vsub.f32 %v1108, %v1309
        %v1401 = vsub.f32 %v1110, %v1309
        %v1402 = vsub.f32 %v979, %v1314
        %v1403 = vsub.f32 %v981, %v1314
        %v1404 = vsub.f32 %v1112, %v1314
        %v1405 = vsub.f32 %v1114, %v1314
        %v1406 = vsub.f32 %v985, %v1319
        %v1407 = vsub.f32 %v987, %v1319
        %v1408 = vsub.f32 %v1118, %v1319
        %v1409 = vsub.f32 %v1120, %v1319
        %v1410 = vsub.f32 %v989, %v1324
        %v1411 = vsub.f32 %v991, %v1324
        %v1412 = vsub.f32 %v1122, %v1324
        %v1413 = vsub.f32 %v1124, %v1324
        %v1414 = vsub.f32 %v995, %v1329
        %v1415 = vsub.f32 %v997, %v1329
        %v1416 = vsub.f32 %v1128, %v1329
        %v1417 = vsub.f32 %v1130, %v1329
        %v1418 = vsub.f32 %v999, %v1334
        %v1419 = vsub.f32 %v1001, %v1334
        %v1420 = vsub.f32 %v1132, %v1334
        %v1421 = vsub.f32 %v1134, %v1334
        %v1422 = vsub.f32 %v1005, %v1339
        %v1423 = vsub.f32 %v1007, %v1339
        %v1424 = vsub.f32 %v1138, %v1339
        %v1425 = vsub.f32 %v1140, %v1339
        %v1426 = vsub.f32 %v1009, %v1344
        %v1427 = vsub.f32 %v1011, %v1344
        %v1428 = vsub.f32 %v1142, %v1344
        %v1429 = vsub.f32 %v1144, %v1344
        %v1430 = vsub.f32 %v1015, %v1349
        %v1431 = vsub.f32 %v1017, %v1349
        %v1432 = vsub.f32 %v1148, %v1349
        %v1433 = vsub.f32 %v1150, %v1349
        %v1434 = vsub.f32 %v1019, %v1354
        %v1435 = vsub.f32 %v1021, %v1354
        %v1436 = vsub.f32 %v1152, %v1354
        %v1437 = vsub.f32 %v1154, %v1354
        %v1438 = vsub.f32 %v1025, %v1359
        %v1439 = vsub.f32 %v1027, %v1359
        %v1440 = vsub.f32 %v1158, %v1359
        %v1441 = vsub.f32 %v1160, %v1359
        %v1442 = vsub.f32 %v1029, %v1364
        %v1443 = vsub.f32 %v1031, %v1364
        %v1444 = vsub.f32 %v1162, %v1364
        %v1445 = vsub.f32 %v1164, %v1364
        %1447 = vset.pattern.permute.xlu0 2
        %1448 = vperm.xlu0 %1447, %v1227
        %v1449 = vpop.permute.xlu0 %1448
        %1452 = vset.pattern.permute.xlu0 2
        %1453 = vperm.xlu0 %1452, %v1229
        %v1454 = vpop.permute.xlu0 %1453
        %1457 = vset.pattern.permute.xlu0 2
        %1458 = vperm.xlu0 %1457, %v1231
        %v1459 = vpop.permute.xlu0 %1458
        %1462 = vset.pattern.permute.xlu0 2
        %1463 = vperm.xlu0 %1462, %v1233
        %v1464 = vpop.permute.xlu0 %1463
        %1467 = vset.pattern.permute.xlu0 2
        %1468 = vperm.xlu0 %1467, %v1235
        %v1469 = vpop.permute.xlu0 %1468
        %1472 = vset.pattern.permute.xlu0 2
        %1473 = vperm.xlu0 %1472, %v1237
        %v1474 = vpop.permute.xlu0 %1473
        %1477 = vset.pattern.permute.xlu0 2
        %1478 = vperm.xlu0 %1477, %v1239
        %v1479 = vpop.permute.xlu0 %1478
        %1482 = vset.pattern.permute.xlu0 2
        %1483 = vperm.xlu0 %1482, %v1241
        %v1484 = vpop.permute.xlu0 %1483
        %1487 = vset.pattern.permute.xlu0 2
        %1488 = vperm.xlu0 %1487, %v1243
        %v1489 = vpop.permute.xlu0 %1488
        %1492 = vset.pattern.permute.xlu0 2
        %1493 = vperm.xlu0 %1492, %v1245
        %v1494 = vpop.permute.xlu0 %1493
        %1497 = vset.pattern.permute.xlu0 2
        %1498 = vperm.xlu0 %1497, %v1247
        %v1499 = vpop.permute.xlu0 %1498
        %1502 = vset.pattern.permute.xlu0 2
        %1503 = vperm.xlu0 %1502, %v1249
        %v1504 = vpop.permute.xlu0 %1503
        %1507 = vset.pattern.permute.xlu0 2
        %1508 = vperm.xlu0 %1507, %v1251
        %v1509 = vpop.permute.xlu0 %1508
        %1512 = vset.pattern.permute.xlu0 2
        %1513 = vperm.xlu0 %1512, %v1253
        %v1514 = vpop.permute.xlu0 %1513
        %1517 = vset.pattern.permute.xlu0 2
        %1518 = vperm.xlu0 %1517, %v1255
        %v1519 = vpop.permute.xlu0 %1518
        %1522 = vset.pattern.permute.xlu0 2
        %1523 = vperm.xlu0 %1522, %v1257
        %v1524 = vpop.permute.xlu0 %1523
        %1527 = vset.pattern.permute.xlu0 2
        %1528 = vperm.xlu0 %1527, %v1259
        %v1529 = vpop.permute.xlu0 %1528
        %1532 = vset.pattern.permute.xlu0 2
        %1533 = vperm.xlu0 %1532, %v1261
        %v1534 = vpop.permute.xlu0 %1533
        %1537 = vset.pattern.permute.xlu0 2
        %1538 = vperm.xlu0 %1537, %v1263
        %v1539 = vpop.permute.xlu0 %1538
        %1542 = vset.pattern.permute.xlu0 2
        %1543 = vperm.xlu0 %1542, %v1265
        %v1544 = vpop.permute.xlu0 %1543
        %v1546 = vmul.f32 %v1366, %v1449
        %v1547 = vmul.f32 %v1367, %v1449
        %v1548 = vmul.f32 %v1368, %v1449
        %v1549 = vmul.f32 %v1369, %v1449
        %v1550 = vmul.f32 %v1370, %v1454
        %v1551 = vmul.f32 %v1371, %v1454
        %v1552 = vmul.f32 %v1372, %v1454
        %v1553 = vmul.f32 %v1373, %v1454
        %v1554 = vmul.f32 %v1374, %v1459
        %v1555 = vmul.f32 %v1375, %v1459
        %v1556 = vmul.f32 %v1376, %v1459
        %v1557 = vmul.f32 %v1377, %v1459
        %v1558 = vmul.f32 %v1378, %v1464
        %v1559 = vmul.f32 %v1379, %v1464
        %v1560 = vmul.f32 %v1380, %v1464
        %v1561 = vmul.f32 %v1381, %v1464
        %v1562 = vmul.f32 %v1382, %v1469
        %v1563 = vmul.f32 %v1383, %v1469
        %v1564 = vmul.f32 %v1384, %v1469
        %v1565 = vmul.f32 %v1385, %v1469
        %v1566 = vmul.f32 %v1386, %v1474
        %v1567 = vmul.f32 %v1387, %v1474
        %v1568 = vmul.f32 %v1388, %v1474
        %v1569 = vmul.f32 %v1389, %v1474
        %v1570 = vmul.f32 %v1390, %v1479
        %v1571 = vmul.f32 %v1391, %v1479
        %v1572 = vmul.f32 %v1392, %v1479
        %v1573 = vmul.f32 %v1393, %v1479
        %v1574 = vmul.f32 %v1394, %v1484
        %v1575 = vmul.f32 %v1395, %v1484
        %v1576 = vmul.f32 %v1396, %v1484
        %v1577 = vmul.f32 %v1397, %v1484
        %v1578 = vmul.f32 %v1398, %v1489
        %v1579 = vmul.f32 %v1399, %v1489
        %v1580 = vmul.f32 %v1400, %v1489
        %v1581 = vmul.f32 %v1401, %v1489
        %v1582 = vmul.f32 %v1402, %v1494
        %v1583 = vmul.f32 %v1403, %v1494
        %v1584 = vmul.f32 %v1404, %v1494
        %v1585 = vmul.f32 %v1405, %v1494
        %v1586 = vmul.f32 %v1406, %v1499
        %v1587 = vmul.f32 %v1407, %v1499
        %v1588 = vmul.f32 %v1408, %v1499
        %v1589 = vmul.f32 %v1409, %v1499
        %v1590 = vmul.f32 %v1410, %v1504
        %v1591 = vmul.f32 %v1411, %v1504
        %v1592 = vmul.f32 %v1412, %v1504
        %v1593 = vmul.f32 %v1413, %v1504
        %v1594 = vmul.f32 %v1414, %v1509
        %v1595 = vmul.f32 %v1415, %v1509
        %v1596 = vmul.f32 %v1416, %v1509
        %v1597 = vmul.f32 %v1417, %v1509
        %v1598 = vmul.f32 %v1418, %v1514
        %v1599 = vmul.f32 %v1419, %v1514
        %v1600 = vmul.f32 %v1420, %v1514
        %v1601 = vmul.f32 %v1421, %v1514
        %v1602 = vmul.f32 %v1422, %v1519
        %v1603 = vmul.f32 %v1423, %v1519
        %v1604 = vmul.f32 %v1424, %v1519
        %v1605 = vmul.f32 %v1425, %v1519
        %v1606 = vmul.f32 %v1426, %v1524
        %v1607 = vmul.f32 %v1427, %v1524
        %v1608 = vmul.f32 %v1428, %v1524
        %v1609 = vmul.f32 %v1429, %v1524
        %v1610 = vmul.f32 %v1430, %v1529
        %v1611 = vmul.f32 %v1431, %v1529
        %v1612 = vmul.f32 %v1432, %v1529
        %v1613 = vmul.f32 %v1433, %v1529
        %v1614 = vmul.f32 %v1434, %v1534
        %v1615 = vmul.f32 %v1435, %v1534
        %v1616 = vmul.f32 %v1436, %v1534
        %v1617 = vmul.f32 %v1437, %v1534
        %v1618 = vmul.f32 %v1438, %v1539
        %v1619 = vmul.f32 %v1439, %v1539
        %v1620 = vmul.f32 %v1440, %v1539
        %v1621 = vmul.f32 %v1441, %v1539
        %v1622 = vmul.f32 %v1442, %v1544
        %v1623 = vmul.f32 %v1443, %v1544
        %v1624 = vmul.f32 %v1444, %v1544
        %v1625 = vmul.f32 %v1445, %v1544
        %1626 = vrot.lane.b32.xlu0 %v1227, 126
        %v1627 = vpop.permute.xlu0 %1626
        %1628 = vrot.lane.b32.xlu0 %v1229, 126
        %v1629 = vpop.permute.xlu0 %1628
        %1630 = vrot.lane.b32.xlu0 %v1231, 126
        %v1631 = vpop.permute.xlu0 %1630
        %1632 = vrot.lane.b32.xlu0 %v1233, 126
        %v1633 = vpop.permute.xlu0 %1632
        %1634 = vrot.lane.b32.xlu0 %v1235, 126
        %v1635 = vpop.permute.xlu0 %1634
        %1636 = vrot.lane.b32.xlu0 %v1237, 126
        %v1637 = vpop.permute.xlu0 %1636
        %1638 = vrot.lane.b32.xlu0 %v1239, 126
        %v1639 = vpop.permute.xlu0 %1638
        %1640 = vrot.lane.b32.xlu0 %v1241, 126
        %v1641 = vpop.permute.xlu0 %1640
        %1642 = vrot.lane.b32.xlu0 %v1243, 126
        %v1643 = vpop.permute.xlu0 %1642
        %1644 = vrot.lane.b32.xlu0 %v1245, 126
        %v1645 = vpop.permute.xlu0 %1644
        %1646 = vrot.lane.b32.xlu0 %v1247, 126
        %v1647 = vpop.permute.xlu0 %1646
        %1648 = vrot.lane.b32.xlu0 %v1249, 126
        %v1649 = vpop.permute.xlu0 %1648
        %1650 = vrot.lane.b32.xlu0 %v1251, 126
        %v1651 = vpop.permute.xlu0 %1650
        %1652 = vrot.lane.b32.xlu0 %v1253, 126
        %v1653 = vpop.permute.xlu0 %1652
        %1654 = vrot.lane.b32.xlu0 %v1255, 126
        %v1655 = vpop.permute.xlu0 %1654
        %1656 = vrot.lane.b32.xlu0 %v1257, 126
        %v1657 = vpop.permute.xlu0 %1656
        %1658 = vrot.lane.b32.xlu0 %v1259, 126
        %v1659 = vpop.permute.xlu0 %1658
        %1660 = vrot.lane.b32.xlu0 %v1261, 126
        %v1661 = vpop.permute.xlu0 %1660
        %1662 = vrot.lane.b32.xlu0 %v1263, 126
        %v1663 = vpop.permute.xlu0 %1662
        %1664 = vrot.lane.b32.xlu0 %v1265, 126
        %v1665 = vpop.permute.xlu0 %1664
        %v1686 = vmul.f32 %v1166, %v1627
        %v1687 = vmul.f32 %v1167, %v1629
        %v1688 = vmul.f32 %v1168, %v1631
        %v1689 = vmul.f32 %v1169, %v1633
        %v1690 = vmul.f32 %v1170, %v1635
        %v1691 = vmul.f32 %v1171, %v1637
        %v1692 = vmul.f32 %v1172, %v1639
        %v1693 = vmul.f32 %v1173, %v1641
        %v1694 = vmul.f32 %v1174, %v1643
        %v1695 = vmul.f32 %v1175, %v1645
        %v1696 = vmul.f32 %v1176, %v1647
        %v1697 = vmul.f32 %v1177, %v1649
        %v1698 = vmul.f32 %v1178, %v1651
        %v1699 = vmul.f32 %v1179, %v1653
        %v1700 = vmul.f32 %v1180, %v1655
        %v1701 = vmul.f32 %v1181, %v1657
        %v1702 = vmul.f32 %v1182, %v1659
        %v1703 = vmul.f32 %v1183, %v1661
        %v1704 = vmul.f32 %v1184, %v1663
        %v1705 = vmul.f32 %v1185, %v1665
        %1707 = vset.pattern.permute.xlu0 0
        %1708 = vperm.xlu0 %1707, %v1686
        %v1709 = vpop.permute.xlu0 %1708
        %1712 = vset.pattern.permute.xlu0 0
        %1713 = vperm.xlu0 %1712, %v1687
        %v1714 = vpop.permute.xlu0 %1713
        %1717 = vset.pattern.permute.xlu0 0
        %1718 = vperm.xlu0 %1717, %v1688
        %v1719 = vpop.permute.xlu0 %1718
        %1722 = vset.pattern.permute.xlu0 0
        %1723 = vperm.xlu0 %1722, %v1689
        %v1724 = vpop.permute.xlu0 %1723
        %1727 = vset.pattern.permute.xlu0 0
        %1728 = vperm.xlu0 %1727, %v1690
        %v1729 = vpop.permute.xlu0 %1728
        %1732 = vset.pattern.permute.xlu0 0
        %1733 = vperm.xlu0 %1732, %v1691
        %v1734 = vpop.permute.xlu0 %1733
        %1737 = vset.pattern.permute.xlu0 0
        %1738 = vperm.xlu0 %1737, %v1692
        %v1739 = vpop.permute.xlu0 %1738
        %1742 = vset.pattern.permute.xlu0 0
        %1743 = vperm.xlu0 %1742, %v1693
        %v1744 = vpop.permute.xlu0 %1743
        %1747 = vset.pattern.permute.xlu0 0
        %1748 = vperm.xlu0 %1747, %v1694
        %v1749 = vpop.permute.xlu0 %1748
        %1752 = vset.pattern.permute.xlu0 0
        %1753 = vperm.xlu0 %1752, %v1695
        %v1754 = vpop.permute.xlu0 %1753
        %1757 = vset.pattern.permute.xlu0 0
        %1758 = vperm.xlu0 %1757, %v1696
        %v1759 = vpop.permute.xlu0 %1758
        %1762 = vset.pattern.permute.xlu0 0
        %1763 = vperm.xlu0 %1762, %v1697
        %v1764 = vpop.permute.xlu0 %1763
        %1767 = vset.pattern.permute.xlu0 0
        %1768 = vperm.xlu0 %1767, %v1698
        %v1769 = vpop.permute.xlu0 %1768
        %1772 = vset.pattern.permute.xlu0 0
        %1773 = vperm.xlu0 %1772, %v1699
        %v1774 = vpop.permute.xlu0 %1773
        %1777 = vset.pattern.permute.xlu0 0
        %1778 = vperm.xlu0 %1777, %v1700
        %v1779 = vpop.permute.xlu0 %1778
        %1782 = vset.pattern.permute.xlu0 0
        %1783 = vperm.xlu0 %1782, %v1701
        %v1784 = vpop.permute.xlu0 %1783
        %1787 = vset.pattern.permute.xlu0 0
        %1788 = vperm.xlu0 %1787, %v1702
        %v1789 = vpop.permute.xlu0 %1788
        %1792 = vset.pattern.permute.xlu0 0
        %1793 = vperm.xlu0 %1792, %v1703
        %v1794 = vpop.permute.xlu0 %1793
        %1797 = vset.pattern.permute.xlu0 0
        %1798 = vperm.xlu0 %1797, %v1704
        %v1799 = vpop.permute.xlu0 %1798
        %1802 = vset.pattern.permute.xlu0 0
        %1803 = vperm.xlu0 %1802, %v1705
        %v1804 = vpop.permute.xlu0 %1803
        %v1806 = vsub.f32 %v1546, %v1709
        %v1807 = vsub.f32 %v1547, %v1709
        %v1808 = vsub.f32 %v1548, %v1709
        %v1809 = vsub.f32 %v1549, %v1709
        %v1810 = vsub.f32 %v1550, %v1714
        %v1811 = vsub.f32 %v1551, %v1714
        %v1812 = vsub.f32 %v1552, %v1714
        %v1813 = vsub.f32 %v1553, %v1714
        %v1814 = vsub.f32 %v1554, %v1719
        %v1815 = vsub.f32 %v1555, %v1719
        %v1816 = vsub.f32 %v1556, %v1719
        %v1817 = vsub.f32 %v1557, %v1719
        %v1818 = vsub.f32 %v1558, %v1724
        %v1819 = vsub.f32 %v1559, %v1724
        %v1820 = vsub.f32 %v1560, %v1724
        %v1821 = vsub.f32 %v1561, %v1724
        %v1822 = vsub.f32 %v1562, %v1729
        %v1823 = vsub.f32 %v1563, %v1729
        %v1824 = vsub.f32 %v1564, %v1729
        %v1825 = vsub.f32 %v1565, %v1729
        %v1826 = vsub.f32 %v1566, %v1734
        %v1827 = vsub.f32 %v1567, %v1734
        %v1828 = vsub.f32 %v1568, %v1734
        %v1829 = vsub.f32 %v1569, %v1734
        %v1830 = vsub.f32 %v1570, %v1739
        %v1831 = vsub.f32 %v1571, %v1739
        %v1832 = vsub.f32 %v1572, %v1739
        %v1833 = vsub.f32 %v1573, %v1739
        %v1834 = vsub.f32 %v1574, %v1744
        %v1835 = vsub.f32 %v1575, %v1744
        %v1836 = vsub.f32 %v1576, %v1744
        %v1837 = vsub.f32 %v1577, %v1744
        %v1838 = vsub.f32 %v1578, %v1749
        %v1839 = vsub.f32 %v1579, %v1749
        %v1840 = vsub.f32 %v1580, %v1749
        %v1841 = vsub.f32 %v1581, %v1749
        %v1842 = vsub.f32 %v1582, %v1754
        %v1843 = vsub.f32 %v1583, %v1754
        %v1844 = vsub.f32 %v1584, %v1754
        %v1845 = vsub.f32 %v1585, %v1754
        %v1846 = vsub.f32 %v1586, %v1759
        %v1847 = vsub.f32 %v1587, %v1759
        %v1848 = vsub.f32 %v1588, %v1759
        %v1849 = vsub.f32 %v1589, %v1759
        %v1850 = vsub.f32 %v1590, %v1764
        %v1851 = vsub.f32 %v1591, %v1764
        %v1852 = vsub.f32 %v1592, %v1764
        %v1853 = vsub.f32 %v1593, %v1764
        %v1854 = vsub.f32 %v1594, %v1769
        %v1855 = vsub.f32 %v1595, %v1769
        %v1856 = vsub.f32 %v1596, %v1769
        %v1857 = vsub.f32 %v1597, %v1769
        %v1858 = vsub.f32 %v1598, %v1774
        %v1859 = vsub.f32 %v1599, %v1774
        %v1860 = vsub.f32 %v1600, %v1774
        %v1861 = vsub.f32 %v1601, %v1774
        %v1862 = vsub.f32 %v1602, %v1779
        %v1863 = vsub.f32 %v1603, %v1779
        %v1864 = vsub.f32 %v1604, %v1779
        %v1865 = vsub.f32 %v1605, %v1779
        %v1866 = vsub.f32 %v1606, %v1784
        %v1867 = vsub.f32 %v1607, %v1784
        %v1868 = vsub.f32 %v1608, %v1784
        %v1869 = vsub.f32 %v1609, %v1784
        %v1870 = vsub.f32 %v1610, %v1789
        %v1871 = vsub.f32 %v1611, %v1789
        %v1872 = vsub.f32 %v1612, %v1789
        %v1873 = vsub.f32 %v1613, %v1789
        %v1874 = vsub.f32 %v1614, %v1794
        %v1875 = vsub.f32 %v1615, %v1794
        %v1876 = vsub.f32 %v1616, %v1794
        %v1877 = vsub.f32 %v1617, %v1794
        %v1878 = vsub.f32 %v1618, %v1799
        %v1879 = vsub.f32 %v1619, %v1799
        %v1880 = vsub.f32 %v1620, %v1799
        %v1881 = vsub.f32 %v1621, %v1799
        %v1882 = vsub.f32 %v1622, %v1804
        %v1883 = vsub.f32 %v1623, %v1804
        %v1884 = vsub.f32 %v1624, %v1804
        %v1885 = vsub.f32 %v1625, %v1804
        %v1886 = vadd.f32 %v1546, %v1709
        %v1887 = vadd.f32 %v1547, %v1709
        %v1888 = vadd.f32 %v1548, %v1709
        %v1889 = vadd.f32 %v1549, %v1709
        %v1890 = vadd.f32 %v1550, %v1714
        %v1891 = vadd.f32 %v1551, %v1714
        %v1892 = vadd.f32 %v1552, %v1714
        %v1893 = vadd.f32 %v1553, %v1714
        %v1894 = vadd.f32 %v1554, %v1719
        %v1895 = vadd.f32 %v1555, %v1719
        %v1896 = vadd.f32 %v1556, %v1719
        %v1897 = vadd.f32 %v1557, %v1719
        %v1898 = vadd.f32 %v1558, %v1724
        %v1899 = vadd.f32 %v1559, %v1724
        %v1900 = vadd.f32 %v1560, %v1724
        %v1901 = vadd.f32 %v1561, %v1724
        %v1902 = vadd.f32 %v1562, %v1729
        %v1903 = vadd.f32 %v1563, %v1729
        %v1904 = vadd.f32 %v1564, %v1729
        %v1905 = vadd.f32 %v1565, %v1729
        %v1906 = vadd.f32 %v1566, %v1734
        %v1907 = vadd.f32 %v1567, %v1734
        %v1908 = vadd.f32 %v1568, %v1734
        %v1909 = vadd.f32 %v1569, %v1734
        %v1910 = vadd.f32 %v1570, %v1739
        %v1911 = vadd.f32 %v1571, %v1739
        %v1912 = vadd.f32 %v1572, %v1739
        %v1913 = vadd.f32 %v1573, %v1739
        %v1914 = vadd.f32 %v1574, %v1744
        %v1915 = vadd.f32 %v1575, %v1744
        %v1916 = vadd.f32 %v1576, %v1744
        %v1917 = vadd.f32 %v1577, %v1744
        %v1918 = vadd.f32 %v1578, %v1749
        %v1919 = vadd.f32 %v1579, %v1749
        %v1920 = vadd.f32 %v1580, %v1749
        %v1921 = vadd.f32 %v1581, %v1749
        %v1922 = vadd.f32 %v1582, %v1754
        %v1923 = vadd.f32 %v1583, %v1754
        %v1924 = vadd.f32 %v1584, %v1754
        %v1925 = vadd.f32 %v1585, %v1754
        %v1926 = vadd.f32 %v1586, %v1759
        %v1927 = vadd.f32 %v1587, %v1759
        %v1928 = vadd.f32 %v1588, %v1759
        %v1929 = vadd.f32 %v1589, %v1759
        %v1930 = vadd.f32 %v1590, %v1764
        %v1931 = vadd.f32 %v1591, %v1764
        %v1932 = vadd.f32 %v1592, %v1764
        %v1933 = vadd.f32 %v1593, %v1764
        %v1934 = vadd.f32 %v1594, %v1769
        %v1935 = vadd.f32 %v1595, %v1769
        %v1936 = vadd.f32 %v1596, %v1769
        %v1937 = vadd.f32 %v1597, %v1769
        %v1938 = vadd.f32 %v1598, %v1774
        %v1939 = vadd.f32 %v1599, %v1774
        %v1940 = vadd.f32 %v1600, %v1774
        %v1941 = vadd.f32 %v1601, %v1774
        %v1942 = vadd.f32 %v1602, %v1779
        %v1943 = vadd.f32 %v1603, %v1779
        %v1944 = vadd.f32 %v1604, %v1779
        %v1945 = vadd.f32 %v1605, %v1779
        %v1946 = vadd.f32 %v1606, %v1784
        %v1947 = vadd.f32 %v1607, %v1784
        %v1948 = vadd.f32 %v1608, %v1784
        %v1949 = vadd.f32 %v1609, %v1784
        %v1950 = vadd.f32 %v1610, %v1789
        %v1951 = vadd.f32 %v1611, %v1789
        %v1952 = vadd.f32 %v1612, %v1789
        %v1953 = vadd.f32 %v1613, %v1789
        %v1954 = vadd.f32 %v1614, %v1794
        %v1955 = vadd.f32 %v1615, %v1794
        %v1956 = vadd.f32 %v1616, %v1794
        %v1957 = vadd.f32 %v1617, %v1794
        %v1958 = vadd.f32 %v1618, %v1799
        %v1959 = vadd.f32 %v1619, %v1799
        %v1960 = vadd.f32 %v1620, %v1799
        %v1961 = vadd.f32 %v1621, %v1799
        %v1962 = vadd.f32 %v1622, %v1804
        %v1963 = vadd.f32 %v1623, %v1804
        %v1964 = vadd.f32 %v1624, %v1804
        %v1965 = vadd.f32 %v1625, %v1804
        %v1966 = vand.u32 2147483647, %v1806
        %v1967 = vand.u32 2147483647, %v1807
        %v1968 = vand.u32 2147483647, %v1808
        %v1969 = vand.u32 2147483647, %v1809
        %v1970 = vand.u32 2147483647, %v1810
        %v1971 = vand.u32 2147483647, %v1811
        %v1972 = vand.u32 2147483647, %v1812
        %v1973 = vand.u32 2147483647, %v1813
        %v1974 = vand.u32 2147483647, %v1814
        %v1975 = vand.u32 2147483647, %v1815
        %v1976 = vand.u32 2147483647, %v1816
        %v1977 = vand.u32 2147483647, %v1817
        %v1978 = vand.u32 2147483647, %v1818
        %v1979 = vand.u32 2147483647, %v1819
        %v1980 = vand.u32 2147483647, %v1820
        %v1981 = vand.u32 2147483647, %v1821
        %v1982 = vand.u32 2147483647, %v1822
        %v1983 = vand.u32 2147483647, %v1823
        %v1984 = vand.u32 2147483647, %v1824
        %v1985 = vand.u32 2147483647, %v1825
        %v1986 = vand.u32 2147483647, %v1826
        %v1987 = vand.u32 2147483647, %v1827
        %v1988 = vand.u32 2147483647, %v1828
        %v1989 = vand.u32 2147483647, %v1829
        %v1990 = vand.u32 2147483647, %v1830
        %v1991 = vand.u32 2147483647, %v1831
        %v1992 = vand.u32 2147483647, %v1832
        %v1993 = vand.u32 2147483647, %v1833
        %v1994 = vand.u32 2147483647, %v1834
        %v1995 = vand.u32 2147483647, %v1835
        %v1996 = vand.u32 2147483647, %v1836
        %v1997 = vand.u32 2147483647, %v1837
        %v1998 = vand.u32 2147483647, %v1838
        %v1999 = vand.u32 2147483647, %v1839
        %v2000 = vand.u32 2147483647, %v1840
        %v2001 = vand.u32 2147483647, %v1841
        %v2002 = vand.u32 2147483647, %v1842
        %v2003 = vand.u32 2147483647, %v1843
        %v2004 = vand.u32 2147483647, %v1844
        %v2005 = vand.u32 2147483647, %v1845
        %v2006 = vand.u32 2147483647, %v1846
        %v2007 = vand.u32 2147483647, %v1847
        %v2008 = vand.u32 2147483647, %v1848
        %v2009 = vand.u32 2147483647, %v1849
        %v2010 = vand.u32 2147483647, %v1850
        %v2011 = vand.u32 2147483647, %v1851
        %v2012 = vand.u32 2147483647, %v1852
        %v2013 = vand.u32 2147483647, %v1853
        %v2014 = vand.u32 2147483647, %v1854
        %v2015 = vand.u32 2147483647, %v1855
        %v2016 = vand.u32 2147483647, %v1856
        %v2017 = vand.u32 2147483647, %v1857
        %v2018 = vand.u32 2147483647, %v1858
        %v2019 = vand.u32 2147483647, %v1859
        %v2020 = vand.u32 2147483647, %v1860
        %v2021 = vand.u32 2147483647, %v1861
        %v2022 = vand.u32 2147483647, %v1862
        %v2023 = vand.u32 2147483647, %v1863
        %v2024 = vand.u32 2147483647, %v1864
        %v2025 = vand.u32 2147483647, %v1865
        %v2026 = vand.u32 2147483647, %v1866
        %v2027 = vand.u32 2147483647, %v1867
        %v2028 = vand.u32 2147483647, %v1868
        %v2029 = vand.u32 2147483647, %v1869
        %v2030 = vand.u32 2147483647, %v1870
        %v2031 = vand.u32 2147483647, %v1871
        %v2032 = vand.u32 2147483647, %v1872
        %v2033 = vand.u32 2147483647, %v1873
        %v2034 = vand.u32 2147483647, %v1874
        %v2035 = vand.u32 2147483647, %v1875
        %v2036 = vand.u32 2147483647, %v1876
        %v2037 = vand.u32 2147483647, %v1877
        %v2038 = vand.u32 2147483647, %v1878
        %v2039 = vand.u32 2147483647, %v1879
        %v2040 = vand.u32 2147483647, %v1880
        %v2041 = vand.u32 2147483647, %v1881
        %v2042 = vand.u32 2147483647, %v1882
        %v2043 = vand.u32 2147483647, %v1883
        %v2044 = vand.u32 2147483647, %v1884
        %v2045 = vand.u32 2147483647, %v1885
        %v2046 = vsub.f32 0.0, %v1966
        %v2047 = vsub.f32 0.0, %v1967
        %v2048 = vsub.f32 0.0, %v1968
        %v2049 = vsub.f32 0.0, %v1969
        %v2050 = vsub.f32 0.0, %v1970
        %v2051 = vsub.f32 0.0, %v1971
        %v2052 = vsub.f32 0.0, %v1972
        %v2053 = vsub.f32 0.0, %v1973
        %v2054 = vsub.f32 0.0, %v1974
        %v2055 = vsub.f32 0.0, %v1975
        %v2056 = vsub.f32 0.0, %v1976
        %v2057 = vsub.f32 0.0, %v1977
        %v2058 = vsub.f32 0.0, %v1978
        %v2059 = vsub.f32 0.0, %v1979
        %v2060 = vsub.f32 0.0, %v1980
        %v2061 = vsub.f32 0.0, %v1981
        %v2062 = vsub.f32 0.0, %v1982
        %v2063 = vsub.f32 0.0, %v1983
        %v2064 = vsub.f32 0.0, %v1984
        %v2065 = vsub.f32 0.0, %v1985
        %v2066 = vsub.f32 0.0, %v1986
        %v2067 = vsub.f32 0.0, %v1987
        %v2068 = vsub.f32 0.0, %v1988
        %v2069 = vsub.f32 0.0, %v1989
        %v2070 = vsub.f32 0.0, %v1990
        %v2071 = vsub.f32 0.0, %v1991
        %v2072 = vsub.f32 0.0, %v1992
        %v2073 = vsub.f32 0.0, %v1993
        %v2074 = vsub.f32 0.0, %v1994
        %v2075 = vsub.f32 0.0, %v1995
        %v2076 = vsub.f32 0.0, %v1996
        %v2077 = vsub.f32 0.0, %v1997
        %v2078 = vsub.f32 0.0, %v1998
        %v2079 = vsub.f32 0.0, %v1999
        %v2080 = vsub.f32 0.0, %v2000
        %v2081 = vsub.f32 0.0, %v2001
        %v2082 = vsub.f32 0.0, %v2002
        %v2083 = vsub.f32 0.0, %v2003
        %v2084 = vsub.f32 0.0, %v2004
        %v2085 = vsub.f32 0.0, %v2005
        %v2086 = vsub.f32 0.0, %v2006
        %v2087 = vsub.f32 0.0, %v2007
        %v2088 = vsub.f32 0.0, %v2008
        %v2089 = vsub.f32 0.0, %v2009
        %v2090 = vsub.f32 0.0, %v2010
        %v2091 = vsub.f32 0.0, %v2011
        %v2092 = vsub.f32 0.0, %v2012
        %v2093 = vsub.f32 0.0, %v2013
        %v2094 = vsub.f32 0.0, %v2014
        %v2095 = vsub.f32 0.0, %v2015
        %v2096 = vsub.f32 0.0, %v2016
        %v2097 = vsub.f32 0.0, %v2017
        %v2098 = vsub.f32 0.0, %v2018
        %v2099 = vsub.f32 0.0, %v2019
        %v2100 = vsub.f32 0.0, %v2020
        %v2101 = vsub.f32 0.0, %v2021
        %v2102 = vsub.f32 0.0, %v2022
        %v2103 = vsub.f32 0.0, %v2023
        %v2104 = vsub.f32 0.0, %v2024
        %v2105 = vsub.f32 0.0, %v2025
        %v2106 = vsub.f32 0.0, %v2026
        %v2107 = vsub.f32 0.0, %v2027
        %v2108 = vsub.f32 0.0, %v2028
        %v2109 = vsub.f32 0.0, %v2029
        %v2110 = vsub.f32 0.0, %v2030
        %v2111 = vsub.f32 0.0, %v2031
        %v2112 = vsub.f32 0.0, %v2032
        %v2113 = vsub.f32 0.0, %v2033
        %v2114 = vsub.f32 0.0, %v2034
        %v2115 = vsub.f32 0.0, %v2035
        %v2116 = vsub.f32 0.0, %v2036
        %v2117 = vsub.f32 0.0, %v2037
        %v2118 = vsub.f32 0.0, %v2038
        %v2119 = vsub.f32 0.0, %v2039
        %v2120 = vsub.f32 0.0, %v2040
        %v2121 = vsub.f32 0.0, %v2041
        %v2122 = vsub.f32 0.0, %v2042
        %v2123 = vsub.f32 0.0, %v2043
        %v2124 = vsub.f32 0.0, %v2044
        %v2125 = vsub.f32 0.0, %v2045
        %v2126 = vmul.f32 %v2046, 1.442695
        %v2127 = vpow.pop %v2126
        %v2128 = vmul.f32 %v2047, 1.442695
        %v2129 = vpow.pop %v2128
        %v2130 = vmul.f32 %v2048, 1.442695
        %v2131 = vpow.pop %v2130
        %v2132 = vmul.f32 %v2049, 1.442695
        %v2133 = vpow.pop %v2132
        %v2134 = vmul.f32 %v2050, 1.442695
        %v2135 = vpow.pop %v2134
        %v2136 = vmul.f32 %v2051, 1.442695
        %v2137 = vpow.pop %v2136
        %v2138 = vmul.f32 %v2052, 1.442695
        %v2139 = vpow.pop %v2138
        %v2140 = vmul.f32 %v2053, 1.442695
        %v2141 = vpow.pop %v2140
        %v2142 = vmul.f32 %v2054, 1.442695
        %v2143 = vpow.pop %v2142
        %v2144 = vmul.f32 %v2055, 1.442695
        %v2145 = vpow.pop %v2144
        %v2146 = vmul.f32 %v2056, 1.442695
        %v2147 = vpow.pop %v2146
        %v2148 = vmul.f32 %v2057, 1.442695
        %v2149 = vpow.pop %v2148
        %v2150 = vmul.f32 %v2058, 1.442695
        %v2151 = vpow.pop %v2150
        %v2152 = vmul.f32 %v2059, 1.442695
        %v2153 = vpow.pop %v2152
        %v2154 = vmul.f32 %v2060, 1.442695
        %v2155 = vpow.pop %v2154
        %v2156 = vmul.f32 %v2061, 1.442695
        %v2157 = vpow.pop %v2156
        %v2158 = vmul.f32 %v2062, 1.442695
        %v2159 = vpow.pop %v2158
        %v2160 = vmul.f32 %v2063, 1.442695
        %v2161 = vpow.pop %v2160
        %v2162 = vmul.f32 %v2064, 1.442695
        %v2163 = vpow.pop %v2162
        %v2164 = vmul.f32 %v2065, 1.442695
        %v2165 = vpow.pop %v2164
        %v2166 = vmul.f32 %v2066, 1.442695
        %v2167 = vpow.pop %v2166
        %v2168 = vmul.f32 %v2067, 1.442695
        %v2169 = vpow.pop %v2168
        %v2170 = vmul.f32 %v2068, 1.442695
        %v2171 = vpow.pop %v2170
        %v2172 = vmul.f32 %v2069, 1.442695
        %v2173 = vpow.pop %v2172
        %v2174 = vmul.f32 %v2070, 1.442695
        %v2175 = vpow.pop %v2174
        %v2176 = vmul.f32 %v2071, 1.442695
        %v2177 = vpow.pop %v2176
        %v2178 = vmul.f32 %v2072, 1.442695
        %v2179 = vpow.pop %v2178
        %v2180 = vmul.f32 %v2073, 1.442695
        %v2181 = vpow.pop %v2180
        %v2182 = vmul.f32 %v2074, 1.442695
        %v2183 = vpow.pop %v2182
        %v2184 = vmul.f32 %v2075, 1.442695
        %v2185 = vpow.pop %v2184
        %v2186 = vmul.f32 %v2076, 1.442695
        %v2187 = vpow.pop %v2186
        %v2188 = vmul.f32 %v2077, 1.442695
        %v2189 = vpow.pop %v2188
        %v2190 = vmul.f32 %v2078, 1.442695
        %v2191 = vpow.pop %v2190
        %v2192 = vmul.f32 %v2079, 1.442695
        %v2193 = vpow.pop %v2192
        %v2194 = vmul.f32 %v2080, 1.442695
        %v2195 = vpow.pop %v2194
        %v2196 = vmul.f32 %v2081, 1.442695
        %v2197 = vpow.pop %v2196
        %v2198 = vmul.f32 %v2082, 1.442695
        %v2199 = vpow.pop %v2198
        %v2200 = vmul.f32 %v2083, 1.442695
        %v2201 = vpow.pop %v2200
        %v2202 = vmul.f32 %v2084, 1.442695
        %v2203 = vpow.pop %v2202
        %v2204 = vmul.f32 %v2085, 1.442695
        %v2205 = vpow.pop %v2204
        %v2206 = vmul.f32 %v2086, 1.442695
        %v2207 = vpow.pop %v2206
        %v2208 = vmul.f32 %v2087, 1.442695
        %v2209 = vpow.pop %v2208
        %v2210 = vmul.f32 %v2088, 1.442695
        %v2211 = vpow.pop %v2210
        %v2212 = vmul.f32 %v2089, 1.442695
        %v2213 = vpow.pop %v2212
        %v2214 = vmul.f32 %v2090, 1.442695
        %v2215 = vpow.pop %v2214
        %v2216 = vmul.f32 %v2091, 1.442695
        %v2217 = vpow.pop %v2216
        %v2218 = vmul.f32 %v2092, 1.442695
        %v2219 = vpow.pop %v2218
        %v2220 = vmul.f32 %v2093, 1.442695
        %v2221 = vpow.pop %v2220
        %v2222 = vmul.f32 %v2094, 1.442695
        %v2223 = vpow.pop %v2222
        %v2224 = vmul.f32 %v2095, 1.442695
        %v2225 = vpow.pop %v2224
        %v2226 = vmul.f32 %v2096, 1.442695
        %v2227 = vpow.pop %v2226
        %v2228 = vmul.f32 %v2097, 1.442695
        %v2229 = vpow.pop %v2228
        %v2230 = vmul.f32 %v2098, 1.442695
        %v2231 = vpow.pop %v2230
        %v2232 = vmul.f32 %v2099, 1.442695
        %v2233 = vpow.pop %v2232
        %v2234 = vmul.f32 %v2100, 1.442695
        %v2235 = vpow.pop %v2234
        %v2236 = vmul.f32 %v2101, 1.442695
        %v2237 = vpow.pop %v2236
        %v2238 = vmul.f32 %v2102, 1.442695
        %v2239 = vpow.pop %v2238
        %v2240 = vmul.f32 %v2103, 1.442695
        %v2241 = vpow.pop %v2240
        %v2242 = vmul.f32 %v2104, 1.442695
        %v2243 = vpow.pop %v2242
        %v2244 = vmul.f32 %v2105, 1.442695
        %v2245 = vpow.pop %v2244
        %v2246 = vmul.f32 %v2106, 1.442695
        %v2247 = vpow.pop %v2246
        %v2248 = vmul.f32 %v2107, 1.442695
        %v2249 = vpow.pop %v2248
        %v2250 = vmul.f32 %v2108, 1.442695
        %v2251 = vpow.pop %v2250
        %v2252 = vmul.f32 %v2109, 1.442695
        %v2253 = vpow.pop %v2252
        %v2254 = vmul.f32 %v2110, 1.442695
        %v2255 = vpow.pop %v2254
        %v2256 = vmul.f32 %v2111, 1.442695
        %v2257 = vpow.pop %v2256
        %v2258 = vmul.f32 %v2112, 1.442695
        %v2259 = vpow.pop %v2258
        %v2260 = vmul.f32 %v2113, 1.442695
        %v2261 = vpow.pop %v2260
        %v2262 = vmul.f32 %v2114, 1.442695
        %v2263 = vpow.pop %v2262
        %v2264 = vmul.f32 %v2115, 1.442695
        %v2265 = vpow.pop %v2264
        %v2266 = vmul.f32 %v2116, 1.442695
        %v2267 = vpow.pop %v2266
        %v2268 = vmul.f32 %v2117, 1.442695
        %v2269 = vpow.pop %v2268
        %v2270 = vmul.f32 %v2118, 1.442695
        %v2271 = vpow.pop %v2270
        %v2272 = vmul.f32 %v2119, 1.442695
        %v2273 = vpow.pop %v2272
        %v2274 = vmul.f32 %v2120, 1.442695
        %v2275 = vpow.pop %v2274
        %v2276 = vmul.f32 %v2121, 1.442695
        %v2277 = vpow.pop %v2276
        %v2278 = vmul.f32 %v2122, 1.442695
        %v2279 = vpow.pop %v2278
        %v2280 = vmul.f32 %v2123, 1.442695
        %v2281 = vpow.pop %v2280
        %v2282 = vmul.f32 %v2124, 1.442695
        %v2283 = vpow.pop %v2282
        %v2284 = vmul.f32 %v2125, 1.442695
        %v2285 = vpow.pop %v2284
        %v2286 = vadd.f32 %v2127, 1.0
        %v2287 = vlog2.pop %v2286
        %v2288 = vmul.f32 %v2287, 0.6931472
        %v2289 = vmul.f32 -0.5, %v2127
        %v2290 = vadd.f32 %v2289, 1.0
        %v2291 = vmul.f32 %v2290, %v2127
        %v2292 = vand.u32 2147483647, %v2127
        %vm2293 = vcmp.lt.f32.partialorder %v2292, 0.0004427343
        %v2294 = vsel %vm2293, %v2291, %v2288
        %v2295 = vadd.f32 %v2129, 1.0
        %v2296 = vlog2.pop %v2295
        %v2297 = vmul.f32 %v2296, 0.6931472
        %v2298 = vmul.f32 -0.5, %v2129
        %v2299 = vadd.f32 %v2298, 1.0
        %v2300 = vmul.f32 %v2299, %v2129
        %v2301 = vand.u32 2147483647, %v2129
        %vm2302 = vcmp.lt.f32.partialorder %v2301, 0.0004427343
        %v2303 = vsel %vm2302, %v2300, %v2297
        %v2304 = vadd.f32 %v2131, 1.0
        %v2305 = vlog2.pop %v2304
        %v2306 = vmul.f32 %v2305, 0.6931472
        %v2307 = vmul.f32 -0.5, %v2131
        %v2308 = vadd.f32 %v2307, 1.0
        %v2309 = vmul.f32 %v2308, %v2131
        %v2310 = vand.u32 2147483647, %v2131
        %vm2311 = vcmp.lt.f32.partialorder %v2310, 0.0004427343
        %v2312 = vsel %vm2311, %v2309, %v2306
        %v2313 = vadd.f32 %v2133, 1.0
        %v2314 = vlog2.pop %v2313
        %v2315 = vmul.f32 %v2314, 0.6931472
        %v2316 = vmul.f32 -0.5, %v2133
        %v2317 = vadd.f32 %v2316, 1.0
        %v2318 = vmul.f32 %v2317, %v2133
        %v2319 = vand.u32 2147483647, %v2133
        %vm2320 = vcmp.lt.f32.partialorder %v2319, 0.0004427343
        %v2321 = vsel %vm2320, %v2318, %v2315
        %v2322 = vadd.f32 %v2135, 1.0
        %v2323 = vlog2.pop %v2322
        %v2324 = vmul.f32 %v2323, 0.6931472
        %v2325 = vmul.f32 -0.5, %v2135
        %v2326 = vadd.f32 %v2325, 1.0
        %v2327 = vmul.f32 %v2326, %v2135
        %v2328 = vand.u32 2147483647, %v2135
        %vm2329 = vcmp.lt.f32.partialorder %v2328, 0.0004427343
        %v2330 = vsel %vm2329, %v2327, %v2324
        %v2331 = vadd.f32 %v2137, 1.0
        %v2332 = vlog2.pop %v2331
        %v2333 = vmul.f32 %v2332, 0.6931472
        %v2334 = vmul.f32 -0.5, %v2137
        %v2335 = vadd.f32 %v2334, 1.0
        %v2336 = vmul.f32 %v2335, %v2137
        %v2337 = vand.u32 2147483647, %v2137
        %vm2338 = vcmp.lt.f32.partialorder %v2337, 0.0004427343
        %v2339 = vsel %vm2338, %v2336, %v2333
        %v2340 = vadd.f32 %v2139, 1.0
        %v2341 = vlog2.pop %v2340
        %v2342 = vmul.f32 %v2341, 0.6931472
        %v2343 = vmul.f32 -0.5, %v2139
        %v2344 = vadd.f32 %v2343, 1.0
        %v2345 = vmul.f32 %v2344, %v2139
        %v2346 = vand.u32 2147483647, %v2139
        %vm2347 = vcmp.lt.f32.partialorder %v2346, 0.0004427343
        %v2348 = vsel %vm2347, %v2345, %v2342
        %v2349 = vadd.f32 %v2141, 1.0
        %v2350 = vlog2.pop %v2349
        %v2351 = vmul.f32 %v2350, 0.6931472
        %v2352 = vmul.f32 -0.5, %v2141
        %v2353 = vadd.f32 %v2352, 1.0
        %v2354 = vmul.f32 %v2353, %v2141
        %v2355 = vand.u32 2147483647, %v2141
        %vm2356 = vcmp.lt.f32.partialorder %v2355, 0.0004427343
        %v2357 = vsel %vm2356, %v2354, %v2351
        %v2358 = vadd.f32 %v2143, 1.0
        %v2359 = vlog2.pop %v2358
        %v2360 = vmul.f32 %v2359, 0.6931472
        %v2361 = vmul.f32 -0.5, %v2143
        %v2362 = vadd.f32 %v2361, 1.0
        %v2363 = vmul.f32 %v2362, %v2143
        %v2364 = vand.u32 2147483647, %v2143
        %vm2365 = vcmp.lt.f32.partialorder %v2364, 0.0004427343
        %v2366 = vsel %vm2365, %v2363, %v2360
        %v2367 = vadd.f32 %v2145, 1.0
        %v2368 = vlog2.pop %v2367
        %v2369 = vmul.f32 %v2368, 0.6931472
        %v2370 = vmul.f32 -0.5, %v2145
        %v2371 = vadd.f32 %v2370, 1.0
        %v2372 = vmul.f32 %v2371, %v2145
        %v2373 = vand.u32 2147483647, %v2145
        %vm2374 = vcmp.lt.f32.partialorder %v2373, 0.0004427343
        %v2375 = vsel %vm2374, %v2372, %v2369
        %v2376 = vadd.f32 %v2147, 1.0
        %v2377 = vlog2.pop %v2376
        %v2378 = vmul.f32 %v2377, 0.6931472
        %v2379 = vmul.f32 -0.5, %v2147
        %v2380 = vadd.f32 %v2379, 1.0
        %v2381 = vmul.f32 %v2380, %v2147
        %v2382 = vand.u32 2147483647, %v2147
        %vm2383 = vcmp.lt.f32.partialorder %v2382, 0.0004427343
        %v2384 = vsel %vm2383, %v2381, %v2378
        %v2385 = vadd.f32 %v2149, 1.0
        %v2386 = vlog2.pop %v2385
        %v2387 = vmul.f32 %v2386, 0.6931472
        %v2388 = vmul.f32 -0.5, %v2149
        %v2389 = vadd.f32 %v2388, 1.0
        %v2390 = vmul.f32 %v2389, %v2149
        %v2391 = vand.u32 2147483647, %v2149
        %vm2392 = vcmp.lt.f32.partialorder %v2391, 0.0004427343
        %v2393 = vsel %vm2392, %v2390, %v2387
        %v2394 = vadd.f32 %v2151, 1.0
        %v2395 = vlog2.pop %v2394
        %v2396 = vmul.f32 %v2395, 0.6931472
        %v2397 = vmul.f32 -0.5, %v2151
        %v2398 = vadd.f32 %v2397, 1.0
        %v2399 = vmul.f32 %v2398, %v2151
        %v2400 = vand.u32 2147483647, %v2151
        %vm2401 = vcmp.lt.f32.partialorder %v2400, 0.0004427343
        %v2402 = vsel %vm2401, %v2399, %v2396
        %v2403 = vadd.f32 %v2153, 1.0
        %v2404 = vlog2.pop %v2403
        %v2405 = vmul.f32 %v2404, 0.6931472
        %v2406 = vmul.f32 -0.5, %v2153
        %v2407 = vadd.f32 %v2406, 1.0
        %v2408 = vmul.f32 %v2407, %v2153
        %v2409 = vand.u32 2147483647, %v2153
        %vm2410 = vcmp.lt.f32.partialorder %v2409, 0.0004427343
        %v2411 = vsel %vm2410, %v2408, %v2405
        %v2412 = vadd.f32 %v2155, 1.0
        %v2413 = vlog2.pop %v2412
        %v2414 = vmul.f32 %v2413, 0.6931472
        %v2415 = vmul.f32 -0.5, %v2155
        %v2416 = vadd.f32 %v2415, 1.0
        %v2417 = vmul.f32 %v2416, %v2155
        %v2418 = vand.u32 2147483647, %v2155
        %vm2419 = vcmp.lt.f32.partialorder %v2418, 0.0004427343
        %v2420 = vsel %vm2419, %v2417, %v2414
        %v2421 = vadd.f32 %v2157, 1.0
        %v2422 = vlog2.pop %v2421
        %v2423 = vmul.f32 %v2422, 0.6931472
        %v2424 = vmul.f32 -0.5, %v2157
        %v2425 = vadd.f32 %v2424, 1.0
        %v2426 = vmul.f32 %v2425, %v2157
        %v2427 = vand.u32 2147483647, %v2157
        %vm2428 = vcmp.lt.f32.partialorder %v2427, 0.0004427343
        %v2429 = vsel %vm2428, %v2426, %v2423
        %v2430 = vadd.f32 %v2159, 1.0
        %v2431 = vlog2.pop %v2430
        %v2432 = vmul.f32 %v2431, 0.6931472
        %v2433 = vmul.f32 -0.5, %v2159
        %v2434 = vadd.f32 %v2433, 1.0
        %v2435 = vmul.f32 %v2434, %v2159
        %v2436 = vand.u32 2147483647, %v2159
        %vm2437 = vcmp.lt.f32.partialorder %v2436, 0.0004427343
        %v2438 = vsel %vm2437, %v2435, %v2432
        %v2439 = vadd.f32 %v2161, 1.0
        %v2440 = vlog2.pop %v2439
        %v2441 = vmul.f32 %v2440, 0.6931472
        %v2442 = vmul.f32 -0.5, %v2161
        %v2443 = vadd.f32 %v2442, 1.0
        %v2444 = vmul.f32 %v2443, %v2161
        %v2445 = vand.u32 2147483647, %v2161
        %vm2446 = vcmp.lt.f32.partialorder %v2445, 0.0004427343
        %v2447 = vsel %vm2446, %v2444, %v2441
        %v2448 = vadd.f32 %v2163, 1.0
        %v2449 = vlog2.pop %v2448
        %v2450 = vmul.f32 %v2449, 0.6931472
        %v2451 = vmul.f32 -0.5, %v2163
        %v2452 = vadd.f32 %v2451, 1.0
        %v2453 = vmul.f32 %v2452, %v2163
        %v2454 = vand.u32 2147483647, %v2163
        %vm2455 = vcmp.lt.f32.partialorder %v2454, 0.0004427343
        %v2456 = vsel %vm2455, %v2453, %v2450
        %v2457 = vadd.f32 %v2165, 1.0
        %v2458 = vlog2.pop %v2457
        %v2459 = vmul.f32 %v2458, 0.6931472
        %v2460 = vmul.f32 -0.5, %v2165
        %v2461 = vadd.f32 %v2460, 1.0
        %v2462 = vmul.f32 %v2461, %v2165
        %v2463 = vand.u32 2147483647, %v2165
        %vm2464 = vcmp.lt.f32.partialorder %v2463, 0.0004427343
        %v2465 = vsel %vm2464, %v2462, %v2459
        %v2466 = vadd.f32 %v2167, 1.0
        %v2467 = vlog2.pop %v2466
        %v2468 = vmul.f32 %v2467, 0.6931472
        %v2469 = vmul.f32 -0.5, %v2167
        %v2470 = vadd.f32 %v2469, 1.0
        %v2471 = vmul.f32 %v2470, %v2167
        %v2472 = vand.u32 2147483647, %v2167
        %vm2473 = vcmp.lt.f32.partialorder %v2472, 0.0004427343
        %v2474 = vsel %vm2473, %v2471, %v2468
        %v2475 = vadd.f32 %v2169, 1.0
        %v2476 = vlog2.pop %v2475
        %v2477 = vmul.f32 %v2476, 0.6931472
        %v2478 = vmul.f32 -0.5, %v2169
        %v2479 = vadd.f32 %v2478, 1.0
        %v2480 = vmul.f32 %v2479, %v2169
        %v2481 = vand.u32 2147483647, %v2169
        %vm2482 = vcmp.lt.f32.partialorder %v2481, 0.0004427343
        %v2483 = vsel %vm2482, %v2480, %v2477
        %v2484 = vadd.f32 %v2171, 1.0
        %v2485 = vlog2.pop %v2484
        %v2486 = vmul.f32 %v2485, 0.6931472
        %v2487 = vmul.f32 -0.5, %v2171
        %v2488 = vadd.f32 %v2487, 1.0
        %v2489 = vmul.f32 %v2488, %v2171
        %v2490 = vand.u32 2147483647, %v2171
        %vm2491 = vcmp.lt.f32.partialorder %v2490, 0.0004427343
        %v2492 = vsel %vm2491, %v2489, %v2486
        %v2493 = vadd.f32 %v2173, 1.0
        %v2494 = vlog2.pop %v2493
        %v2495 = vmul.f32 %v2494, 0.6931472
        %v2496 = vmul.f32 -0.5, %v2173
        %v2497 = vadd.f32 %v2496, 1.0
        %v2498 = vmul.f32 %v2497, %v2173
        %v2499 = vand.u32 2147483647, %v2173
        %vm2500 = vcmp.lt.f32.partialorder %v2499, 0.0004427343
        %v2501 = vsel %vm2500, %v2498, %v2495
        %v2502 = vadd.f32 %v2175, 1.0
        %v2503 = vlog2.pop %v2502
        %v2504 = vmul.f32 %v2503, 0.6931472
        %v2505 = vmul.f32 -0.5, %v2175
        %v2506 = vadd.f32 %v2505, 1.0
        %v2507 = vmul.f32 %v2506, %v2175
        %v2508 = vand.u32 2147483647, %v2175
        %vm2509 = vcmp.lt.f32.partialorder %v2508, 0.0004427343
        %v2510 = vsel %vm2509, %v2507, %v2504
        %v2511 = vadd.f32 %v2177, 1.0
        %v2512 = vlog2.pop %v2511
        %v2513 = vmul.f32 %v2512, 0.6931472
        %v2514 = vmul.f32 -0.5, %v2177
        %v2515 = vadd.f32 %v2514, 1.0
        %v2516 = vmul.f32 %v2515, %v2177
        %v2517 = vand.u32 2147483647, %v2177
        %vm2518 = vcmp.lt.f32.partialorder %v2517, 0.0004427343
        %v2519 = vsel %vm2518, %v2516, %v2513
        %v2520 = vadd.f32 %v2179, 1.0
        %v2521 = vlog2.pop %v2520
        %v2522 = vmul.f32 %v2521, 0.6931472
        %v2523 = vmul.f32 -0.5, %v2179
        %v2524 = vadd.f32 %v2523, 1.0
        %v2525 = vmul.f32 %v2524, %v2179
        %v2526 = vand.u32 2147483647, %v2179
        %vm2527 = vcmp.lt.f32.partialorder %v2526, 0.0004427343
        %v2528 = vsel %vm2527, %v2525, %v2522
        %v2529 = vadd.f32 %v2181, 1.0
        %v2530 = vlog2.pop %v2529
        %v2531 = vmul.f32 %v2530, 0.6931472
        %v2532 = vmul.f32 -0.5, %v2181
        %v2533 = vadd.f32 %v2532, 1.0
        %v2534 = vmul.f32 %v2533, %v2181
        %v2535 = vand.u32 2147483647, %v2181
        %vm2536 = vcmp.lt.f32.partialorder %v2535, 0.0004427343
        %v2537 = vsel %vm2536, %v2534, %v2531
        %v2538 = vadd.f32 %v2183, 1.0
        %v2539 = vlog2.pop %v2538
        %v2540 = vmul.f32 %v2539, 0.6931472
        %v2541 = vmul.f32 -0.5, %v2183
        %v2542 = vadd.f32 %v2541, 1.0
        %v2543 = vmul.f32 %v2542, %v2183
        %v2544 = vand.u32 2147483647, %v2183
        %vm2545 = vcmp.lt.f32.partialorder %v2544, 0.0004427343
        %v2546 = vsel %vm2545, %v2543, %v2540
        %v2547 = vadd.f32 %v2185, 1.0
        %v2548 = vlog2.pop %v2547
        %v2549 = vmul.f32 %v2548, 0.6931472
        %v2550 = vmul.f32 -0.5, %v2185
        %v2551 = vadd.f32 %v2550, 1.0
        %v2552 = vmul.f32 %v2551, %v2185
        %v2553 = vand.u32 2147483647, %v2185
        %vm2554 = vcmp.lt.f32.partialorder %v2553, 0.0004427343
        %v2555 = vsel %vm2554, %v2552, %v2549
        %v2556 = vadd.f32 %v2187, 1.0
        %v2557 = vlog2.pop %v2556
        %v2558 = vmul.f32 %v2557, 0.6931472
        %v2559 = vmul.f32 -0.5, %v2187
        %v2560 = vadd.f32 %v2559, 1.0
        %v2561 = vmul.f32 %v2560, %v2187
        %v2562 = vand.u32 2147483647, %v2187
        %vm2563 = vcmp.lt.f32.partialorder %v2562, 0.0004427343
        %v2564 = vsel %vm2563, %v2561, %v2558
        %v2565 = vadd.f32 %v2189, 1.0
        %v2566 = vlog2.pop %v2565
        %v2567 = vmul.f32 %v2566, 0.6931472
        %v2568 = vmul.f32 -0.5, %v2189
        %v2569 = vadd.f32 %v2568, 1.0
        %v2570 = vmul.f32 %v2569, %v2189
        %v2571 = vand.u32 2147483647, %v2189
        %vm2572 = vcmp.lt.f32.partialorder %v2571, 0.0004427343
        %v2573 = vsel %vm2572, %v2570, %v2567
        %v2574 = vadd.f32 %v2191, 1.0
        %v2575 = vlog2.pop %v2574
        %v2576 = vmul.f32 %v2575, 0.6931472
        %v2577 = vmul.f32 -0.5, %v2191
        %v2578 = vadd.f32 %v2577, 1.0
        %v2579 = vmul.f32 %v2578, %v2191
        %v2580 = vand.u32 2147483647, %v2191
        %vm2581 = vcmp.lt.f32.partialorder %v2580, 0.0004427343
        %v2582 = vsel %vm2581, %v2579, %v2576
        %v2583 = vadd.f32 %v2193, 1.0
        %v2584 = vlog2.pop %v2583
        %v2585 = vmul.f32 %v2584, 0.6931472
        %v2586 = vmul.f32 -0.5, %v2193
        %v2587 = vadd.f32 %v2586, 1.0
        %v2588 = vmul.f32 %v2587, %v2193
        %v2589 = vand.u32 2147483647, %v2193
        %vm2590 = vcmp.lt.f32.partialorder %v2589, 0.0004427343
        %v2591 = vsel %vm2590, %v2588, %v2585
        %v2592 = vadd.f32 %v2195, 1.0
        %v2593 = vlog2.pop %v2592
        %v2594 = vmul.f32 %v2593, 0.6931472
        %v2595 = vmul.f32 -0.5, %v2195
        %v2596 = vadd.f32 %v2595, 1.0
        %v2597 = vmul.f32 %v2596, %v2195
        %v2598 = vand.u32 2147483647, %v2195
        %vm2599 = vcmp.lt.f32.partialorder %v2598, 0.0004427343
        %v2600 = vsel %vm2599, %v2597, %v2594
        %v2601 = vadd.f32 %v2197, 1.0
        %v2602 = vlog2.pop %v2601
        %v2603 = vmul.f32 %v2602, 0.6931472
        %v2604 = vmul.f32 -0.5, %v2197
        %v2605 = vadd.f32 %v2604, 1.0
        %v2606 = vmul.f32 %v2605, %v2197
        %v2607 = vand.u32 2147483647, %v2197
        %vm2608 = vcmp.lt.f32.partialorder %v2607, 0.0004427343
        %v2609 = vsel %vm2608, %v2606, %v2603
        %v2610 = vadd.f32 %v2199, 1.0
        %v2611 = vlog2.pop %v2610
        %v2612 = vmul.f32 %v2611, 0.6931472
        %v2613 = vmul.f32 -0.5, %v2199
        %v2614 = vadd.f32 %v2613, 1.0
        %v2615 = vmul.f32 %v2614, %v2199
        %v2616 = vand.u32 2147483647, %v2199
        %vm2617 = vcmp.lt.f32.partialorder %v2616, 0.0004427343
        %v2618 = vsel %vm2617, %v2615, %v2612
        %v2619 = vadd.f32 %v2201, 1.0
        %v2620 = vlog2.pop %v2619
        %v2621 = vmul.f32 %v2620, 0.6931472
        %v2622 = vmul.f32 -0.5, %v2201
        %v2623 = vadd.f32 %v2622, 1.0
        %v2624 = vmul.f32 %v2623, %v2201
        %v2625 = vand.u32 2147483647, %v2201
        %vm2626 = vcmp.lt.f32.partialorder %v2625, 0.0004427343
        %v2627 = vsel %vm2626, %v2624, %v2621
        %v2628 = vadd.f32 %v2203, 1.0
        %v2629 = vlog2.pop %v2628
        %v2630 = vmul.f32 %v2629, 0.6931472
        %v2631 = vmul.f32 -0.5, %v2203
        %v2632 = vadd.f32 %v2631, 1.0
        %v2633 = vmul.f32 %v2632, %v2203
        %v2634 = vand.u32 2147483647, %v2203
        %vm2635 = vcmp.lt.f32.partialorder %v2634, 0.0004427343
        %v2636 = vsel %vm2635, %v2633, %v2630
        %v2637 = vadd.f32 %v2205, 1.0
        %v2638 = vlog2.pop %v2637
        %v2639 = vmul.f32 %v2638, 0.6931472
        %v2640 = vmul.f32 -0.5, %v2205
        %v2641 = vadd.f32 %v2640, 1.0
        %v2642 = vmul.f32 %v2641, %v2205
        %v2643 = vand.u32 2147483647, %v2205
        %vm2644 = vcmp.lt.f32.partialorder %v2643, 0.0004427343
        %v2645 = vsel %vm2644, %v2642, %v2639
        %v2646 = vadd.f32 %v2207, 1.0
        %v2647 = vlog2.pop %v2646
        %v2648 = vmul.f32 %v2647, 0.6931472
        %v2649 = vmul.f32 -0.5, %v2207
        %v2650 = vadd.f32 %v2649, 1.0
        %v2651 = vmul.f32 %v2650, %v2207
        %v2652 = vand.u32 2147483647, %v2207
        %vm2653 = vcmp.lt.f32.partialorder %v2652, 0.0004427343
        %v2654 = vsel %vm2653, %v2651, %v2648
        %v2655 = vadd.f32 %v2209, 1.0
        %v2656 = vlog2.pop %v2655
        %v2657 = vmul.f32 %v2656, 0.6931472
        %v2658 = vmul.f32 -0.5, %v2209
        %v2659 = vadd.f32 %v2658, 1.0
        %v2660 = vmul.f32 %v2659, %v2209
        %v2661 = vand.u32 2147483647, %v2209
        %vm2662 = vcmp.lt.f32.partialorder %v2661, 0.0004427343
        %v2663 = vsel %vm2662, %v2660, %v2657
        %v2664 = vadd.f32 %v2211, 1.0
        %v2665 = vlog2.pop %v2664
        %v2666 = vmul.f32 %v2665, 0.6931472
        %v2667 = vmul.f32 -0.5, %v2211
        %v2668 = vadd.f32 %v2667, 1.0
        %v2669 = vmul.f32 %v2668, %v2211
        %v2670 = vand.u32 2147483647, %v2211
        %vm2671 = vcmp.lt.f32.partialorder %v2670, 0.0004427343
        %v2672 = vsel %vm2671, %v2669, %v2666
        %v2673 = vadd.f32 %v2213, 1.0
        %v2674 = vlog2.pop %v2673
        %v2675 = vmul.f32 %v2674, 0.6931472
        %v2676 = vmul.f32 -0.5, %v2213
        %v2677 = vadd.f32 %v2676, 1.0
        %v2678 = vmul.f32 %v2677, %v2213
        %v2679 = vand.u32 2147483647, %v2213
        %vm2680 = vcmp.lt.f32.partialorder %v2679, 0.0004427343
        %v2681 = vsel %vm2680, %v2678, %v2675
        %v2682 = vadd.f32 %v2215, 1.0
        %v2683 = vlog2.pop %v2682
        %v2684 = vmul.f32 %v2683, 0.6931472
        %v2685 = vmul.f32 -0.5, %v2215
        %v2686 = vadd.f32 %v2685, 1.0
        %v2687 = vmul.f32 %v2686, %v2215
        %v2688 = vand.u32 2147483647, %v2215
        %vm2689 = vcmp.lt.f32.partialorder %v2688, 0.0004427343
        %v2690 = vsel %vm2689, %v2687, %v2684
        %v2691 = vadd.f32 %v2217, 1.0
        %v2692 = vlog2.pop %v2691
        %v2693 = vmul.f32 %v2692, 0.6931472
        %v2694 = vmul.f32 -0.5, %v2217
        %v2695 = vadd.f32 %v2694, 1.0
        %v2696 = vmul.f32 %v2695, %v2217
        %v2697 = vand.u32 2147483647, %v2217
        %vm2698 = vcmp.lt.f32.partialorder %v2697, 0.0004427343
        %v2699 = vsel %vm2698, %v2696, %v2693
        %v2700 = vadd.f32 %v2219, 1.0
        %v2701 = vlog2.pop %v2700
        %v2702 = vmul.f32 %v2701, 0.6931472
        %v2703 = vmul.f32 -0.5, %v2219
        %v2704 = vadd.f32 %v2703, 1.0
        %v2705 = vmul.f32 %v2704, %v2219
        %v2706 = vand.u32 2147483647, %v2219
        %vm2707 = vcmp.lt.f32.partialorder %v2706, 0.0004427343
        %v2708 = vsel %vm2707, %v2705, %v2702
        %v2709 = vadd.f32 %v2221, 1.0
        %v2710 = vlog2.pop %v2709
        %v2711 = vmul.f32 %v2710, 0.6931472
        %v2712 = vmul.f32 -0.5, %v2221
        %v2713 = vadd.f32 %v2712, 1.0
        %v2714 = vmul.f32 %v2713, %v2221
        %v2715 = vand.u32 2147483647, %v2221
        %vm2716 = vcmp.lt.f32.partialorder %v2715, 0.0004427343
        %v2717 = vsel %vm2716, %v2714, %v2711
        %v2718 = vadd.f32 %v2223, 1.0
        %v2719 = vlog2.pop %v2718
        %v2720 = vmul.f32 %v2719, 0.6931472
        %v2721 = vmul.f32 -0.5, %v2223
        %v2722 = vadd.f32 %v2721, 1.0
        %v2723 = vmul.f32 %v2722, %v2223
        %v2724 = vand.u32 2147483647, %v2223
        %vm2725 = vcmp.lt.f32.partialorder %v2724, 0.0004427343
        %v2726 = vsel %vm2725, %v2723, %v2720
        %v2727 = vadd.f32 %v2225, 1.0
        %v2728 = vlog2.pop %v2727
        %v2729 = vmul.f32 %v2728, 0.6931472
        %v2730 = vmul.f32 -0.5, %v2225
        %v2731 = vadd.f32 %v2730, 1.0
        %v2732 = vmul.f32 %v2731, %v2225
        %v2733 = vand.u32 2147483647, %v2225
        %vm2734 = vcmp.lt.f32.partialorder %v2733, 0.0004427343
        %v2735 = vsel %vm2734, %v2732, %v2729
        %v2736 = vadd.f32 %v2227, 1.0
        %v2737 = vlog2.pop %v2736
        %v2738 = vmul.f32 %v2737, 0.6931472
        %v2739 = vmul.f32 -0.5, %v2227
        %v2740 = vadd.f32 %v2739, 1.0
        %v2741 = vmul.f32 %v2740, %v2227
        %v2742 = vand.u32 2147483647, %v2227
        %vm2743 = vcmp.lt.f32.partialorder %v2742, 0.0004427343
        %v2744 = vsel %vm2743, %v2741, %v2738
        %v2745 = vadd.f32 %v2229, 1.0
        %v2746 = vlog2.pop %v2745
        %v2747 = vmul.f32 %v2746, 0.6931472
        %v2748 = vmul.f32 -0.5, %v2229
        %v2749 = vadd.f32 %v2748, 1.0
        %v2750 = vmul.f32 %v2749, %v2229
        %v2751 = vand.u32 2147483647, %v2229
        %vm2752 = vcmp.lt.f32.partialorder %v2751, 0.0004427343
        %v2753 = vsel %vm2752, %v2750, %v2747
        %v2754 = vadd.f32 %v2231, 1.0
        %v2755 = vlog2.pop %v2754
        %v2756 = vmul.f32 %v2755, 0.6931472
        %v2757 = vmul.f32 -0.5, %v2231
        %v2758 = vadd.f32 %v2757, 1.0
        %v2759 = vmul.f32 %v2758, %v2231
        %v2760 = vand.u32 2147483647, %v2231
        %vm2761 = vcmp.lt.f32.partialorder %v2760, 0.0004427343
        %v2762 = vsel %vm2761, %v2759, %v2756
        %v2763 = vadd.f32 %v2233, 1.0
        %v2764 = vlog2.pop %v2763
        %v2765 = vmul.f32 %v2764, 0.6931472
        %v2766 = vmul.f32 -0.5, %v2233
        %v2767 = vadd.f32 %v2766, 1.0
        %v2768 = vmul.f32 %v2767, %v2233
        %v2769 = vand.u32 2147483647, %v2233
        %vm2770 = vcmp.lt.f32.partialorder %v2769, 0.0004427343
        %v2771 = vsel %vm2770, %v2768, %v2765
        %v2772 = vadd.f32 %v2235, 1.0
        %v2773 = vlog2.pop %v2772
        %v2774 = vmul.f32 %v2773, 0.6931472
        %v2775 = vmul.f32 -0.5, %v2235
        %v2776 = vadd.f32 %v2775, 1.0
        %v2777 = vmul.f32 %v2776, %v2235
        %v2778 = vand.u32 2147483647, %v2235
        %vm2779 = vcmp.lt.f32.partialorder %v2778, 0.0004427343
        %v2780 = vsel %vm2779, %v2777, %v2774
        %v2781 = vadd.f32 %v2237, 1.0
        %v2782 = vlog2.pop %v2781
        %v2783 = vmul.f32 %v2782, 0.6931472
        %v2784 = vmul.f32 -0.5, %v2237
        %v2785 = vadd.f32 %v2784, 1.0
        %v2786 = vmul.f32 %v2785, %v2237
        %v2787 = vand.u32 2147483647, %v2237
        %vm2788 = vcmp.lt.f32.partialorder %v2787, 0.0004427343
        %v2789 = vsel %vm2788, %v2786, %v2783
        %v2790 = vadd.f32 %v2239, 1.0
        %v2791 = vlog2.pop %v2790
        %v2792 = vmul.f32 %v2791, 0.6931472
        %v2793 = vmul.f32 -0.5, %v2239
        %v2794 = vadd.f32 %v2793, 1.0
        %v2795 = vmul.f32 %v2794, %v2239
        %v2796 = vand.u32 2147483647, %v2239
        %vm2797 = vcmp.lt.f32.partialorder %v2796, 0.0004427343
        %v2798 = vsel %vm2797, %v2795, %v2792
        %v2799 = vadd.f32 %v2241, 1.0
        %v2800 = vlog2.pop %v2799
        %v2801 = vmul.f32 %v2800, 0.6931472
        %v2802 = vmul.f32 -0.5, %v2241
        %v2803 = vadd.f32 %v2802, 1.0
        %v2804 = vmul.f32 %v2803, %v2241
        %v2805 = vand.u32 2147483647, %v2241
        %vm2806 = vcmp.lt.f32.partialorder %v2805, 0.0004427343
        %v2807 = vsel %vm2806, %v2804, %v2801
        %v2808 = vadd.f32 %v2243, 1.0
        %v2809 = vlog2.pop %v2808
        %v2810 = vmul.f32 %v2809, 0.6931472
        %v2811 = vmul.f32 -0.5, %v2243
        %v2812 = vadd.f32 %v2811, 1.0
        %v2813 = vmul.f32 %v2812, %v2243
        %v2814 = vand.u32 2147483647, %v2243
        %vm2815 = vcmp.lt.f32.partialorder %v2814, 0.0004427343
        %v2816 = vsel %vm2815, %v2813, %v2810
        %v2817 = vadd.f32 %v2245, 1.0
        %v2818 = vlog2.pop %v2817
        %v2819 = vmul.f32 %v2818, 0.6931472
        %v2820 = vmul.f32 -0.5, %v2245
        %v2821 = vadd.f32 %v2820, 1.0
        %v2822 = vmul.f32 %v2821, %v2245
        %v2823 = vand.u32 2147483647, %v2245
        %vm2824 = vcmp.lt.f32.partialorder %v2823, 0.0004427343
        %v2825 = vsel %vm2824, %v2822, %v2819
        %v2826 = vadd.f32 %v2247, 1.0
        %v2827 = vlog2.pop %v2826
        %v2828 = vmul.f32 %v2827, 0.6931472
        %v2829 = vmul.f32 -0.5, %v2247
        %v2830 = vadd.f32 %v2829, 1.0
        %v2831 = vmul.f32 %v2830, %v2247
        %v2832 = vand.u32 2147483647, %v2247
        %vm2833 = vcmp.lt.f32.partialorder %v2832, 0.0004427343
        %v2834 = vsel %vm2833, %v2831, %v2828
        %v2835 = vadd.f32 %v2249, 1.0
        %v2836 = vlog2.pop %v2835
        %v2837 = vmul.f32 %v2836, 0.6931472
        %v2838 = vmul.f32 -0.5, %v2249
        %v2839 = vadd.f32 %v2838, 1.0
        %v2840 = vmul.f32 %v2839, %v2249
        %v2841 = vand.u32 2147483647, %v2249
        %vm2842 = vcmp.lt.f32.partialorder %v2841, 0.0004427343
        %v2843 = vsel %vm2842, %v2840, %v2837
        %v2844 = vadd.f32 %v2251, 1.0
        %v2845 = vlog2.pop %v2844
        %v2846 = vmul.f32 %v2845, 0.6931472
        %v2847 = vmul.f32 -0.5, %v2251
        %v2848 = vadd.f32 %v2847, 1.0
        %v2849 = vmul.f32 %v2848, %v2251
        %v2850 = vand.u32 2147483647, %v2251
        %vm2851 = vcmp.lt.f32.partialorder %v2850, 0.0004427343
        %v2852 = vsel %vm2851, %v2849, %v2846
        %v2853 = vadd.f32 %v2253, 1.0
        %v2854 = vlog2.pop %v2853
        %v2855 = vmul.f32 %v2854, 0.6931472
        %v2856 = vmul.f32 -0.5, %v2253
        %v2857 = vadd.f32 %v2856, 1.0
        %v2858 = vmul.f32 %v2857, %v2253
        %v2859 = vand.u32 2147483647, %v2253
        %vm2860 = vcmp.lt.f32.partialorder %v2859, 0.0004427343
        %v2861 = vsel %vm2860, %v2858, %v2855
        %v2862 = vadd.f32 %v2255, 1.0
        %v2863 = vlog2.pop %v2862
        %v2864 = vmul.f32 %v2863, 0.6931472
        %v2865 = vmul.f32 -0.5, %v2255
        %v2866 = vadd.f32 %v2865, 1.0
        %v2867 = vmul.f32 %v2866, %v2255
        %v2868 = vand.u32 2147483647, %v2255
        %vm2869 = vcmp.lt.f32.partialorder %v2868, 0.0004427343
        %v2870 = vsel %vm2869, %v2867, %v2864
        %v2871 = vadd.f32 %v2257, 1.0
        %v2872 = vlog2.pop %v2871
        %v2873 = vmul.f32 %v2872, 0.6931472
        %v2874 = vmul.f32 -0.5, %v2257
        %v2875 = vadd.f32 %v2874, 1.0
        %v2876 = vmul.f32 %v2875, %v2257
        %v2877 = vand.u32 2147483647, %v2257
        %vm2878 = vcmp.lt.f32.partialorder %v2877, 0.0004427343
        %v2879 = vsel %vm2878, %v2876, %v2873
        %v2880 = vadd.f32 %v2259, 1.0
        %v2881 = vlog2.pop %v2880
        %v2882 = vmul.f32 %v2881, 0.6931472
        %v2883 = vmul.f32 -0.5, %v2259
        %v2884 = vadd.f32 %v2883, 1.0
        %v2885 = vmul.f32 %v2884, %v2259
        %v2886 = vand.u32 2147483647, %v2259
        %vm2887 = vcmp.lt.f32.partialorder %v2886, 0.0004427343
        %v2888 = vsel %vm2887, %v2885, %v2882
        %v2889 = vadd.f32 %v2261, 1.0
        %v2890 = vlog2.pop %v2889
        %v2891 = vmul.f32 %v2890, 0.6931472
        %v2892 = vmul.f32 -0.5, %v2261
        %v2893 = vadd.f32 %v2892, 1.0
        %v2894 = vmul.f32 %v2893, %v2261
        %v2895 = vand.u32 2147483647, %v2261
        %vm2896 = vcmp.lt.f32.partialorder %v2895, 0.0004427343
        %v2897 = vsel %vm2896, %v2894, %v2891
        %v2898 = vadd.f32 %v2263, 1.0
        %v2899 = vlog2.pop %v2898
        %v2900 = vmul.f32 %v2899, 0.6931472
        %v2901 = vmul.f32 -0.5, %v2263
        %v2902 = vadd.f32 %v2901, 1.0
        %v2903 = vmul.f32 %v2902, %v2263
        %v2904 = vand.u32 2147483647, %v2263
        %vm2905 = vcmp.lt.f32.partialorder %v2904, 0.0004427343
        %v2906 = vsel %vm2905, %v2903, %v2900
        %v2907 = vadd.f32 %v2265, 1.0
        %v2908 = vlog2.pop %v2907
        %v2909 = vmul.f32 %v2908, 0.6931472
        %v2910 = vmul.f32 -0.5, %v2265
        %v2911 = vadd.f32 %v2910, 1.0
        %v2912 = vmul.f32 %v2911, %v2265
        %v2913 = vand.u32 2147483647, %v2265
        %vm2914 = vcmp.lt.f32.partialorder %v2913, 0.0004427343
        %v2915 = vsel %vm2914, %v2912, %v2909
        %v2916 = vadd.f32 %v2267, 1.0
        %v2917 = vlog2.pop %v2916
        %v2918 = vmul.f32 %v2917, 0.6931472
        %v2919 = vmul.f32 -0.5, %v2267
        %v2920 = vadd.f32 %v2919, 1.0
        %v2921 = vmul.f32 %v2920, %v2267
        %v2922 = vand.u32 2147483647, %v2267
        %vm2923 = vcmp.lt.f32.partialorder %v2922, 0.0004427343
        %v2924 = vsel %vm2923, %v2921, %v2918
        %v2925 = vadd.f32 %v2269, 1.0
        %v2926 = vlog2.pop %v2925
        %v2927 = vmul.f32 %v2926, 0.6931472
        %v2928 = vmul.f32 -0.5, %v2269
        %v2929 = vadd.f32 %v2928, 1.0
        %v2930 = vmul.f32 %v2929, %v2269
        %v2931 = vand.u32 2147483647, %v2269
        %vm2932 = vcmp.lt.f32.partialorder %v2931, 0.0004427343
        %v2933 = vsel %vm2932, %v2930, %v2927
        %v2934 = vadd.f32 %v2271, 1.0
        %v2935 = vlog2.pop %v2934
        %v2936 = vmul.f32 %v2935, 0.6931472
        %v2937 = vmul.f32 -0.5, %v2271
        %v2938 = vadd.f32 %v2937, 1.0
        %v2939 = vmul.f32 %v2938, %v2271
        %v2940 = vand.u32 2147483647, %v2271
        %vm2941 = vcmp.lt.f32.partialorder %v2940, 0.0004427343
        %v2942 = vsel %vm2941, %v2939, %v2936
        %v2943 = vadd.f32 %v2273, 1.0
        %v2944 = vlog2.pop %v2943
        %v2945 = vmul.f32 %v2944, 0.6931472
        %v2946 = vmul.f32 -0.5, %v2273
        %v2947 = vadd.f32 %v2946, 1.0
        %v2948 = vmul.f32 %v2947, %v2273
        %v2949 = vand.u32 2147483647, %v2273
        %vm2950 = vcmp.lt.f32.partialorder %v2949, 0.0004427343
        %v2951 = vsel %vm2950, %v2948, %v2945
        %v2952 = vadd.f32 %v2275, 1.0
        %v2953 = vlog2.pop %v2952
        %v2954 = vmul.f32 %v2953, 0.6931472
        %v2955 = vmul.f32 -0.5, %v2275
        %v2956 = vadd.f32 %v2955, 1.0
        %v2957 = vmul.f32 %v2956, %v2275
        %v2958 = vand.u32 2147483647, %v2275
        %vm2959 = vcmp.lt.f32.partialorder %v2958, 0.0004427343
        %v2960 = vsel %vm2959, %v2957, %v2954
        %v2961 = vadd.f32 %v2277, 1.0
        %v2962 = vlog2.pop %v2961
        %v2963 = vmul.f32 %v2962, 0.6931472
        %v2964 = vmul.f32 -0.5, %v2277
        %v2965 = vadd.f32 %v2964, 1.0
        %v2966 = vmul.f32 %v2965, %v2277
        %v2967 = vand.u32 2147483647, %v2277
        %vm2968 = vcmp.lt.f32.partialorder %v2967, 0.0004427343
        %v2969 = vsel %vm2968, %v2966, %v2963
        %v2970 = vadd.f32 %v2279, 1.0
        %v2971 = vlog2.pop %v2970
        %v2972 = vmul.f32 %v2971, 0.6931472
        %v2973 = vmul.f32 -0.5, %v2279
        %v2974 = vadd.f32 %v2973, 1.0
        %v2975 = vmul.f32 %v2974, %v2279
        %v2976 = vand.u32 2147483647, %v2279
        %vm2977 = vcmp.lt.f32.partialorder %v2976, 0.0004427343
        %v2978 = vsel %vm2977, %v2975, %v2972
        %v2979 = vadd.f32 %v2281, 1.0
        %v2980 = vlog2.pop %v2979
        %v2981 = vmul.f32 %v2980, 0.6931472
        %v2982 = vmul.f32 -0.5, %v2281
        %v2983 = vadd.f32 %v2982, 1.0
        %v2984 = vmul.f32 %v2983, %v2281
        %v2985 = vand.u32 2147483647, %v2281
        %vm2986 = vcmp.lt.f32.partialorder %v2985, 0.0004427343
        %v2987 = vsel %vm2986, %v2984, %v2981
        %v2988 = vadd.f32 %v2283, 1.0
        %v2989 = vlog2.pop %v2988
        %v2990 = vmul.f32 %v2989, 0.6931472
        %v2991 = vmul.f32 -0.5, %v2283
        %v2992 = vadd.f32 %v2991, 1.0
        %v2993 = vmul.f32 %v2992, %v2283
        %v2994 = vand.u32 2147483647, %v2283
        %vm2995 = vcmp.lt.f32.partialorder %v2994, 0.0004427343
        %v2996 = vsel %vm2995, %v2993, %v2990
        %v2997 = vadd.f32 %v2285, 1.0
        %v2998 = vlog2.pop %v2997
        %v2999 = vmul.f32 %v2998, 0.6931472
        %v3000 = vmul.f32 -0.5, %v2285
        %v3001 = vadd.f32 %v3000, 1.0
        %v3002 = vmul.f32 %v3001, %v2285
        %v3003 = vand.u32 2147483647, %v2285
        %vm3004 = vcmp.lt.f32.partialorder %v3003, 0.0004427343
        %v3005 = vsel %vm3004, %v3002, %v2999
        %v3006 = vand.u32 2147483647, %v1886
        %v3007 = vand.u32 2147483647, %v1887
        %v3008 = vand.u32 2147483647, %v1888
        %v3009 = vand.u32 2147483647, %v1889
        %v3010 = vand.u32 2147483647, %v1890
        %v3011 = vand.u32 2147483647, %v1891
        %v3012 = vand.u32 2147483647, %v1892
        %v3013 = vand.u32 2147483647, %v1893
        %v3014 = vand.u32 2147483647, %v1894
        %v3015 = vand.u32 2147483647, %v1895
        %v3016 = vand.u32 2147483647, %v1896
        %v3017 = vand.u32 2147483647, %v1897
        %v3018 = vand.u32 2147483647, %v1898
        %v3019 = vand.u32 2147483647, %v1899
        %v3020 = vand.u32 2147483647, %v1900
        %v3021 = vand.u32 2147483647, %v1901
        %v3022 = vand.u32 2147483647, %v1902
        %v3023 = vand.u32 2147483647, %v1903
        %v3024 = vand.u32 2147483647, %v1904
        %v3025 = vand.u32 2147483647, %v1905
        %v3026 = vand.u32 2147483647, %v1906
        %v3027 = vand.u32 2147483647, %v1907
        %v3028 = vand.u32 2147483647, %v1908
        %v3029 = vand.u32 2147483647, %v1909
        %v3030 = vand.u32 2147483647, %v1910
        %v3031 = vand.u32 2147483647, %v1911
        %v3032 = vand.u32 2147483647, %v1912
        %v3033 = vand.u32 2147483647, %v1913
        %v3034 = vand.u32 2147483647, %v1914
        %v3035 = vand.u32 2147483647, %v1915
        %v3036 = vand.u32 2147483647, %v1916
        %v3037 = vand.u32 2147483647, %v1917
        %v3038 = vand.u32 2147483647, %v1918
        %v3039 = vand.u32 2147483647, %v1919
        %v3040 = vand.u32 2147483647, %v1920
        %v3041 = vand.u32 2147483647, %v1921
        %v3042 = vand.u32 2147483647, %v1922
        %v3043 = vand.u32 2147483647, %v1923
        %v3044 = vand.u32 2147483647, %v1924
        %v3045 = vand.u32 2147483647, %v1925
        %v3046 = vand.u32 2147483647, %v1926
        %v3047 = vand.u32 2147483647, %v1927
        %v3048 = vand.u32 2147483647, %v1928
        %v3049 = vand.u32 2147483647, %v1929
        %v3050 = vand.u32 2147483647, %v1930
        %v3051 = vand.u32 2147483647, %v1931
        %v3052 = vand.u32 2147483647, %v1932
        %v3053 = vand.u32 2147483647, %v1933
        %v3054 = vand.u32 2147483647, %v1934
        %v3055 = vand.u32 2147483647, %v1935
        %v3056 = vand.u32 2147483647, %v1936
        %v3057 = vand.u32 2147483647, %v1937
        %v3058 = vand.u32 2147483647, %v1938
        %v3059 = vand.u32 2147483647, %v1939
        %v3060 = vand.u32 2147483647, %v1940
        %v3061 = vand.u32 2147483647, %v1941
        %v3062 = vand.u32 2147483647, %v1942
        %v3063 = vand.u32 2147483647, %v1943
        %v3064 = vand.u32 2147483647, %v1944
        %v3065 = vand.u32 2147483647, %v1945
        %v3066 = vand.u32 2147483647, %v1946
        %v3067 = vand.u32 2147483647, %v1947
        %v3068 = vand.u32 2147483647, %v1948
        %v3069 = vand.u32 2147483647, %v1949
        %v3070 = vand.u32 2147483647, %v1950
        %v3071 = vand.u32 2147483647, %v1951
        %v3072 = vand.u32 2147483647, %v1952
        %v3073 = vand.u32 2147483647, %v1953
        %v3074 = vand.u32 2147483647, %v1954
        %v3075 = vand.u32 2147483647, %v1955
        %v3076 = vand.u32 2147483647, %v1956
        %v3077 = vand.u32 2147483647, %v1957
        %v3078 = vand.u32 2147483647, %v1958
        %v3079 = vand.u32 2147483647, %v1959
        %v3080 = vand.u32 2147483647, %v1960
        %v3081 = vand.u32 2147483647, %v1961
        %v3082 = vand.u32 2147483647, %v1962
        %v3083 = vand.u32 2147483647, %v1963
        %v3084 = vand.u32 2147483647, %v1964
        %v3085 = vand.u32 2147483647, %v1965
        %v3086 = vsub.f32 0.0, %v3006
        %v3087 = vsub.f32 0.0, %v3007
        %v3088 = vsub.f32 0.0, %v3008
        %v3089 = vsub.f32 0.0, %v3009
        %v3090 = vsub.f32 0.0, %v3010
        %v3091 = vsub.f32 0.0, %v3011
        %v3092 = vsub.f32 0.0, %v3012
        %v3093 = vsub.f32 0.0, %v3013
        %v3094 = vsub.f32 0.0, %v3014
        %v3095 = vsub.f32 0.0, %v3015
        %v3096 = vsub.f32 0.0, %v3016
        %v3097 = vsub.f32 0.0, %v3017
        %v3098 = vsub.f32 0.0, %v3018
        %v3099 = vsub.f32 0.0, %v3019
        %v3100 = vsub.f32 0.0, %v3020
        %v3101 = vsub.f32 0.0, %v3021
        %v3102 = vsub.f32 0.0, %v3022
        %v3103 = vsub.f32 0.0, %v3023
        %v3104 = vsub.f32 0.0, %v3024
        %v3105 = vsub.f32 0.0, %v3025
        %v3106 = vsub.f32 0.0, %v3026
        %v3107 = vsub.f32 0.0, %v3027
        %v3108 = vsub.f32 0.0, %v3028
        %v3109 = vsub.f32 0.0, %v3029
        %v3110 = vsub.f32 0.0, %v3030
        %v3111 = vsub.f32 0.0, %v3031
        %v3112 = vsub.f32 0.0, %v3032
        %v3113 = vsub.f32 0.0, %v3033
        %v3114 = vsub.f32 0.0, %v3034
        %v3115 = vsub.f32 0.0, %v3035
        %v3116 = vsub.f32 0.0, %v3036
        %v3117 = vsub.f32 0.0, %v3037
        %v3118 = vsub.f32 0.0, %v3038
        %v3119 = vsub.f32 0.0, %v3039
        %v3120 = vsub.f32 0.0, %v3040
        %v3121 = vsub.f32 0.0, %v3041
        %v3122 = vsub.f32 0.0, %v3042
        %v3123 = vsub.f32 0.0, %v3043
        %v3124 = vsub.f32 0.0, %v3044
        %v3125 = vsub.f32 0.0, %v3045
        %v3126 = vsub.f32 0.0, %v3046
        %v3127 = vsub.f32 0.0, %v3047
        %v3128 = vsub.f32 0.0, %v3048
        %v3129 = vsub.f32 0.0, %v3049
        %v3130 = vsub.f32 0.0, %v3050
        %v3131 = vsub.f32 0.0, %v3051
        %v3132 = vsub.f32 0.0, %v3052
        %v3133 = vsub.f32 0.0, %v3053
        %v3134 = vsub.f32 0.0, %v3054
        %v3135 = vsub.f32 0.0, %v3055
        %v3136 = vsub.f32 0.0, %v3056
        %v3137 = vsub.f32 0.0, %v3057
        %v3138 = vsub.f32 0.0, %v3058
        %v3139 = vsub.f32 0.0, %v3059
        %v3140 = vsub.f32 0.0, %v3060
        %v3141 = vsub.f32 0.0, %v3061
        %v3142 = vsub.f32 0.0, %v3062
        %v3143 = vsub.f32 0.0, %v3063
        %v3144 = vsub.f32 0.0, %v3064
        %v3145 = vsub.f32 0.0, %v3065
        %v3146 = vsub.f32 0.0, %v3066
        %v3147 = vsub.f32 0.0, %v3067
        %v3148 = vsub.f32 0.0, %v3068
        %v3149 = vsub.f32 0.0, %v3069
        %v3150 = vsub.f32 0.0, %v3070
        %v3151 = vsub.f32 0.0, %v3071
        %v3152 = vsub.f32 0.0, %v3072
        %v3153 = vsub.f32 0.0, %v3073
        %v3154 = vsub.f32 0.0, %v3074
        %v3155 = vsub.f32 0.0, %v3075
        %v3156 = vsub.f32 0.0, %v3076
        %v3157 = vsub.f32 0.0, %v3077
        %v3158 = vsub.f32 0.0, %v3078
        %v3159 = vsub.f32 0.0, %v3079
        %v3160 = vsub.f32 0.0, %v3080
        %v3161 = vsub.f32 0.0, %v3081
        %v3162 = vsub.f32 0.0, %v3082
        %v3163 = vsub.f32 0.0, %v3083
        %v3164 = vsub.f32 0.0, %v3084
        %v3165 = vsub.f32 0.0, %v3085
        %v3166 = vmul.f32 %v3086, 1.442695
        %v3167 = vpow.pop %v3166
        %v3168 = vmul.f32 %v3087, 1.442695
        %v3169 = vpow.pop %v3168
        %v3170 = vmul.f32 %v3088, 1.442695
        %v3171 = vpow.pop %v3170
        %v3172 = vmul.f32 %v3089, 1.442695
        %v3173 = vpow.pop %v3172
        %v3174 = vmul.f32 %v3090, 1.442695
        %v3175 = vpow.pop %v3174
        %v3176 = vmul.f32 %v3091, 1.442695
        %v3177 = vpow.pop %v3176
        %v3178 = vmul.f32 %v3092, 1.442695
        %v3179 = vpow.pop %v3178
        %v3180 = vmul.f32 %v3093, 1.442695
        %v3181 = vpow.pop %v3180
        %v3182 = vmul.f32 %v3094, 1.442695
        %v3183 = vpow.pop %v3182
        %v3184 = vmul.f32 %v3095, 1.442695
        %v3185 = vpow.pop %v3184
        %v3186 = vmul.f32 %v3096, 1.442695
        %v3187 = vpow.pop %v3186
        %v3188 = vmul.f32 %v3097, 1.442695
        %v3189 = vpow.pop %v3188
        %v3190 = vmul.f32 %v3098, 1.442695
        %v3191 = vpow.pop %v3190
        %v3192 = vmul.f32 %v3099, 1.442695
        %v3193 = vpow.pop %v3192
        %v3194 = vmul.f32 %v3100, 1.442695
        %v3195 = vpow.pop %v3194
        %v3196 = vmul.f32 %v3101, 1.442695
        %v3197 = vpow.pop %v3196
        %v3198 = vmul.f32 %v3102, 1.442695
        %v3199 = vpow.pop %v3198
        %v3200 = vmul.f32 %v3103, 1.442695
        %v3201 = vpow.pop %v3200
        %v3202 = vmul.f32 %v3104, 1.442695
        %v3203 = vpow.pop %v3202
        %v3204 = vmul.f32 %v3105, 1.442695
        %v3205 = vpow.pop %v3204
        %v3206 = vmul.f32 %v3106, 1.442695
        %v3207 = vpow.pop %v3206
        %v3208 = vmul.f32 %v3107, 1.442695
        %v3209 = vpow.pop %v3208
        %v3210 = vmul.f32 %v3108, 1.442695
        %v3211 = vpow.pop %v3210
        %v3212 = vmul.f32 %v3109, 1.442695
        %v3213 = vpow.pop %v3212
        %v3214 = vmul.f32 %v3110, 1.442695
        %v3215 = vpow.pop %v3214
        %v3216 = vmul.f32 %v3111, 1.442695
        %v3217 = vpow.pop %v3216
        %v3218 = vmul.f32 %v3112, 1.442695
        %v3219 = vpow.pop %v3218
        %v3220 = vmul.f32 %v3113, 1.442695
        %v3221 = vpow.pop %v3220
        %v3222 = vmul.f32 %v3114, 1.442695
        %v3223 = vpow.pop %v3222
        %v3224 = vmul.f32 %v3115, 1.442695
        %v3225 = vpow.pop %v3224
        %v3226 = vmul.f32 %v3116, 1.442695
        %v3227 = vpow.pop %v3226
        %v3228 = vmul.f32 %v3117, 1.442695
        %v3229 = vpow.pop %v3228
        %v3230 = vmul.f32 %v3118, 1.442695
        %v3231 = vpow.pop %v3230
        %v3232 = vmul.f32 %v3119, 1.442695
        %v3233 = vpow.pop %v3232
        %v3234 = vmul.f32 %v3120, 1.442695
        %v3235 = vpow.pop %v3234
        %v3236 = vmul.f32 %v3121, 1.442695
        %v3237 = vpow.pop %v3236
        %v3238 = vmul.f32 %v3122, 1.442695
        %v3239 = vpow.pop %v3238
        %v3240 = vmul.f32 %v3123, 1.442695
        %v3241 = vpow.pop %v3240
        %v3242 = vmul.f32 %v3124, 1.442695
        %v3243 = vpow.pop %v3242
        %v3244 = vmul.f32 %v3125, 1.442695
        %v3245 = vpow.pop %v3244
        %v3246 = vmul.f32 %v3126, 1.442695
        %v3247 = vpow.pop %v3246
        %v3248 = vmul.f32 %v3127, 1.442695
        %v3249 = vpow.pop %v3248
        %v3250 = vmul.f32 %v3128, 1.442695
        %v3251 = vpow.pop %v3250
        %v3252 = vmul.f32 %v3129, 1.442695
        %v3253 = vpow.pop %v3252
        %v3254 = vmul.f32 %v3130, 1.442695
        %v3255 = vpow.pop %v3254
        %v3256 = vmul.f32 %v3131, 1.442695
        %v3257 = vpow.pop %v3256
        %v3258 = vmul.f32 %v3132, 1.442695
        %v3259 = vpow.pop %v3258
        %v3260 = vmul.f32 %v3133, 1.442695
        %v3261 = vpow.pop %v3260
        %v3262 = vmul.f32 %v3134, 1.442695
        %v3263 = vpow.pop %v3262
        %v3264 = vmul.f32 %v3135, 1.442695
        %v3265 = vpow.pop %v3264
        %v3266 = vmul.f32 %v3136, 1.442695
        %v3267 = vpow.pop %v3266
        %v3268 = vmul.f32 %v3137, 1.442695
        %v3269 = vpow.pop %v3268
        %v3270 = vmul.f32 %v3138, 1.442695
        %v3271 = vpow.pop %v3270
        %v3272 = vmul.f32 %v3139, 1.442695
        %v3273 = vpow.pop %v3272
        %v3274 = vmul.f32 %v3140, 1.442695
        %v3275 = vpow.pop %v3274
        %v3276 = vmul.f32 %v3141, 1.442695
        %v3277 = vpow.pop %v3276
        %v3278 = vmul.f32 %v3142, 1.442695
        %v3279 = vpow.pop %v3278
        %v3280 = vmul.f32 %v3143, 1.442695
        %v3281 = vpow.pop %v3280
        %v3282 = vmul.f32 %v3144, 1.442695
        %v3283 = vpow.pop %v3282
        %v3284 = vmul.f32 %v3145, 1.442695
        %v3285 = vpow.pop %v3284
        %v3286 = vmul.f32 %v3146, 1.442695
        %v3287 = vpow.pop %v3286
        %v3288 = vmul.f32 %v3147, 1.442695
        %v3289 = vpow.pop %v3288
        %v3290 = vmul.f32 %v3148, 1.442695
        %v3291 = vpow.pop %v3290
        %v3292 = vmul.f32 %v3149, 1.442695
        %v3293 = vpow.pop %v3292
        %v3294 = vmul.f32 %v3150, 1.442695
        %v3295 = vpow.pop %v3294
        %v3296 = vmul.f32 %v3151, 1.442695
        %v3297 = vpow.pop %v3296
        %v3298 = vmul.f32 %v3152, 1.442695
        %v3299 = vpow.pop %v3298
        %v3300 = vmul.f32 %v3153, 1.442695
        %v3301 = vpow.pop %v3300
        %v3302 = vmul.f32 %v3154, 1.442695
        %v3303 = vpow.pop %v3302
        %v3304 = vmul.f32 %v3155, 1.442695
        %v3305 = vpow.pop %v3304
        %v3306 = vmul.f32 %v3156, 1.442695
        %v3307 = vpow.pop %v3306
        %v3308 = vmul.f32 %v3157, 1.442695
        %v3309 = vpow.pop %v3308
        %v3310 = vmul.f32 %v3158, 1.442695
        %v3311 = vpow.pop %v3310
        %v3312 = vmul.f32 %v3159, 1.442695
        %v3313 = vpow.pop %v3312
        %v3314 = vmul.f32 %v3160, 1.442695
        %v3315 = vpow.pop %v3314
        %v3316 = vmul.f32 %v3161, 1.442695
        %v3317 = vpow.pop %v3316
        %v3318 = vmul.f32 %v3162, 1.442695
        %v3319 = vpow.pop %v3318
        %v3320 = vmul.f32 %v3163, 1.442695
        %v3321 = vpow.pop %v3320
        %v3322 = vmul.f32 %v3164, 1.442695
        %v3323 = vpow.pop %v3322
        %v3324 = vmul.f32 %v3165, 1.442695
        %v3325 = vpow.pop %v3324
        %v3326 = vadd.f32 %v3167, 1.0
        %v3327 = vlog2.pop %v3326
        %v3328 = vmul.f32 %v3327, 0.6931472
        %v3329 = vmul.f32 -0.5, %v3167
        %v3330 = vadd.f32 %v3329, 1.0
        %v3331 = vmul.f32 %v3330, %v3167
        %v3332 = vand.u32 2147483647, %v3167
        %vm3333 = vcmp.lt.f32.partialorder %v3332, 0.0004427343
        %v3334 = vsel %vm3333, %v3331, %v3328
        %v3335 = vadd.f32 %v3169, 1.0
        %v3336 = vlog2.pop %v3335
        %v3337 = vmul.f32 %v3336, 0.6931472
        %v3338 = vmul.f32 -0.5, %v3169
        %v3339 = vadd.f32 %v3338, 1.0
        %v3340 = vmul.f32 %v3339, %v3169
        %v3341 = vand.u32 2147483647, %v3169
        %vm3342 = vcmp.lt.f32.partialorder %v3341, 0.0004427343
        %v3343 = vsel %vm3342, %v3340, %v3337
        %v3344 = vadd.f32 %v3171, 1.0
        %v3345 = vlog2.pop %v3344
        %v3346 = vmul.f32 %v3345, 0.6931472
        %v3347 = vmul.f32 -0.5, %v3171
        %v3348 = vadd.f32 %v3347, 1.0
        %v3349 = vmul.f32 %v3348, %v3171
        %v3350 = vand.u32 2147483647, %v3171
        %vm3351 = vcmp.lt.f32.partialorder %v3350, 0.0004427343
        %v3352 = vsel %vm3351, %v3349, %v3346
        %v3353 = vadd.f32 %v3173, 1.0
        %v3354 = vlog2.pop %v3353
        %v3355 = vmul.f32 %v3354, 0.6931472
        %v3356 = vmul.f32 -0.5, %v3173
        %v3357 = vadd.f32 %v3356, 1.0
        %v3358 = vmul.f32 %v3357, %v3173
        %v3359 = vand.u32 2147483647, %v3173
        %vm3360 = vcmp.lt.f32.partialorder %v3359, 0.0004427343
        %v3361 = vsel %vm3360, %v3358, %v3355
        %v3362 = vadd.f32 %v3175, 1.0
        %v3363 = vlog2.pop %v3362
        %v3364 = vmul.f32 %v3363, 0.6931472
        %v3365 = vmul.f32 -0.5, %v3175
        %v3366 = vadd.f32 %v3365, 1.0
        %v3367 = vmul.f32 %v3366, %v3175
        %v3368 = vand.u32 2147483647, %v3175
        %vm3369 = vcmp.lt.f32.partialorder %v3368, 0.0004427343
        %v3370 = vsel %vm3369, %v3367, %v3364
        %v3371 = vadd.f32 %v3177, 1.0
        %v3372 = vlog2.pop %v3371
        %v3373 = vmul.f32 %v3372, 0.6931472
        %v3374 = vmul.f32 -0.5, %v3177
        %v3375 = vadd.f32 %v3374, 1.0
        %v3376 = vmul.f32 %v3375, %v3177
        %v3377 = vand.u32 2147483647, %v3177
        %vm3378 = vcmp.lt.f32.partialorder %v3377, 0.0004427343
        %v3379 = vsel %vm3378, %v3376, %v3373
        %v3380 = vadd.f32 %v3179, 1.0
        %v3381 = vlog2.pop %v3380
        %v3382 = vmul.f32 %v3381, 0.6931472
        %v3383 = vmul.f32 -0.5, %v3179
        %v3384 = vadd.f32 %v3383, 1.0
        %v3385 = vmul.f32 %v3384, %v3179
        %v3386 = vand.u32 2147483647, %v3179
        %vm3387 = vcmp.lt.f32.partialorder %v3386, 0.0004427343
        %v3388 = vsel %vm3387, %v3385, %v3382
        %v3389 = vadd.f32 %v3181, 1.0
        %v3390 = vlog2.pop %v3389
        %v3391 = vmul.f32 %v3390, 0.6931472
        %v3392 = vmul.f32 -0.5, %v3181
        %v3393 = vadd.f32 %v3392, 1.0
        %v3394 = vmul.f32 %v3393, %v3181
        %v3395 = vand.u32 2147483647, %v3181
        %vm3396 = vcmp.lt.f32.partialorder %v3395, 0.0004427343
        %v3397 = vsel %vm3396, %v3394, %v3391
        %v3398 = vadd.f32 %v3183, 1.0
        %v3399 = vlog2.pop %v3398
        %v3400 = vmul.f32 %v3399, 0.6931472
        %v3401 = vmul.f32 -0.5, %v3183
        %v3402 = vadd.f32 %v3401, 1.0
        %v3403 = vmul.f32 %v3402, %v3183
        %v3404 = vand.u32 2147483647, %v3183
        %vm3405 = vcmp.lt.f32.partialorder %v3404, 0.0004427343
        %v3406 = vsel %vm3405, %v3403, %v3400
        %v3407 = vadd.f32 %v3185, 1.0
        %v3408 = vlog2.pop %v3407
        %v3409 = vmul.f32 %v3408, 0.6931472
        %v3410 = vmul.f32 -0.5, %v3185
        %v3411 = vadd.f32 %v3410, 1.0
        %v3412 = vmul.f32 %v3411, %v3185
        %v3413 = vand.u32 2147483647, %v3185
        %vm3414 = vcmp.lt.f32.partialorder %v3413, 0.0004427343
        %v3415 = vsel %vm3414, %v3412, %v3409
        %v3416 = vadd.f32 %v3187, 1.0
        %v3417 = vlog2.pop %v3416
        %v3418 = vmul.f32 %v3417, 0.6931472
        %v3419 = vmul.f32 -0.5, %v3187
        %v3420 = vadd.f32 %v3419, 1.0
        %v3421 = vmul.f32 %v3420, %v3187
        %v3422 = vand.u32 2147483647, %v3187
        %vm3423 = vcmp.lt.f32.partialorder %v3422, 0.0004427343
        %v3424 = vsel %vm3423, %v3421, %v3418
        %v3425 = vadd.f32 %v3189, 1.0
        %v3426 = vlog2.pop %v3425
        %v3427 = vmul.f32 %v3426, 0.6931472
        %v3428 = vmul.f32 -0.5, %v3189
        %v3429 = vadd.f32 %v3428, 1.0
        %v3430 = vmul.f32 %v3429, %v3189
        %v3431 = vand.u32 2147483647, %v3189
        %vm3432 = vcmp.lt.f32.partialorder %v3431, 0.0004427343
        %v3433 = vsel %vm3432, %v3430, %v3427
        %v3434 = vadd.f32 %v3191, 1.0
        %v3435 = vlog2.pop %v3434
        %v3436 = vmul.f32 %v3435, 0.6931472
        %v3437 = vmul.f32 -0.5, %v3191
        %v3438 = vadd.f32 %v3437, 1.0
        %v3439 = vmul.f32 %v3438, %v3191
        %v3440 = vand.u32 2147483647, %v3191
        %vm3441 = vcmp.lt.f32.partialorder %v3440, 0.0004427343
        %v3442 = vsel %vm3441, %v3439, %v3436
        %v3443 = vadd.f32 %v3193, 1.0
        %v3444 = vlog2.pop %v3443
        %v3445 = vmul.f32 %v3444, 0.6931472
        %v3446 = vmul.f32 -0.5, %v3193
        %v3447 = vadd.f32 %v3446, 1.0
        %v3448 = vmul.f32 %v3447, %v3193
        %v3449 = vand.u32 2147483647, %v3193
        %vm3450 = vcmp.lt.f32.partialorder %v3449, 0.0004427343
        %v3451 = vsel %vm3450, %v3448, %v3445
        %v3452 = vadd.f32 %v3195, 1.0
        %v3453 = vlog2.pop %v3452
        %v3454 = vmul.f32 %v3453, 0.6931472
        %v3455 = vmul.f32 -0.5, %v3195
        %v3456 = vadd.f32 %v3455, 1.0
        %v3457 = vmul.f32 %v3456, %v3195
        %v3458 = vand.u32 2147483647, %v3195
        %vm3459 = vcmp.lt.f32.partialorder %v3458, 0.0004427343
        %v3460 = vsel %vm3459, %v3457, %v3454
        %v3461 = vadd.f32 %v3197, 1.0
        %v3462 = vlog2.pop %v3461
        %v3463 = vmul.f32 %v3462, 0.6931472
        %v3464 = vmul.f32 -0.5, %v3197
        %v3465 = vadd.f32 %v3464, 1.0
        %v3466 = vmul.f32 %v3465, %v3197
        %v3467 = vand.u32 2147483647, %v3197
        %vm3468 = vcmp.lt.f32.partialorder %v3467, 0.0004427343
        %v3469 = vsel %vm3468, %v3466, %v3463
        %v3470 = vadd.f32 %v3199, 1.0
        %v3471 = vlog2.pop %v3470
        %v3472 = vmul.f32 %v3471, 0.6931472
        %v3473 = vmul.f32 -0.5, %v3199
        %v3474 = vadd.f32 %v3473, 1.0
        %v3475 = vmul.f32 %v3474, %v3199
        %v3476 = vand.u32 2147483647, %v3199
        %vm3477 = vcmp.lt.f32.partialorder %v3476, 0.0004427343
        %v3478 = vsel %vm3477, %v3475, %v3472
        %v3479 = vadd.f32 %v3201, 1.0
        %v3480 = vlog2.pop %v3479
        %v3481 = vmul.f32 %v3480, 0.6931472
        %v3482 = vmul.f32 -0.5, %v3201
        %v3483 = vadd.f32 %v3482, 1.0
        %v3484 = vmul.f32 %v3483, %v3201
        %v3485 = vand.u32 2147483647, %v3201
        %vm3486 = vcmp.lt.f32.partialorder %v3485, 0.0004427343
        %v3487 = vsel %vm3486, %v3484, %v3481
        %v3488 = vadd.f32 %v3203, 1.0
        %v3489 = vlog2.pop %v3488
        %v3490 = vmul.f32 %v3489, 0.6931472
        %v3491 = vmul.f32 -0.5, %v3203
        %v3492 = vadd.f32 %v3491, 1.0
        %v3493 = vmul.f32 %v3492, %v3203
        %v3494 = vand.u32 2147483647, %v3203
        %vm3495 = vcmp.lt.f32.partialorder %v3494, 0.0004427343
        %v3496 = vsel %vm3495, %v3493, %v3490
        %v3497 = vadd.f32 %v3205, 1.0
        %v3498 = vlog2.pop %v3497
        %v3499 = vmul.f32 %v3498, 0.6931472
        %v3500 = vmul.f32 -0.5, %v3205
        %v3501 = vadd.f32 %v3500, 1.0
        %v3502 = vmul.f32 %v3501, %v3205
        %v3503 = vand.u32 2147483647, %v3205
        %vm3504 = vcmp.lt.f32.partialorder %v3503, 0.0004427343
        %v3505 = vsel %vm3504, %v3502, %v3499
        %v3506 = vadd.f32 %v3207, 1.0
        %v3507 = vlog2.pop %v3506
        %v3508 = vmul.f32 %v3507, 0.6931472
        %v3509 = vmul.f32 -0.5, %v3207
        %v3510 = vadd.f32 %v3509, 1.0
        %v3511 = vmul.f32 %v3510, %v3207
        %v3512 = vand.u32 2147483647, %v3207
        %vm3513 = vcmp.lt.f32.partialorder %v3512, 0.0004427343
        %v3514 = vsel %vm3513, %v3511, %v3508
        %v3515 = vadd.f32 %v3209, 1.0
        %v3516 = vlog2.pop %v3515
        %v3517 = vmul.f32 %v3516, 0.6931472
        %v3518 = vmul.f32 -0.5, %v3209
        %v3519 = vadd.f32 %v3518, 1.0
        %v3520 = vmul.f32 %v3519, %v3209
        %v3521 = vand.u32 2147483647, %v3209
        %vm3522 = vcmp.lt.f32.partialorder %v3521, 0.0004427343
        %v3523 = vsel %vm3522, %v3520, %v3517
        %v3524 = vadd.f32 %v3211, 1.0
        %v3525 = vlog2.pop %v3524
        %v3526 = vmul.f32 %v3525, 0.6931472
        %v3527 = vmul.f32 -0.5, %v3211
        %v3528 = vadd.f32 %v3527, 1.0
        %v3529 = vmul.f32 %v3528, %v3211
        %v3530 = vand.u32 2147483647, %v3211
        %vm3531 = vcmp.lt.f32.partialorder %v3530, 0.0004427343
        %v3532 = vsel %vm3531, %v3529, %v3526
        %v3533 = vadd.f32 %v3213, 1.0
        %v3534 = vlog2.pop %v3533
        %v3535 = vmul.f32 %v3534, 0.6931472
        %v3536 = vmul.f32 -0.5, %v3213
        %v3537 = vadd.f32 %v3536, 1.0
        %v3538 = vmul.f32 %v3537, %v3213
        %v3539 = vand.u32 2147483647, %v3213
        %vm3540 = vcmp.lt.f32.partialorder %v3539, 0.0004427343
        %v3541 = vsel %vm3540, %v3538, %v3535
        %v3542 = vadd.f32 %v3215, 1.0
        %v3543 = vlog2.pop %v3542
        %v3544 = vmul.f32 %v3543, 0.6931472
        %v3545 = vmul.f32 -0.5, %v3215
        %v3546 = vadd.f32 %v3545, 1.0
        %v3547 = vmul.f32 %v3546, %v3215
        %v3548 = vand.u32 2147483647, %v3215
        %vm3549 = vcmp.lt.f32.partialorder %v3548, 0.0004427343
        %v3550 = vsel %vm3549, %v3547, %v3544
        %v3551 = vadd.f32 %v3217, 1.0
        %v3552 = vlog2.pop %v3551
        %v3553 = vmul.f32 %v3552, 0.6931472
        %v3554 = vmul.f32 -0.5, %v3217
        %v3555 = vadd.f32 %v3554, 1.0
        %v3556 = vmul.f32 %v3555, %v3217
        %v3557 = vand.u32 2147483647, %v3217
        %vm3558 = vcmp.lt.f32.partialorder %v3557, 0.0004427343
        %v3559 = vsel %vm3558, %v3556, %v3553
        %v3560 = vadd.f32 %v3219, 1.0
        %v3561 = vlog2.pop %v3560
        %v3562 = vmul.f32 %v3561, 0.6931472
        %v3563 = vmul.f32 -0.5, %v3219
        %v3564 = vadd.f32 %v3563, 1.0
        %v3565 = vmul.f32 %v3564, %v3219
        %v3566 = vand.u32 2147483647, %v3219
        %vm3567 = vcmp.lt.f32.partialorder %v3566, 0.0004427343
        %v3568 = vsel %vm3567, %v3565, %v3562
        %v3569 = vadd.f32 %v3221, 1.0
        %v3570 = vlog2.pop %v3569
        %v3571 = vmul.f32 %v3570, 0.6931472
        %v3572 = vmul.f32 -0.5, %v3221
        %v3573 = vadd.f32 %v3572, 1.0
        %v3574 = vmul.f32 %v3573, %v3221
        %v3575 = vand.u32 2147483647, %v3221
        %vm3576 = vcmp.lt.f32.partialorder %v3575, 0.0004427343
        %v3577 = vsel %vm3576, %v3574, %v3571
        %v3578 = vadd.f32 %v3223, 1.0
        %v3579 = vlog2.pop %v3578
        %v3580 = vmul.f32 %v3579, 0.6931472
        %v3581 = vmul.f32 -0.5, %v3223
        %v3582 = vadd.f32 %v3581, 1.0
        %v3583 = vmul.f32 %v3582, %v3223
        %v3584 = vand.u32 2147483647, %v3223
        %vm3585 = vcmp.lt.f32.partialorder %v3584, 0.0004427343
        %v3586 = vsel %vm3585, %v3583, %v3580
        %v3587 = vadd.f32 %v3225, 1.0
        %v3588 = vlog2.pop %v3587
        %v3589 = vmul.f32 %v3588, 0.6931472
        %v3590 = vmul.f32 -0.5, %v3225
        %v3591 = vadd.f32 %v3590, 1.0
        %v3592 = vmul.f32 %v3591, %v3225
        %v3593 = vand.u32 2147483647, %v3225
        %vm3594 = vcmp.lt.f32.partialorder %v3593, 0.0004427343
        %v3595 = vsel %vm3594, %v3592, %v3589
        %v3596 = vadd.f32 %v3227, 1.0
        %v3597 = vlog2.pop %v3596
        %v3598 = vmul.f32 %v3597, 0.6931472
        %v3599 = vmul.f32 -0.5, %v3227
        %v3600 = vadd.f32 %v3599, 1.0
        %v3601 = vmul.f32 %v3600, %v3227
        %v3602 = vand.u32 2147483647, %v3227
        %vm3603 = vcmp.lt.f32.partialorder %v3602, 0.0004427343
        %v3604 = vsel %vm3603, %v3601, %v3598
        %v3605 = vadd.f32 %v3229, 1.0
        %v3606 = vlog2.pop %v3605
        %v3607 = vmul.f32 %v3606, 0.6931472
        %v3608 = vmul.f32 -0.5, %v3229
        %v3609 = vadd.f32 %v3608, 1.0
        %v3610 = vmul.f32 %v3609, %v3229
        %v3611 = vand.u32 2147483647, %v3229
        %vm3612 = vcmp.lt.f32.partialorder %v3611, 0.0004427343
        %v3613 = vsel %vm3612, %v3610, %v3607
        %v3614 = vadd.f32 %v3231, 1.0
        %v3615 = vlog2.pop %v3614
        %v3616 = vmul.f32 %v3615, 0.6931472
        %v3617 = vmul.f32 -0.5, %v3231
        %v3618 = vadd.f32 %v3617, 1.0
        %v3619 = vmul.f32 %v3618, %v3231
        %v3620 = vand.u32 2147483647, %v3231
        %vm3621 = vcmp.lt.f32.partialorder %v3620, 0.0004427343
        %v3622 = vsel %vm3621, %v3619, %v3616
        %v3623 = vadd.f32 %v3233, 1.0
        %v3624 = vlog2.pop %v3623
        %v3625 = vmul.f32 %v3624, 0.6931472
        %v3626 = vmul.f32 -0.5, %v3233
        %v3627 = vadd.f32 %v3626, 1.0
        %v3628 = vmul.f32 %v3627, %v3233
        %v3629 = vand.u32 2147483647, %v3233
        %vm3630 = vcmp.lt.f32.partialorder %v3629, 0.0004427343
        %v3631 = vsel %vm3630, %v3628, %v3625
        %v3632 = vadd.f32 %v3235, 1.0
        %v3633 = vlog2.pop %v3632
        %v3634 = vmul.f32 %v3633, 0.6931472
        %v3635 = vmul.f32 -0.5, %v3235
        %v3636 = vadd.f32 %v3635, 1.0
        %v3637 = vmul.f32 %v3636, %v3235
        %v3638 = vand.u32 2147483647, %v3235
        %vm3639 = vcmp.lt.f32.partialorder %v3638, 0.0004427343
        %v3640 = vsel %vm3639, %v3637, %v3634
        %v3641 = vadd.f32 %v3237, 1.0
        %v3642 = vlog2.pop %v3641
        %v3643 = vmul.f32 %v3642, 0.6931472
        %v3644 = vmul.f32 -0.5, %v3237
        %v3645 = vadd.f32 %v3644, 1.0
        %v3646 = vmul.f32 %v3645, %v3237
        %v3647 = vand.u32 2147483647, %v3237
        %vm3648 = vcmp.lt.f32.partialorder %v3647, 0.0004427343
        %v3649 = vsel %vm3648, %v3646, %v3643
        %v3650 = vadd.f32 %v3239, 1.0
        %v3651 = vlog2.pop %v3650
        %v3652 = vmul.f32 %v3651, 0.6931472
        %v3653 = vmul.f32 -0.5, %v3239
        %v3654 = vadd.f32 %v3653, 1.0
        %v3655 = vmul.f32 %v3654, %v3239
        %v3656 = vand.u32 2147483647, %v3239
        %vm3657 = vcmp.lt.f32.partialorder %v3656, 0.0004427343
        %v3658 = vsel %vm3657, %v3655, %v3652
        %v3659 = vadd.f32 %v3241, 1.0
        %v3660 = vlog2.pop %v3659
        %v3661 = vmul.f32 %v3660, 0.6931472
        %v3662 = vmul.f32 -0.5, %v3241
        %v3663 = vadd.f32 %v3662, 1.0
        %v3664 = vmul.f32 %v3663, %v3241
        %v3665 = vand.u32 2147483647, %v3241
        %vm3666 = vcmp.lt.f32.partialorder %v3665, 0.0004427343
        %v3667 = vsel %vm3666, %v3664, %v3661
        %v3668 = vadd.f32 %v3243, 1.0
        %v3669 = vlog2.pop %v3668
        %v3670 = vmul.f32 %v3669, 0.6931472
        %v3671 = vmul.f32 -0.5, %v3243
        %v3672 = vadd.f32 %v3671, 1.0
        %v3673 = vmul.f32 %v3672, %v3243
        %v3674 = vand.u32 2147483647, %v3243
        %vm3675 = vcmp.lt.f32.partialorder %v3674, 0.0004427343
        %v3676 = vsel %vm3675, %v3673, %v3670
        %v3677 = vadd.f32 %v3245, 1.0
        %v3678 = vlog2.pop %v3677
        %v3679 = vmul.f32 %v3678, 0.6931472
        %v3680 = vmul.f32 -0.5, %v3245
        %v3681 = vadd.f32 %v3680, 1.0
        %v3682 = vmul.f32 %v3681, %v3245
        %v3683 = vand.u32 2147483647, %v3245
        %vm3684 = vcmp.lt.f32.partialorder %v3683, 0.0004427343
        %v3685 = vsel %vm3684, %v3682, %v3679
        %v3686 = vadd.f32 %v3247, 1.0
        %v3687 = vlog2.pop %v3686
        %v3688 = vmul.f32 %v3687, 0.6931472
        %v3689 = vmul.f32 -0.5, %v3247
        %v3690 = vadd.f32 %v3689, 1.0
        %v3691 = vmul.f32 %v3690, %v3247
        %v3692 = vand.u32 2147483647, %v3247
        %vm3693 = vcmp.lt.f32.partialorder %v3692, 0.0004427343
        %v3694 = vsel %vm3693, %v3691, %v3688
        %v3695 = vadd.f32 %v3249, 1.0
        %v3696 = vlog2.pop %v3695
        %v3697 = vmul.f32 %v3696, 0.6931472
        %v3698 = vmul.f32 -0.5, %v3249
        %v3699 = vadd.f32 %v3698, 1.0
        %v3700 = vmul.f32 %v3699, %v3249
        %v3701 = vand.u32 2147483647, %v3249
        %vm3702 = vcmp.lt.f32.partialorder %v3701, 0.0004427343
        %v3703 = vsel %vm3702, %v3700, %v3697
        %v3704 = vadd.f32 %v3251, 1.0
        %v3705 = vlog2.pop %v3704
        %v3706 = vmul.f32 %v3705, 0.6931472
        %v3707 = vmul.f32 -0.5, %v3251
        %v3708 = vadd.f32 %v3707, 1.0
        %v3709 = vmul.f32 %v3708, %v3251
        %v3710 = vand.u32 2147483647, %v3251
        %vm3711 = vcmp.lt.f32.partialorder %v3710, 0.0004427343
        %v3712 = vsel %vm3711, %v3709, %v3706
        %v3713 = vadd.f32 %v3253, 1.0
        %v3714 = vlog2.pop %v3713
        %v3715 = vmul.f32 %v3714, 0.6931472
        %v3716 = vmul.f32 -0.5, %v3253
        %v3717 = vadd.f32 %v3716, 1.0
        %v3718 = vmul.f32 %v3717, %v3253
        %v3719 = vand.u32 2147483647, %v3253
        %vm3720 = vcmp.lt.f32.partialorder %v3719, 0.0004427343
        %v3721 = vsel %vm3720, %v3718, %v3715
        %v3722 = vadd.f32 %v3255, 1.0
        %v3723 = vlog2.pop %v3722
        %v3724 = vmul.f32 %v3723, 0.6931472
        %v3725 = vmul.f32 -0.5, %v3255
        %v3726 = vadd.f32 %v3725, 1.0
        %v3727 = vmul.f32 %v3726, %v3255
        %v3728 = vand.u32 2147483647, %v3255
        %vm3729 = vcmp.lt.f32.partialorder %v3728, 0.0004427343
        %v3730 = vsel %vm3729, %v3727, %v3724
        %v3731 = vadd.f32 %v3257, 1.0
        %v3732 = vlog2.pop %v3731
        %v3733 = vmul.f32 %v3732, 0.6931472
        %v3734 = vmul.f32 -0.5, %v3257
        %v3735 = vadd.f32 %v3734, 1.0
        %v3736 = vmul.f32 %v3735, %v3257
        %v3737 = vand.u32 2147483647, %v3257
        %vm3738 = vcmp.lt.f32.partialorder %v3737, 0.0004427343
        %v3739 = vsel %vm3738, %v3736, %v3733
        %v3740 = vadd.f32 %v3259, 1.0
        %v3741 = vlog2.pop %v3740
        %v3742 = vmul.f32 %v3741, 0.6931472
        %v3743 = vmul.f32 -0.5, %v3259
        %v3744 = vadd.f32 %v3743, 1.0
        %v3745 = vmul.f32 %v3744, %v3259
        %v3746 = vand.u32 2147483647, %v3259
        %vm3747 = vcmp.lt.f32.partialorder %v3746, 0.0004427343
        %v3748 = vsel %vm3747, %v3745, %v3742
        %v3749 = vadd.f32 %v3261, 1.0
        %v3750 = vlog2.pop %v3749
        %v3751 = vmul.f32 %v3750, 0.6931472
        %v3752 = vmul.f32 -0.5, %v3261
        %v3753 = vadd.f32 %v3752, 1.0
        %v3754 = vmul.f32 %v3753, %v3261
        %v3755 = vand.u32 2147483647, %v3261
        %vm3756 = vcmp.lt.f32.partialorder %v3755, 0.0004427343
        %v3757 = vsel %vm3756, %v3754, %v3751
        %v3758 = vadd.f32 %v3263, 1.0
        %v3759 = vlog2.pop %v3758
        %v3760 = vmul.f32 %v3759, 0.6931472
        %v3761 = vmul.f32 -0.5, %v3263
        %v3762 = vadd.f32 %v3761, 1.0
        %v3763 = vmul.f32 %v3762, %v3263
        %v3764 = vand.u32 2147483647, %v3263
        %vm3765 = vcmp.lt.f32.partialorder %v3764, 0.0004427343
        %v3766 = vsel %vm3765, %v3763, %v3760
        %v3767 = vadd.f32 %v3265, 1.0
        %v3768 = vlog2.pop %v3767
        %v3769 = vmul.f32 %v3768, 0.6931472
        %v3770 = vmul.f32 -0.5, %v3265
        %v3771 = vadd.f32 %v3770, 1.0
        %v3772 = vmul.f32 %v3771, %v3265
        %v3773 = vand.u32 2147483647, %v3265
        %vm3774 = vcmp.lt.f32.partialorder %v3773, 0.0004427343
        %v3775 = vsel %vm3774, %v3772, %v3769
        %v3776 = vadd.f32 %v3267, 1.0
        %v3777 = vlog2.pop %v3776
        %v3778 = vmul.f32 %v3777, 0.6931472
        %v3779 = vmul.f32 -0.5, %v3267
        %v3780 = vadd.f32 %v3779, 1.0
        %v3781 = vmul.f32 %v3780, %v3267
        %v3782 = vand.u32 2147483647, %v3267
        %vm3783 = vcmp.lt.f32.partialorder %v3782, 0.0004427343
        %v3784 = vsel %vm3783, %v3781, %v3778
        %v3785 = vadd.f32 %v3269, 1.0
        %v3786 = vlog2.pop %v3785
        %v3787 = vmul.f32 %v3786, 0.6931472
        %v3788 = vmul.f32 -0.5, %v3269
        %v3789 = vadd.f32 %v3788, 1.0
        %v3790 = vmul.f32 %v3789, %v3269
        %v3791 = vand.u32 2147483647, %v3269
        %vm3792 = vcmp.lt.f32.partialorder %v3791, 0.0004427343
        %v3793 = vsel %vm3792, %v3790, %v3787
        %v3794 = vadd.f32 %v3271, 1.0
        %v3795 = vlog2.pop %v3794
        %v3796 = vmul.f32 %v3795, 0.6931472
        %v3797 = vmul.f32 -0.5, %v3271
        %v3798 = vadd.f32 %v3797, 1.0
        %v3799 = vmul.f32 %v3798, %v3271
        %v3800 = vand.u32 2147483647, %v3271
        %vm3801 = vcmp.lt.f32.partialorder %v3800, 0.0004427343
        %v3802 = vsel %vm3801, %v3799, %v3796
        %v3803 = vadd.f32 %v3273, 1.0
        %v3804 = vlog2.pop %v3803
        %v3805 = vmul.f32 %v3804, 0.6931472
        %v3806 = vmul.f32 -0.5, %v3273
        %v3807 = vadd.f32 %v3806, 1.0
        %v3808 = vmul.f32 %v3807, %v3273
        %v3809 = vand.u32 2147483647, %v3273
        %vm3810 = vcmp.lt.f32.partialorder %v3809, 0.0004427343
        %v3811 = vsel %vm3810, %v3808, %v3805
        %v3812 = vadd.f32 %v3275, 1.0
        %v3813 = vlog2.pop %v3812
        %v3814 = vmul.f32 %v3813, 0.6931472
        %v3815 = vmul.f32 -0.5, %v3275
        %v3816 = vadd.f32 %v3815, 1.0
        %v3817 = vmul.f32 %v3816, %v3275
        %v3818 = vand.u32 2147483647, %v3275
        %vm3819 = vcmp.lt.f32.partialorder %v3818, 0.0004427343
        %v3820 = vsel %vm3819, %v3817, %v3814
        %v3821 = vadd.f32 %v3277, 1.0
        %v3822 = vlog2.pop %v3821
        %v3823 = vmul.f32 %v3822, 0.6931472
        %v3824 = vmul.f32 -0.5, %v3277
        %v3825 = vadd.f32 %v3824, 1.0
        %v3826 = vmul.f32 %v3825, %v3277
        %v3827 = vand.u32 2147483647, %v3277
        %vm3828 = vcmp.lt.f32.partialorder %v3827, 0.0004427343
        %v3829 = vsel %vm3828, %v3826, %v3823
        %v3830 = vadd.f32 %v3279, 1.0
        %v3831 = vlog2.pop %v3830
        %v3832 = vmul.f32 %v3831, 0.6931472
        %v3833 = vmul.f32 -0.5, %v3279
        %v3834 = vadd.f32 %v3833, 1.0
        %v3835 = vmul.f32 %v3834, %v3279
        %v3836 = vand.u32 2147483647, %v3279
        %vm3837 = vcmp.lt.f32.partialorder %v3836, 0.0004427343
        %v3838 = vsel %vm3837, %v3835, %v3832
        %v3839 = vadd.f32 %v3281, 1.0
        %v3840 = vlog2.pop %v3839
        %v3841 = vmul.f32 %v3840, 0.6931472
        %v3842 = vmul.f32 -0.5, %v3281
        %v3843 = vadd.f32 %v3842, 1.0
        %v3844 = vmul.f32 %v3843, %v3281
        %v3845 = vand.u32 2147483647, %v3281
        %vm3846 = vcmp.lt.f32.partialorder %v3845, 0.0004427343
        %v3847 = vsel %vm3846, %v3844, %v3841
        %v3848 = vadd.f32 %v3283, 1.0
        %v3849 = vlog2.pop %v3848
        %v3850 = vmul.f32 %v3849, 0.6931472
        %v3851 = vmul.f32 -0.5, %v3283
        %v3852 = vadd.f32 %v3851, 1.0
        %v3853 = vmul.f32 %v3852, %v3283
        %v3854 = vand.u32 2147483647, %v3283
        %vm3855 = vcmp.lt.f32.partialorder %v3854, 0.0004427343
        %v3856 = vsel %vm3855, %v3853, %v3850
        %v3857 = vadd.f32 %v3285, 1.0
        %v3858 = vlog2.pop %v3857
        %v3859 = vmul.f32 %v3858, 0.6931472
        %v3860 = vmul.f32 -0.5, %v3285
        %v3861 = vadd.f32 %v3860, 1.0
        %v3862 = vmul.f32 %v3861, %v3285
        %v3863 = vand.u32 2147483647, %v3285
        %vm3864 = vcmp.lt.f32.partialorder %v3863, 0.0004427343
        %v3865 = vsel %vm3864, %v3862, %v3859
        %v3866 = vadd.f32 %v3287, 1.0
        %v3867 = vlog2.pop %v3866
        %v3868 = vmul.f32 %v3867, 0.6931472
        %v3869 = vmul.f32 -0.5, %v3287
        %v3870 = vadd.f32 %v3869, 1.0
        %v3871 = vmul.f32 %v3870, %v3287
        %v3872 = vand.u32 2147483647, %v3287
        %vm3873 = vcmp.lt.f32.partialorder %v3872, 0.0004427343
        %v3874 = vsel %vm3873, %v3871, %v3868
        %v3875 = vadd.f32 %v3289, 1.0
        %v3876 = vlog2.pop %v3875
        %v3877 = vmul.f32 %v3876, 0.6931472
        %v3878 = vmul.f32 -0.5, %v3289
        %v3879 = vadd.f32 %v3878, 1.0
        %v3880 = vmul.f32 %v3879, %v3289
        %v3881 = vand.u32 2147483647, %v3289
        %vm3882 = vcmp.lt.f32.partialorder %v3881, 0.0004427343
        %v3883 = vsel %vm3882, %v3880, %v3877
        %v3884 = vadd.f32 %v3291, 1.0
        %v3885 = vlog2.pop %v3884
        %v3886 = vmul.f32 %v3885, 0.6931472
        %v3887 = vmul.f32 -0.5, %v3291
        %v3888 = vadd.f32 %v3887, 1.0
        %v3889 = vmul.f32 %v3888, %v3291
        %v3890 = vand.u32 2147483647, %v3291
        %vm3891 = vcmp.lt.f32.partialorder %v3890, 0.0004427343
        %v3892 = vsel %vm3891, %v3889, %v3886
        %v3893 = vadd.f32 %v3293, 1.0
        %v3894 = vlog2.pop %v3893
        %v3895 = vmul.f32 %v3894, 0.6931472
        %v3896 = vmul.f32 -0.5, %v3293
        %v3897 = vadd.f32 %v3896, 1.0
        %v3898 = vmul.f32 %v3897, %v3293
        %v3899 = vand.u32 2147483647, %v3293
        %vm3900 = vcmp.lt.f32.partialorder %v3899, 0.0004427343
        %v3901 = vsel %vm3900, %v3898, %v3895
        %v3902 = vadd.f32 %v3295, 1.0
        %v3903 = vlog2.pop %v3902
        %v3904 = vmul.f32 %v3903, 0.6931472
        %v3905 = vmul.f32 -0.5, %v3295
        %v3906 = vadd.f32 %v3905, 1.0
        %v3907 = vmul.f32 %v3906, %v3295
        %v3908 = vand.u32 2147483647, %v3295
        %vm3909 = vcmp.lt.f32.partialorder %v3908, 0.0004427343
        %v3910 = vsel %vm3909, %v3907, %v3904
        %v3911 = vadd.f32 %v3297, 1.0
        %v3912 = vlog2.pop %v3911
        %v3913 = vmul.f32 %v3912, 0.6931472
        %v3914 = vmul.f32 -0.5, %v3297
        %v3915 = vadd.f32 %v3914, 1.0
        %v3916 = vmul.f32 %v3915, %v3297
        %v3917 = vand.u32 2147483647, %v3297
        %vm3918 = vcmp.lt.f32.partialorder %v3917, 0.0004427343
        %v3919 = vsel %vm3918, %v3916, %v3913
        %v3920 = vadd.f32 %v3299, 1.0
        %v3921 = vlog2.pop %v3920
        %v3922 = vmul.f32 %v3921, 0.6931472
        %v3923 = vmul.f32 -0.5, %v3299
        %v3924 = vadd.f32 %v3923, 1.0
        %v3925 = vmul.f32 %v3924, %v3299
        %v3926 = vand.u32 2147483647, %v3299
        %vm3927 = vcmp.lt.f32.partialorder %v3926, 0.0004427343
        %v3928 = vsel %vm3927, %v3925, %v3922
        %v3929 = vadd.f32 %v3301, 1.0
        %v3930 = vlog2.pop %v3929
        %v3931 = vmul.f32 %v3930, 0.6931472
        %v3932 = vmul.f32 -0.5, %v3301
        %v3933 = vadd.f32 %v3932, 1.0
        %v3934 = vmul.f32 %v3933, %v3301
        %v3935 = vand.u32 2147483647, %v3301
        %vm3936 = vcmp.lt.f32.partialorder %v3935, 0.0004427343
        %v3937 = vsel %vm3936, %v3934, %v3931
        %v3938 = vadd.f32 %v3303, 1.0
        %v3939 = vlog2.pop %v3938
        %v3940 = vmul.f32 %v3939, 0.6931472
        %v3941 = vmul.f32 -0.5, %v3303
        %v3942 = vadd.f32 %v3941, 1.0
        %v3943 = vmul.f32 %v3942, %v3303
        %v3944 = vand.u32 2147483647, %v3303
        %vm3945 = vcmp.lt.f32.partialorder %v3944, 0.0004427343
        %v3946 = vsel %vm3945, %v3943, %v3940
        %v3947 = vadd.f32 %v3305, 1.0
        %v3948 = vlog2.pop %v3947
        %v3949 = vmul.f32 %v3948, 0.6931472
        %v3950 = vmul.f32 -0.5, %v3305
        %v3951 = vadd.f32 %v3950, 1.0
        %v3952 = vmul.f32 %v3951, %v3305
        %v3953 = vand.u32 2147483647, %v3305
        %vm3954 = vcmp.lt.f32.partialorder %v3953, 0.0004427343
        %v3955 = vsel %vm3954, %v3952, %v3949
        %v3956 = vadd.f32 %v3307, 1.0
        %v3957 = vlog2.pop %v3956
        %v3958 = vmul.f32 %v3957, 0.6931472
        %v3959 = vmul.f32 -0.5, %v3307
        %v3960 = vadd.f32 %v3959, 1.0
        %v3961 = vmul.f32 %v3960, %v3307
        %v3962 = vand.u32 2147483647, %v3307
        %vm3963 = vcmp.lt.f32.partialorder %v3962, 0.0004427343
        %v3964 = vsel %vm3963, %v3961, %v3958
        %v3965 = vadd.f32 %v3309, 1.0
        %v3966 = vlog2.pop %v3965
        %v3967 = vmul.f32 %v3966, 0.6931472
        %v3968 = vmul.f32 -0.5, %v3309
        %v3969 = vadd.f32 %v3968, 1.0
        %v3970 = vmul.f32 %v3969, %v3309
        %v3971 = vand.u32 2147483647, %v3309
        %vm3972 = vcmp.lt.f32.partialorder %v3971, 0.0004427343
        %v3973 = vsel %vm3972, %v3970, %v3967
        %v3974 = vadd.f32 %v3311, 1.0
        %v3975 = vlog2.pop %v3974
        %v3976 = vmul.f32 %v3975, 0.6931472
        %v3977 = vmul.f32 -0.5, %v3311
        %v3978 = vadd.f32 %v3977, 1.0
        %v3979 = vmul.f32 %v3978, %v3311
        %v3980 = vand.u32 2147483647, %v3311
        %vm3981 = vcmp.lt.f32.partialorder %v3980, 0.0004427343
        %v3982 = vsel %vm3981, %v3979, %v3976
        %v3983 = vadd.f32 %v3313, 1.0
        %v3984 = vlog2.pop %v3983
        %v3985 = vmul.f32 %v3984, 0.6931472
        %v3986 = vmul.f32 -0.5, %v3313
        %v3987 = vadd.f32 %v3986, 1.0
        %v3988 = vmul.f32 %v3987, %v3313
        %v3989 = vand.u32 2147483647, %v3313
        %vm3990 = vcmp.lt.f32.partialorder %v3989, 0.0004427343
        %v3991 = vsel %vm3990, %v3988, %v3985
        %v3992 = vadd.f32 %v3315, 1.0
        %v3993 = vlog2.pop %v3992
        %v3994 = vmul.f32 %v3993, 0.6931472
        %v3995 = vmul.f32 -0.5, %v3315
        %v3996 = vadd.f32 %v3995, 1.0
        %v3997 = vmul.f32 %v3996, %v3315
        %v3998 = vand.u32 2147483647, %v3315
        %vm3999 = vcmp.lt.f32.partialorder %v3998, 0.0004427343
        %v4000 = vsel %vm3999, %v3997, %v3994
        %v4001 = vadd.f32 %v3317, 1.0
        %v4002 = vlog2.pop %v4001
        %v4003 = vmul.f32 %v4002, 0.6931472
        %v4004 = vmul.f32 -0.5, %v3317
        %v4005 = vadd.f32 %v4004, 1.0
        %v4006 = vmul.f32 %v4005, %v3317
        %v4007 = vand.u32 2147483647, %v3317
        %vm4008 = vcmp.lt.f32.partialorder %v4007, 0.0004427343
        %v4009 = vsel %vm4008, %v4006, %v4003
        %v4010 = vadd.f32 %v3319, 1.0
        %v4011 = vlog2.pop %v4010
        %v4012 = vmul.f32 %v4011, 0.6931472
        %v4013 = vmul.f32 -0.5, %v3319
        %v4014 = vadd.f32 %v4013, 1.0
        %v4015 = vmul.f32 %v4014, %v3319
        %v4016 = vand.u32 2147483647, %v3319
        %vm4017 = vcmp.lt.f32.partialorder %v4016, 0.0004427343
        %v4018 = vsel %vm4017, %v4015, %v4012
        %v4019 = vadd.f32 %v3321, 1.0
        %v4020 = vlog2.pop %v4019
        %v4021 = vmul.f32 %v4020, 0.6931472
        %v4022 = vmul.f32 -0.5, %v3321
        %v4023 = vadd.f32 %v4022, 1.0
        %v4024 = vmul.f32 %v4023, %v3321
        %v4025 = vand.u32 2147483647, %v3321
        %vm4026 = vcmp.lt.f32.partialorder %v4025, 0.0004427343
        %v4027 = vsel %vm4026, %v4024, %v4021
        %v4028 = vadd.f32 %v3323, 1.0
        %v4029 = vlog2.pop %v4028
        %v4030 = vmul.f32 %v4029, 0.6931472
        %v4031 = vmul.f32 -0.5, %v3323
        %v4032 = vadd.f32 %v4031, 1.0
        %v4033 = vmul.f32 %v4032, %v3323
        %v4034 = vand.u32 2147483647, %v3323
        %vm4035 = vcmp.lt.f32.partialorder %v4034, 0.0004427343
        %v4036 = vsel %vm4035, %v4033, %v4030
        %v4037 = vadd.f32 %v3325, 1.0
        %v4038 = vlog2.pop %v4037
        %v4039 = vmul.f32 %v4038, 0.6931472
        %v4040 = vmul.f32 -0.5, %v3325
        %v4041 = vadd.f32 %v4040, 1.0
        %v4042 = vmul.f32 %v4041, %v3325
        %v4043 = vand.u32 2147483647, %v3325
        %vm4044 = vcmp.lt.f32.partialorder %v4043, 0.0004427343
        %v4045 = vsel %vm4044, %v4042, %v4039
        %v4046 = vmin.f32 %v1806, 0.0
        %v4047 = vmin.f32 %v1807, 0.0
        %v4048 = vmin.f32 %v1808, 0.0
        %v4049 = vmin.f32 %v1809, 0.0
        %v4050 = vmin.f32 %v1810, 0.0
        %v4051 = vmin.f32 %v1811, 0.0
        %v4052 = vmin.f32 %v1812, 0.0
        %v4053 = vmin.f32 %v1813, 0.0
        %v4054 = vmin.f32 %v1814, 0.0
        %v4055 = vmin.f32 %v1815, 0.0
        %v4056 = vmin.f32 %v1816, 0.0
        %v4057 = vmin.f32 %v1817, 0.0
        %v4058 = vmin.f32 %v1818, 0.0
        %v4059 = vmin.f32 %v1819, 0.0
        %v4060 = vmin.f32 %v1820, 0.0
        %v4061 = vmin.f32 %v1821, 0.0
        %v4062 = vmin.f32 %v1822, 0.0
        %v4063 = vmin.f32 %v1823, 0.0
        %v4064 = vmin.f32 %v1824, 0.0
        %v4065 = vmin.f32 %v1825, 0.0
        %v4066 = vmin.f32 %v1826, 0.0
        %v4067 = vmin.f32 %v1827, 0.0
        %v4068 = vmin.f32 %v1828, 0.0
        %v4069 = vmin.f32 %v1829, 0.0
        %v4070 = vmin.f32 %v1830, 0.0
        %v4071 = vmin.f32 %v1831, 0.0
        %v4072 = vmin.f32 %v1832, 0.0
        %v4073 = vmin.f32 %v1833, 0.0
        %v4074 = vmin.f32 %v1834, 0.0
        %v4075 = vmin.f32 %v1835, 0.0
        %v4076 = vmin.f32 %v1836, 0.0
        %v4077 = vmin.f32 %v1837, 0.0
        %v4078 = vmin.f32 %v1838, 0.0
        %v4079 = vmin.f32 %v1839, 0.0
        %v4080 = vmin.f32 %v1840, 0.0
        %v4081 = vmin.f32 %v1841, 0.0
        %v4082 = vmin.f32 %v1842, 0.0
        %v4083 = vmin.f32 %v1843, 0.0
        %v4084 = vmin.f32 %v1844, 0.0
        %v4085 = vmin.f32 %v1845, 0.0
        %v4086 = vmin.f32 %v1846, 0.0
        %v4087 = vmin.f32 %v1847, 0.0
        %v4088 = vmin.f32 %v1848, 0.0
        %v4089 = vmin.f32 %v1849, 0.0
        %v4090 = vmin.f32 %v1850, 0.0
        %v4091 = vmin.f32 %v1851, 0.0
        %v4092 = vmin.f32 %v1852, 0.0
        %v4093 = vmin.f32 %v1853, 0.0
        %v4094 = vmin.f32 %v1854, 0.0
        %v4095 = vmin.f32 %v1855, 0.0
        %v4096 = vmin.f32 %v1856, 0.0
        %v4097 = vmin.f32 %v1857, 0.0
        %v4098 = vmin.f32 %v1858, 0.0
        %v4099 = vmin.f32 %v1859, 0.0
        %v4100 = vmin.f32 %v1860, 0.0
        %v4101 = vmin.f32 %v1861, 0.0
        %v4102 = vmin.f32 %v1862, 0.0
        %v4103 = vmin.f32 %v1863, 0.0
        %v4104 = vmin.f32 %v1864, 0.0
        %v4105 = vmin.f32 %v1865, 0.0
        %v4106 = vmin.f32 %v1866, 0.0
        %v4107 = vmin.f32 %v1867, 0.0
        %v4108 = vmin.f32 %v1868, 0.0
        %v4109 = vmin.f32 %v1869, 0.0
        %v4110 = vmin.f32 %v1870, 0.0
        %v4111 = vmin.f32 %v1871, 0.0
        %v4112 = vmin.f32 %v1872, 0.0
        %v4113 = vmin.f32 %v1873, 0.0
        %v4114 = vmin.f32 %v1874, 0.0
        %v4115 = vmin.f32 %v1875, 0.0
        %v4116 = vmin.f32 %v1876, 0.0
        %v4117 = vmin.f32 %v1877, 0.0
        %v4118 = vmin.f32 %v1878, 0.0
        %v4119 = vmin.f32 %v1879, 0.0
        %v4120 = vmin.f32 %v1880, 0.0
        %v4121 = vmin.f32 %v1881, 0.0
        %v4122 = vmin.f32 %v1882, 0.0
        %v4123 = vmin.f32 %v1883, 0.0
        %v4124 = vmin.f32 %v1884, 0.0
        %v4125 = vmin.f32 %v1885, 0.0
        %v4126 = vsub.f32 %v4046, %v2294
        %v4127 = vsub.f32 %v4047, %v2303
        %v4128 = vsub.f32 %v4048, %v2312
        %v4129 = vsub.f32 %v4049, %v2321
        %v4130 = vsub.f32 %v4050, %v2330
        %v4131 = vsub.f32 %v4051, %v2339
        %v4132 = vsub.f32 %v4052, %v2348
        %v4133 = vsub.f32 %v4053, %v2357
        %v4134 = vsub.f32 %v4054, %v2366
        %v4135 = vsub.f32 %v4055, %v2375
        %v4136 = vsub.f32 %v4056, %v2384
        %v4137 = vsub.f32 %v4057, %v2393
        %v4138 = vsub.f32 %v4058, %v2402
        %v4139 = vsub.f32 %v4059, %v2411
        %v4140 = vsub.f32 %v4060, %v2420
        %v4141 = vsub.f32 %v4061, %v2429
        %v4142 = vsub.f32 %v4062, %v2438
        %v4143 = vsub.f32 %v4063, %v2447
        %v4144 = vsub.f32 %v4064, %v2456
        %v4145 = vsub.f32 %v4065, %v2465
        %v4146 = vsub.f32 %v4066, %v2474
        %v4147 = vsub.f32 %v4067, %v2483
        %v4148 = vsub.f32 %v4068, %v2492
        %v4149 = vsub.f32 %v4069, %v2501
        %v4150 = vsub.f32 %v4070, %v2510
        %v4151 = vsub.f32 %v4071, %v2519
        %v4152 = vsub.f32 %v4072, %v2528
        %v4153 = vsub.f32 %v4073, %v2537
        %v4154 = vsub.f32 %v4074, %v2546
        %v4155 = vsub.f32 %v4075, %v2555
        %v4156 = vsub.f32 %v4076, %v2564
        %v4157 = vsub.f32 %v4077, %v2573
        %v4158 = vsub.f32 %v4078, %v2582
        %v4159 = vsub.f32 %v4079, %v2591
        %v4160 = vsub.f32 %v4080, %v2600
        %v4161 = vsub.f32 %v4081, %v2609
        %v4162 = vsub.f32 %v4082, %v2618
        %v4163 = vsub.f32 %v4083, %v2627
        %v4164 = vsub.f32 %v4084, %v2636
        %v4165 = vsub.f32 %v4085, %v2645
        %v4166 = vsub.f32 %v4086, %v2654
        %v4167 = vsub.f32 %v4087, %v2663
        %v4168 = vsub.f32 %v4088, %v2672
        %v4169 = vsub.f32 %v4089, %v2681
        %v4170 = vsub.f32 %v4090, %v2690
        %v4171 = vsub.f32 %v4091, %v2699
        %v4172 = vsub.f32 %v4092, %v2708
        %v4173 = vsub.f32 %v4093, %v2717
        %v4174 = vsub.f32 %v4094, %v2726
        %v4175 = vsub.f32 %v4095, %v2735
        %v4176 = vsub.f32 %v4096, %v2744
        %v4177 = vsub.f32 %v4097, %v2753
        %v4178 = vsub.f32 %v4098, %v2762
        %v4179 = vsub.f32 %v4099, %v2771
        %v4180 = vsub.f32 %v4100, %v2780
        %v4181 = vsub.f32 %v4101, %v2789
        %v4182 = vsub.f32 %v4102, %v2798
        %v4183 = vsub.f32 %v4103, %v2807
        %v4184 = vsub.f32 %v4104, %v2816
        %v4185 = vsub.f32 %v4105, %v2825
        %v4186 = vsub.f32 %v4106, %v2834
        %v4187 = vsub.f32 %v4107, %v2843
        %v4188 = vsub.f32 %v4108, %v2852
        %v4189 = vsub.f32 %v4109, %v2861
        %v4190 = vsub.f32 %v4110, %v2870
        %v4191 = vsub.f32 %v4111, %v2879
        %v4192 = vsub.f32 %v4112, %v2888
        %v4193 = vsub.f32 %v4113, %v2897
        %v4194 = vsub.f32 %v4114, %v2906
        %v4195 = vsub.f32 %v4115, %v2915
        %v4196 = vsub.f32 %v4116, %v2924
        %v4197 = vsub.f32 %v4117, %v2933
        %v4198 = vsub.f32 %v4118, %v2942
        %v4199 = vsub.f32 %v4119, %v2951
        %v4200 = vsub.f32 %v4120, %v2960
        %v4201 = vsub.f32 %v4121, %v2969
        %v4202 = vsub.f32 %v4122, %v2978
        %v4203 = vsub.f32 %v4123, %v2987
        %v4204 = vsub.f32 %v4124, %v2996
        %v4205 = vsub.f32 %v4125, %v3005
        %v4206 = vmin.f32 %v1886, 0.0
        %v4207 = vmin.f32 %v1887, 0.0
        %v4208 = vmin.f32 %v1888, 0.0
        %v4209 = vmin.f32 %v1889, 0.0
        %v4210 = vmin.f32 %v1890, 0.0
        %v4211 = vmin.f32 %v1891, 0.0
        %v4212 = vmin.f32 %v1892, 0.0
        %v4213 = vmin.f32 %v1893, 0.0
        %v4214 = vmin.f32 %v1894, 0.0
        %v4215 = vmin.f32 %v1895, 0.0
        %v4216 = vmin.f32 %v1896, 0.0
        %v4217 = vmin.f32 %v1897, 0.0
        %v4218 = vmin.f32 %v1898, 0.0
        %v4219 = vmin.f32 %v1899, 0.0
        %v4220 = vmin.f32 %v1900, 0.0
        %v4221 = vmin.f32 %v1901, 0.0
        %v4222 = vmin.f32 %v1902, 0.0
        %v4223 = vmin.f32 %v1903, 0.0
        %v4224 = vmin.f32 %v1904, 0.0
        %v4225 = vmin.f32 %v1905, 0.0
        %v4226 = vmin.f32 %v1906, 0.0
        %v4227 = vmin.f32 %v1907, 0.0
        %v4228 = vmin.f32 %v1908, 0.0
        %v4229 = vmin.f32 %v1909, 0.0
        %v4230 = vmin.f32 %v1910, 0.0
        %v4231 = vmin.f32 %v1911, 0.0
        %v4232 = vmin.f32 %v1912, 0.0
        %v4233 = vmin.f32 %v1913, 0.0
        %v4234 = vmin.f32 %v1914, 0.0
        %v4235 = vmin.f32 %v1915, 0.0
        %v4236 = vmin.f32 %v1916, 0.0
        %v4237 = vmin.f32 %v1917, 0.0
        %v4238 = vmin.f32 %v1918, 0.0
        %v4239 = vmin.f32 %v1919, 0.0
        %v4240 = vmin.f32 %v1920, 0.0
        %v4241 = vmin.f32 %v1921, 0.0
        %v4242 = vmin.f32 %v1922, 0.0
        %v4243 = vmin.f32 %v1923, 0.0
        %v4244 = vmin.f32 %v1924, 0.0
        %v4245 = vmin.f32 %v1925, 0.0
        %v4246 = vmin.f32 %v1926, 0.0
        %v4247 = vmin.f32 %v1927, 0.0
        %v4248 = vmin.f32 %v1928, 0.0
        %v4249 = vmin.f32 %v1929, 0.0
        %v4250 = vmin.f32 %v1930, 0.0
        %v4251 = vmin.f32 %v1931, 0.0
        %v4252 = vmin.f32 %v1932, 0.0
        %v4253 = vmin.f32 %v1933, 0.0
        %v4254 = vmin.f32 %v1934, 0.0
        %v4255 = vmin.f32 %v1935, 0.0
        %v4256 = vmin.f32 %v1936, 0.0
        %v4257 = vmin.f32 %v1937, 0.0
        %v4258 = vmin.f32 %v1938, 0.0
        %v4259 = vmin.f32 %v1939, 0.0
        %v4260 = vmin.f32 %v1940, 0.0
        %v4261 = vmin.f32 %v1941, 0.0
        %v4262 = vmin.f32 %v1942, 0.0
        %v4263 = vmin.f32 %v1943, 0.0
        %v4264 = vmin.f32 %v1944, 0.0
        %v4265 = vmin.f32 %v1945, 0.0
        %v4266 = vmin.f32 %v1946, 0.0
        %v4267 = vmin.f32 %v1947, 0.0
        %v4268 = vmin.f32 %v1948, 0.0
        %v4269 = vmin.f32 %v1949, 0.0
        %v4270 = vmin.f32 %v1950, 0.0
        %v4271 = vmin.f32 %v1951, 0.0
        %v4272 = vmin.f32 %v1952, 0.0
        %v4273 = vmin.f32 %v1953, 0.0
        %v4274 = vmin.f32 %v1954, 0.0
        %v4275 = vmin.f32 %v1955, 0.0
        %v4276 = vmin.f32 %v1956, 0.0
        %v4277 = vmin.f32 %v1957, 0.0
        %v4278 = vmin.f32 %v1958, 0.0
        %v4279 = vmin.f32 %v1959, 0.0
        %v4280 = vmin.f32 %v1960, 0.0
        %v4281 = vmin.f32 %v1961, 0.0
        %v4282 = vmin.f32 %v1962, 0.0
        %v4283 = vmin.f32 %v1963, 0.0
        %v4284 = vmin.f32 %v1964, 0.0
        %v4285 = vmin.f32 %v1965, 0.0
        %v4286 = vsub.f32 %v4206, %v3334
        %v4287 = vsub.f32 %v4207, %v3343
        %v4288 = vsub.f32 %v4208, %v3352
        %v4289 = vsub.f32 %v4209, %v3361
        %v4290 = vsub.f32 %v4210, %v3370
        %v4291 = vsub.f32 %v4211, %v3379
        %v4292 = vsub.f32 %v4212, %v3388
        %v4293 = vsub.f32 %v4213, %v3397
        %v4294 = vsub.f32 %v4214, %v3406
        %v4295 = vsub.f32 %v4215, %v3415
        %v4296 = vsub.f32 %v4216, %v3424
        %v4297 = vsub.f32 %v4217, %v3433
        %v4298 = vsub.f32 %v4218, %v3442
        %v4299 = vsub.f32 %v4219, %v3451
        %v4300 = vsub.f32 %v4220, %v3460
        %v4301 = vsub.f32 %v4221, %v3469
        %v4302 = vsub.f32 %v4222, %v3478
        %v4303 = vsub.f32 %v4223, %v3487
        %v4304 = vsub.f32 %v4224, %v3496
        %v4305 = vsub.f32 %v4225, %v3505
        %v4306 = vsub.f32 %v4226, %v3514
        %v4307 = vsub.f32 %v4227, %v3523
        %v4308 = vsub.f32 %v4228, %v3532
        %v4309 = vsub.f32 %v4229, %v3541
        %v4310 = vsub.f32 %v4230, %v3550
        %v4311 = vsub.f32 %v4231, %v3559
        %v4312 = vsub.f32 %v4232, %v3568
        %v4313 = vsub.f32 %v4233, %v3577
        %v4314 = vsub.f32 %v4234, %v3586
        %v4315 = vsub.f32 %v4235, %v3595
        %v4316 = vsub.f32 %v4236, %v3604
        %v4317 = vsub.f32 %v4237, %v3613
        %v4318 = vsub.f32 %v4238, %v3622
        %v4319 = vsub.f32 %v4239, %v3631
        %v4320 = vsub.f32 %v4240, %v3640
        %v4321 = vsub.f32 %v4241, %v3649
        %v4322 = vsub.f32 %v4242, %v3658
        %v4323 = vsub.f32 %v4243, %v3667
        %v4324 = vsub.f32 %v4244, %v3676
        %v4325 = vsub.f32 %v4245, %v3685
        %v4326 = vsub.f32 %v4246, %v3694
        %v4327 = vsub.f32 %v4247, %v3703
        %v4328 = vsub.f32 %v4248, %v3712
        %v4329 = vsub.f32 %v4249, %v3721
        %v4330 = vsub.f32 %v4250, %v3730
        %v4331 = vsub.f32 %v4251, %v3739
        %v4332 = vsub.f32 %v4252, %v3748
        %v4333 = vsub.f32 %v4253, %v3757
        %v4334 = vsub.f32 %v4254, %v3766
        %v4335 = vsub.f32 %v4255, %v3775
        %v4336 = vsub.f32 %v4256, %v3784
        %v4337 = vsub.f32 %v4257, %v3793
        %v4338 = vsub.f32 %v4258, %v3802
        %v4339 = vsub.f32 %v4259, %v3811
        %v4340 = vsub.f32 %v4260, %v3820
        %v4341 = vsub.f32 %v4261, %v3829
        %v4342 = vsub.f32 %v4262, %v3838
        %v4343 = vsub.f32 %v4263, %v3847
        %v4344 = vsub.f32 %v4264, %v3856
        %v4345 = vsub.f32 %v4265, %v3865
        %v4346 = vsub.f32 %v4266, %v3874
        %v4347 = vsub.f32 %v4267, %v3883
        %v4348 = vsub.f32 %v4268, %v3892
        %v4349 = vsub.f32 %v4269, %v3901
        %v4350 = vsub.f32 %v4270, %v3910
        %v4351 = vsub.f32 %v4271, %v3919
        %v4352 = vsub.f32 %v4272, %v3928
        %v4353 = vsub.f32 %v4273, %v3937
        %v4354 = vsub.f32 %v4274, %v3946
        %v4355 = vsub.f32 %v4275, %v3955
        %v4356 = vsub.f32 %v4276, %v3964
        %v4357 = vsub.f32 %v4277, %v3973
        %v4358 = vsub.f32 %v4278, %v3982
        %v4359 = vsub.f32 %v4279, %v3991
        %v4360 = vsub.f32 %v4280, %v4000
        %v4361 = vsub.f32 %v4281, %v4009
        %v4362 = vsub.f32 %v4282, %v4018
        %v4363 = vsub.f32 %v4283, %v4027
        %v4364 = vsub.f32 %v4284, %v4036
        %v4365 = vsub.f32 %v4285, %v4045
        %v4366 = vsub.f32 %v4126, %v4286
        %v4367 = vsub.f32 %v4127, %v4287
        %v4368 = vsub.f32 %v4128, %v4288
        %v4369 = vsub.f32 %v4129, %v4289
        %v4370 = vsub.f32 %v4130, %v4290
        %v4371 = vsub.f32 %v4131, %v4291
        %v4372 = vsub.f32 %v4132, %v4292
        %v4373 = vsub.f32 %v4133, %v4293
        %v4374 = vsub.f32 %v4134, %v4294
        %v4375 = vsub.f32 %v4135, %v4295
        %v4376 = vsub.f32 %v4136, %v4296
        %v4377 = vsub.f32 %v4137, %v4297
        %v4378 = vsub.f32 %v4138, %v4298
        %v4379 = vsub.f32 %v4139, %v4299
        %v4380 = vsub.f32 %v4140, %v4300
        %v4381 = vsub.f32 %v4141, %v4301
        %v4382 = vsub.f32 %v4142, %v4302
        %v4383 = vsub.f32 %v4143, %v4303
        %v4384 = vsub.f32 %v4144, %v4304
        %v4385 = vsub.f32 %v4145, %v4305
        %v4386 = vsub.f32 %v4146, %v4306
        %v4387 = vsub.f32 %v4147, %v4307
        %v4388 = vsub.f32 %v4148, %v4308
        %v4389 = vsub.f32 %v4149, %v4309
        %v4390 = vsub.f32 %v4150, %v4310
        %v4391 = vsub.f32 %v4151, %v4311
        %v4392 = vsub.f32 %v4152, %v4312
        %v4393 = vsub.f32 %v4153, %v4313
        %v4394 = vsub.f32 %v4154, %v4314
        %v4395 = vsub.f32 %v4155, %v4315
        %v4396 = vsub.f32 %v4156, %v4316
        %v4397 = vsub.f32 %v4157, %v4317
        %v4398 = vsub.f32 %v4158, %v4318
        %v4399 = vsub.f32 %v4159, %v4319
        %v4400 = vsub.f32 %v4160, %v4320
        %v4401 = vsub.f32 %v4161, %v4321
        %v4402 = vsub.f32 %v4162, %v4322
        %v4403 = vsub.f32 %v4163, %v4323
        %v4404 = vsub.f32 %v4164, %v4324
        %v4405 = vsub.f32 %v4165, %v4325
        %v4406 = vsub.f32 %v4166, %v4326
        %v4407 = vsub.f32 %v4167, %v4327
        %v4408 = vsub.f32 %v4168, %v4328
        %v4409 = vsub.f32 %v4169, %v4329
        %v4410 = vsub.f32 %v4170, %v4330
        %v4411 = vsub.f32 %v4171, %v4331
        %v4412 = vsub.f32 %v4172, %v4332
        %v4413 = vsub.f32 %v4173, %v4333
        %v4414 = vsub.f32 %v4174, %v4334
        %v4415 = vsub.f32 %v4175, %v4335
        %v4416 = vsub.f32 %v4176, %v4336
        %v4417 = vsub.f32 %v4177, %v4337
        %v4418 = vsub.f32 %v4178, %v4338
        %v4419 = vsub.f32 %v4179, %v4339
        %v4420 = vsub.f32 %v4180, %v4340
        %v4421 = vsub.f32 %v4181, %v4341
        %v4422 = vsub.f32 %v4182, %v4342
        %v4423 = vsub.f32 %v4183, %v4343
        %v4424 = vsub.f32 %v4184, %v4344
        %v4425 = vsub.f32 %v4185, %v4345
        %v4426 = vsub.f32 %v4186, %v4346
        %v4427 = vsub.f32 %v4187, %v4347
        %v4428 = vsub.f32 %v4188, %v4348
        %v4429 = vsub.f32 %v4189, %v4349
        %v4430 = vsub.f32 %v4190, %v4350
        %v4431 = vsub.f32 %v4191, %v4351
        %v4432 = vsub.f32 %v4192, %v4352
        %v4433 = vsub.f32 %v4193, %v4353
        %v4434 = vsub.f32 %v4194, %v4354
        %v4435 = vsub.f32 %v4195, %v4355
        %v4436 = vsub.f32 %v4196, %v4356
        %v4437 = vsub.f32 %v4197, %v4357
        %v4438 = vsub.f32 %v4198, %v4358
        %v4439 = vsub.f32 %v4199, %v4359
        %v4440 = vsub.f32 %v4200, %v4360
        %v4441 = vsub.f32 %v4201, %v4361
        %v4442 = vsub.f32 %v4202, %v4362
        %v4443 = vsub.f32 %v4203, %v4363
        %v4444 = vsub.f32 %v4204, %v4364
        %v4445 = vsub.f32 %v4205, %v4365
        %v4446 = vmul.f32 %v4366, 1.442695
        %v4447 = vpow.pop %v4446
        %v4448 = vmul.f32 %v4367, 1.442695
        %v4449 = vpow.pop %v4448
        %v4450 = vmul.f32 %v4368, 1.442695
        %v4451 = vpow.pop %v4450
        %v4452 = vmul.f32 %v4369, 1.442695
        %v4453 = vpow.pop %v4452
        %v4454 = vmul.f32 %v4370, 1.442695
        %v4455 = vpow.pop %v4454
        %v4456 = vmul.f32 %v4371, 1.442695
        %v4457 = vpow.pop %v4456
        %v4458 = vmul.f32 %v4372, 1.442695
        %v4459 = vpow.pop %v4458
        %v4460 = vmul.f32 %v4373, 1.442695
        %v4461 = vpow.pop %v4460
        %v4462 = vmul.f32 %v4374, 1.442695
        %v4463 = vpow.pop %v4462
        %v4464 = vmul.f32 %v4375, 1.442695
        %v4465 = vpow.pop %v4464
        %v4466 = vmul.f32 %v4376, 1.442695
        %v4467 = vpow.pop %v4466
        %v4468 = vmul.f32 %v4377, 1.442695
        %v4469 = vpow.pop %v4468
        %v4470 = vmul.f32 %v4378, 1.442695
        %v4471 = vpow.pop %v4470
        %v4472 = vmul.f32 %v4379, 1.442695
        %v4473 = vpow.pop %v4472
        %v4474 = vmul.f32 %v4380, 1.442695
        %v4475 = vpow.pop %v4474
        %v4476 = vmul.f32 %v4381, 1.442695
        %v4477 = vpow.pop %v4476
        %v4478 = vmul.f32 %v4382, 1.442695
        %v4479 = vpow.pop %v4478
        %v4480 = vmul.f32 %v4383, 1.442695
        %v4481 = vpow.pop %v4480
        %v4482 = vmul.f32 %v4384, 1.442695
        %v4483 = vpow.pop %v4482
        %v4484 = vmul.f32 %v4385, 1.442695
        %v4485 = vpow.pop %v4484
        %v4486 = vmul.f32 %v4386, 1.442695
        %v4487 = vpow.pop %v4486
        %v4488 = vmul.f32 %v4387, 1.442695
        %v4489 = vpow.pop %v4488
        %v4490 = vmul.f32 %v4388, 1.442695
        %v4491 = vpow.pop %v4490
        %v4492 = vmul.f32 %v4389, 1.442695
        %v4493 = vpow.pop %v4492
        %v4494 = vmul.f32 %v4390, 1.442695
        %v4495 = vpow.pop %v4494
        %v4496 = vmul.f32 %v4391, 1.442695
        %v4497 = vpow.pop %v4496
        %v4498 = vmul.f32 %v4392, 1.442695
        %v4499 = vpow.pop %v4498
        %v4500 = vmul.f32 %v4393, 1.442695
        %v4501 = vpow.pop %v4500
        %v4502 = vmul.f32 %v4394, 1.442695
        %v4503 = vpow.pop %v4502
        %v4504 = vmul.f32 %v4395, 1.442695
        %v4505 = vpow.pop %v4504
        %v4506 = vmul.f32 %v4396, 1.442695
        %v4507 = vpow.pop %v4506
        %v4508 = vmul.f32 %v4397, 1.442695
        %v4509 = vpow.pop %v4508
        %v4510 = vmul.f32 %v4398, 1.442695
        %v4511 = vpow.pop %v4510
        %v4512 = vmul.f32 %v4399, 1.442695
        %v4513 = vpow.pop %v4512
        %v4514 = vmul.f32 %v4400, 1.442695
        %v4515 = vpow.pop %v4514
        %v4516 = vmul.f32 %v4401, 1.442695
        %v4517 = vpow.pop %v4516
        %v4518 = vmul.f32 %v4402, 1.442695
        %v4519 = vpow.pop %v4518
        %v4520 = vmul.f32 %v4403, 1.442695
        %v4521 = vpow.pop %v4520
        %v4522 = vmul.f32 %v4404, 1.442695
        %v4523 = vpow.pop %v4522
        %v4524 = vmul.f32 %v4405, 1.442695
        %v4525 = vpow.pop %v4524
        %v4526 = vmul.f32 %v4406, 1.442695
        %v4527 = vpow.pop %v4526
        %v4528 = vmul.f32 %v4407, 1.442695
        %v4529 = vpow.pop %v4528
        %v4530 = vmul.f32 %v4408, 1.442695
        %v4531 = vpow.pop %v4530
        %v4532 = vmul.f32 %v4409, 1.442695
        %v4533 = vpow.pop %v4532
        %v4534 = vmul.f32 %v4410, 1.442695
        %v4535 = vpow.pop %v4534
        %v4536 = vmul.f32 %v4411, 1.442695
        %v4537 = vpow.pop %v4536
        %v4538 = vmul.f32 %v4412, 1.442695
        %v4539 = vpow.pop %v4538
        %v4540 = vmul.f32 %v4413, 1.442695
        %v4541 = vpow.pop %v4540
        %v4542 = vmul.f32 %v4414, 1.442695
        %v4543 = vpow.pop %v4542
        %v4544 = vmul.f32 %v4415, 1.442695
        %v4545 = vpow.pop %v4544
        %v4546 = vmul.f32 %v4416, 1.442695
        %v4547 = vpow.pop %v4546
        %v4548 = vmul.f32 %v4417, 1.442695
        %v4549 = vpow.pop %v4548
        %v4550 = vmul.f32 %v4418, 1.442695
        %v4551 = vpow.pop %v4550
        %v4552 = vmul.f32 %v4419, 1.442695
        %v4553 = vpow.pop %v4552
        %v4554 = vmul.f32 %v4420, 1.442695
        %v4555 = vpow.pop %v4554
        %v4556 = vmul.f32 %v4421, 1.442695
        %v4557 = vpow.pop %v4556
        %v4558 = vmul.f32 %v4422, 1.442695
        %v4559 = vpow.pop %v4558
        %v4560 = vmul.f32 %v4423, 1.442695
        %v4561 = vpow.pop %v4560
        %v4562 = vmul.f32 %v4424, 1.442695
        %v4563 = vpow.pop %v4562
        %v4564 = vmul.f32 %v4425, 1.442695
        %v4565 = vpow.pop %v4564
        %v4566 = vmul.f32 %v4426, 1.442695
        %v4567 = vpow.pop %v4566
        %v4568 = vmul.f32 %v4427, 1.442695
        %v4569 = vpow.pop %v4568
        %v4570 = vmul.f32 %v4428, 1.442695
        %v4571 = vpow.pop %v4570
        %v4572 = vmul.f32 %v4429, 1.442695
        %v4573 = vpow.pop %v4572
        %v4574 = vmul.f32 %v4430, 1.442695
        %v4575 = vpow.pop %v4574
        %v4576 = vmul.f32 %v4431, 1.442695
        %v4577 = vpow.pop %v4576
        %v4578 = vmul.f32 %v4432, 1.442695
        %v4579 = vpow.pop %v4578
        %v4580 = vmul.f32 %v4433, 1.442695
        %v4581 = vpow.pop %v4580
        %v4582 = vmul.f32 %v4434, 1.442695
        %v4583 = vpow.pop %v4582
        %v4584 = vmul.f32 %v4435, 1.442695
        %v4585 = vpow.pop %v4584
        %v4586 = vmul.f32 %v4436, 1.442695
        %v4587 = vpow.pop %v4586
        %v4588 = vmul.f32 %v4437, 1.442695
        %v4589 = vpow.pop %v4588
        %v4590 = vmul.f32 %v4438, 1.442695
        %v4591 = vpow.pop %v4590
        %v4592 = vmul.f32 %v4439, 1.442695
        %v4593 = vpow.pop %v4592
        %v4594 = vmul.f32 %v4440, 1.442695
        %v4595 = vpow.pop %v4594
        %v4596 = vmul.f32 %v4441, 1.442695
        %v4597 = vpow.pop %v4596
        %v4598 = vmul.f32 %v4442, 1.442695
        %v4599 = vpow.pop %v4598
        %v4600 = vmul.f32 %v4443, 1.442695
        %v4601 = vpow.pop %v4600
        %v4602 = vmul.f32 %v4444, 1.442695
        %v4603 = vpow.pop %v4602
        %v4604 = vmul.f32 %v4445, 1.442695
        %v4605 = vpow.pop %v4604
        %v4606 = vsub.f32 1.0, %v4447
        %v4607 = vsub.f32 1.0, %v4449
        %v4608 = vsub.f32 1.0, %v4451
        %v4609 = vsub.f32 1.0, %v4453
        %v4610 = vsub.f32 1.0, %v4455
        %v4611 = vsub.f32 1.0, %v4457
        %v4612 = vsub.f32 1.0, %v4459
        %v4613 = vsub.f32 1.0, %v4461
        %v4614 = vsub.f32 1.0, %v4463
        %v4615 = vsub.f32 1.0, %v4465
        %v4616 = vsub.f32 1.0, %v4467
        %v4617 = vsub.f32 1.0, %v4469
        %v4618 = vsub.f32 1.0, %v4471
        %v4619 = vsub.f32 1.0, %v4473
        %v4620 = vsub.f32 1.0, %v4475
        %v4621 = vsub.f32 1.0, %v4477
        %v4622 = vsub.f32 1.0, %v4479
        %v4623 = vsub.f32 1.0, %v4481
        %v4624 = vsub.f32 1.0, %v4483
        %v4625 = vsub.f32 1.0, %v4485
        %v4626 = vsub.f32 1.0, %v4487
        %v4627 = vsub.f32 1.0, %v4489
        %v4628 = vsub.f32 1.0, %v4491
        %v4629 = vsub.f32 1.0, %v4493
        %v4630 = vsub.f32 1.0, %v4495
        %v4631 = vsub.f32 1.0, %v4497
        %v4632 = vsub.f32 1.0, %v4499
        %v4633 = vsub.f32 1.0, %v4501
        %v4634 = vsub.f32 1.0, %v4503
        %v4635 = vsub.f32 1.0, %v4505
        %v4636 = vsub.f32 1.0, %v4507
        %v4637 = vsub.f32 1.0, %v4509
        %v4638 = vsub.f32 1.0, %v4511
        %v4639 = vsub.f32 1.0, %v4513
        %v4640 = vsub.f32 1.0, %v4515
        %v4641 = vsub.f32 1.0, %v4517
        %v4642 = vsub.f32 1.0, %v4519
        %v4643 = vsub.f32 1.0, %v4521
        %v4644 = vsub.f32 1.0, %v4523
        %v4645 = vsub.f32 1.0, %v4525
        %v4646 = vsub.f32 1.0, %v4527
        %v4647 = vsub.f32 1.0, %v4529
        %v4648 = vsub.f32 1.0, %v4531
        %v4649 = vsub.f32 1.0, %v4533
        %v4650 = vsub.f32 1.0, %v4535
        %v4651 = vsub.f32 1.0, %v4537
        %v4652 = vsub.f32 1.0, %v4539
        %v4653 = vsub.f32 1.0, %v4541
        %v4654 = vsub.f32 1.0, %v4543
        %v4655 = vsub.f32 1.0, %v4545
        %v4656 = vsub.f32 1.0, %v4547
        %v4657 = vsub.f32 1.0, %v4549
        %v4658 = vsub.f32 1.0, %v4551
        %v4659 = vsub.f32 1.0, %v4553
        %v4660 = vsub.f32 1.0, %v4555
        %v4661 = vsub.f32 1.0, %v4557
        %v4662 = vsub.f32 1.0, %v4559
        %v4663 = vsub.f32 1.0, %v4561
        %v4664 = vsub.f32 1.0, %v4563
        %v4665 = vsub.f32 1.0, %v4565
        %v4666 = vsub.f32 1.0, %v4567
        %v4667 = vsub.f32 1.0, %v4569
        %v4668 = vsub.f32 1.0, %v4571
        %v4669 = vsub.f32 1.0, %v4573
        %v4670 = vsub.f32 1.0, %v4575
        %v4671 = vsub.f32 1.0, %v4577
        %v4672 = vsub.f32 1.0, %v4579
        %v4673 = vsub.f32 1.0, %v4581
        %v4674 = vsub.f32 1.0, %v4583
        %v4675 = vsub.f32 1.0, %v4585
        %v4676 = vsub.f32 1.0, %v4587
        %v4677 = vsub.f32 1.0, %v4589
        %v4678 = vsub.f32 1.0, %v4591
        %v4679 = vsub.f32 1.0, %v4593
        %v4680 = vsub.f32 1.0, %v4595
        %v4681 = vsub.f32 1.0, %v4597
        %v4682 = vsub.f32 1.0, %v4599
        %v4683 = vsub.f32 1.0, %v4601
        %v4684 = vsub.f32 1.0, %v4603
        %v4685 = vsub.f32 1.0, %v4605
        %v4686 = vadd.f32 %v4606, 1e-08
        %v4687 = vadd.f32 %v4607, 1e-08
        %v4688 = vadd.f32 %v4608, 1e-08
        %v4689 = vadd.f32 %v4609, 1e-08
        %v4690 = vadd.f32 %v4610, 1e-08
        %v4691 = vadd.f32 %v4611, 1e-08
        %v4692 = vadd.f32 %v4612, 1e-08
        %v4693 = vadd.f32 %v4613, 1e-08
        %v4694 = vadd.f32 %v4614, 1e-08
        %v4695 = vadd.f32 %v4615, 1e-08
        %v4696 = vadd.f32 %v4616, 1e-08
        %v4697 = vadd.f32 %v4617, 1e-08
        %v4698 = vadd.f32 %v4618, 1e-08
        %v4699 = vadd.f32 %v4619, 1e-08
        %v4700 = vadd.f32 %v4620, 1e-08
        %v4701 = vadd.f32 %v4621, 1e-08
        %v4702 = vadd.f32 %v4622, 1e-08
        %v4703 = vadd.f32 %v4623, 1e-08
        %v4704 = vadd.f32 %v4624, 1e-08
        %v4705 = vadd.f32 %v4625, 1e-08
        %v4706 = vadd.f32 %v4626, 1e-08
        %v4707 = vadd.f32 %v4627, 1e-08
        %v4708 = vadd.f32 %v4628, 1e-08
        %v4709 = vadd.f32 %v4629, 1e-08
        %v4710 = vadd.f32 %v4630, 1e-08
        %v4711 = vadd.f32 %v4631, 1e-08
        %v4712 = vadd.f32 %v4632, 1e-08
        %v4713 = vadd.f32 %v4633, 1e-08
        %v4714 = vadd.f32 %v4634, 1e-08
        %v4715 = vadd.f32 %v4635, 1e-08
        %v4716 = vadd.f32 %v4636, 1e-08
        %v4717 = vadd.f32 %v4637, 1e-08
        %v4718 = vadd.f32 %v4638, 1e-08
        %v4719 = vadd.f32 %v4639, 1e-08
        %v4720 = vadd.f32 %v4640, 1e-08
        %v4721 = vadd.f32 %v4641, 1e-08
        %v4722 = vadd.f32 %v4642, 1e-08
        %v4723 = vadd.f32 %v4643, 1e-08
        %v4724 = vadd.f32 %v4644, 1e-08
        %v4725 = vadd.f32 %v4645, 1e-08
        %v4726 = vadd.f32 %v4646, 1e-08
        %v4727 = vadd.f32 %v4647, 1e-08
        %v4728 = vadd.f32 %v4648, 1e-08
        %v4729 = vadd.f32 %v4649, 1e-08
        %v4730 = vadd.f32 %v4650, 1e-08
        %v4731 = vadd.f32 %v4651, 1e-08
        %v4732 = vadd.f32 %v4652, 1e-08
        %v4733 = vadd.f32 %v4653, 1e-08
        %v4734 = vadd.f32 %v4654, 1e-08
        %v4735 = vadd.f32 %v4655, 1e-08
        %v4736 = vadd.f32 %v4656, 1e-08
        %v4737 = vadd.f32 %v4657, 1e-08
        %v4738 = vadd.f32 %v4658, 1e-08
        %v4739 = vadd.f32 %v4659, 1e-08
        %v4740 = vadd.f32 %v4660, 1e-08
        %v4741 = vadd.f32 %v4661, 1e-08
        %v4742 = vadd.f32 %v4662, 1e-08
        %v4743 = vadd.f32 %v4663, 1e-08
        %v4744 = vadd.f32 %v4664, 1e-08
        %v4745 = vadd.f32 %v4665, 1e-08
        %v4746 = vadd.f32 %v4666, 1e-08
        %v4747 = vadd.f32 %v4667, 1e-08
        %v4748 = vadd.f32 %v4668, 1e-08
        %v4749 = vadd.f32 %v4669, 1e-08
        %v4750 = vadd.f32 %v4670, 1e-08
        %v4751 = vadd.f32 %v4671, 1e-08
        %v4752 = vadd.f32 %v4672, 1e-08
        %v4753 = vadd.f32 %v4673, 1e-08
        %v4754 = vadd.f32 %v4674, 1e-08
        %v4755 = vadd.f32 %v4675, 1e-08
        %v4756 = vadd.f32 %v4676, 1e-08
        %v4757 = vadd.f32 %v4677, 1e-08
        %v4758 = vadd.f32 %v4678, 1e-08
        %v4759 = vadd.f32 %v4679, 1e-08
        %v4760 = vadd.f32 %v4680, 1e-08
        %v4761 = vadd.f32 %v4681, 1e-08
        %v4762 = vadd.f32 %v4682, 1e-08
        %v4763 = vadd.f32 %v4683, 1e-08
        %v4764 = vadd.f32 %v4684, 1e-08
        %v4765 = vadd.f32 %v4685, 1e-08
        %v4766 = vlog2.pop %v4686
        %v4767 = vmul.f32 %v4766, 0.6931472
        %v4768 = vlog2.pop %v4687
        %v4769 = vmul.f32 %v4768, 0.6931472
        %v4770 = vlog2.pop %v4688
        %v4771 = vmul.f32 %v4770, 0.6931472
        %v4772 = vlog2.pop %v4689
        %v4773 = vmul.f32 %v4772, 0.6931472
        %v4774 = vlog2.pop %v4690
        %v4775 = vmul.f32 %v4774, 0.6931472
        %v4776 = vlog2.pop %v4691
        %v4777 = vmul.f32 %v4776, 0.6931472
        %v4778 = vlog2.pop %v4692
        %v4779 = vmul.f32 %v4778, 0.6931472
        %v4780 = vlog2.pop %v4693
        %v4781 = vmul.f32 %v4780, 0.6931472
        %v4782 = vlog2.pop %v4694
        %v4783 = vmul.f32 %v4782, 0.6931472
        %v4784 = vlog2.pop %v4695
        %v4785 = vmul.f32 %v4784, 0.6931472
        %v4786 = vlog2.pop %v4696
        %v4787 = vmul.f32 %v4786, 0.6931472
        %v4788 = vlog2.pop %v4697
        %v4789 = vmul.f32 %v4788, 0.6931472
        %v4790 = vlog2.pop %v4698
        %v4791 = vmul.f32 %v4790, 0.6931472
        %v4792 = vlog2.pop %v4699
        %v4793 = vmul.f32 %v4792, 0.6931472
        %v4794 = vlog2.pop %v4700
        %v4795 = vmul.f32 %v4794, 0.6931472
        %v4796 = vlog2.pop %v4701
        %v4797 = vmul.f32 %v4796, 0.6931472
        %v4798 = vlog2.pop %v4702
        %v4799 = vmul.f32 %v4798, 0.6931472
        %v4800 = vlog2.pop %v4703
        %v4801 = vmul.f32 %v4800, 0.6931472
        %v4802 = vlog2.pop %v4704
        %v4803 = vmul.f32 %v4802, 0.6931472
        %v4804 = vlog2.pop %v4705
        %v4805 = vmul.f32 %v4804, 0.6931472
        %v4806 = vlog2.pop %v4706
        %v4807 = vmul.f32 %v4806, 0.6931472
        %v4808 = vlog2.pop %v4707
        %v4809 = vmul.f32 %v4808, 0.6931472
        %v4810 = vlog2.pop %v4708
        %v4811 = vmul.f32 %v4810, 0.6931472
        %v4812 = vlog2.pop %v4709
        %v4813 = vmul.f32 %v4812, 0.6931472
        %v4814 = vlog2.pop %v4710
        %v4815 = vmul.f32 %v4814, 0.6931472
        %v4816 = vlog2.pop %v4711
        %v4817 = vmul.f32 %v4816, 0.6931472
        %v4818 = vlog2.pop %v4712
        %v4819 = vmul.f32 %v4818, 0.6931472
        %v4820 = vlog2.pop %v4713
        %v4821 = vmul.f32 %v4820, 0.6931472
        %v4822 = vlog2.pop %v4714
        %v4823 = vmul.f32 %v4822, 0.6931472
        %v4824 = vlog2.pop %v4715
        %v4825 = vmul.f32 %v4824, 0.6931472
        %v4826 = vlog2.pop %v4716
        %v4827 = vmul.f32 %v4826, 0.6931472
        %v4828 = vlog2.pop %v4717
        %v4829 = vmul.f32 %v4828, 0.6931472
        %v4830 = vlog2.pop %v4718
        %v4831 = vmul.f32 %v4830, 0.6931472
        %v4832 = vlog2.pop %v4719
        %v4833 = vmul.f32 %v4832, 0.6931472
        %v4834 = vlog2.pop %v4720
        %v4835 = vmul.f32 %v4834, 0.6931472
        %v4836 = vlog2.pop %v4721
        %v4837 = vmul.f32 %v4836, 0.6931472
        %v4838 = vlog2.pop %v4722
        %v4839 = vmul.f32 %v4838, 0.6931472
        %v4840 = vlog2.pop %v4723
        %v4841 = vmul.f32 %v4840, 0.6931472
        %v4842 = vlog2.pop %v4724
        %v4843 = vmul.f32 %v4842, 0.6931472
        %v4844 = vlog2.pop %v4725
        %v4845 = vmul.f32 %v4844, 0.6931472
        %v4846 = vlog2.pop %v4726
        %v4847 = vmul.f32 %v4846, 0.6931472
        %v4848 = vlog2.pop %v4727
        %v4849 = vmul.f32 %v4848, 0.6931472
        %v4850 = vlog2.pop %v4728
        %v4851 = vmul.f32 %v4850, 0.6931472
        %v4852 = vlog2.pop %v4729
        %v4853 = vmul.f32 %v4852, 0.6931472
        %v4854 = vlog2.pop %v4730
        %v4855 = vmul.f32 %v4854, 0.6931472
        %v4856 = vlog2.pop %v4731
        %v4857 = vmul.f32 %v4856, 0.6931472
        %v4858 = vlog2.pop %v4732
        %v4859 = vmul.f32 %v4858, 0.6931472
        %v4860 = vlog2.pop %v4733
        %v4861 = vmul.f32 %v4860, 0.6931472
        %v4862 = vlog2.pop %v4734
        %v4863 = vmul.f32 %v4862, 0.6931472
        %v4864 = vlog2.pop %v4735
        %v4865 = vmul.f32 %v4864, 0.6931472
        %v4866 = vlog2.pop %v4736
        %v4867 = vmul.f32 %v4866, 0.6931472
        %v4868 = vlog2.pop %v4737
        %v4869 = vmul.f32 %v4868, 0.6931472
        %v4870 = vlog2.pop %v4738
        %v4871 = vmul.f32 %v4870, 0.6931472
        %v4872 = vlog2.pop %v4739
        %v4873 = vmul.f32 %v4872, 0.6931472
        %v4874 = vlog2.pop %v4740
        %v4875 = vmul.f32 %v4874, 0.6931472
        %v4876 = vlog2.pop %v4741
        %v4877 = vmul.f32 %v4876, 0.6931472
        %v4878 = vlog2.pop %v4742
        %v4879 = vmul.f32 %v4878, 0.6931472
        %v4880 = vlog2.pop %v4743
        %v4881 = vmul.f32 %v4880, 0.6931472
        %v4882 = vlog2.pop %v4744
        %v4883 = vmul.f32 %v4882, 0.6931472
        %v4884 = vlog2.pop %v4745
        %v4885 = vmul.f32 %v4884, 0.6931472
        %v4886 = vlog2.pop %v4746
        %v4887 = vmul.f32 %v4886, 0.6931472
        %v4888 = vlog2.pop %v4747
        %v4889 = vmul.f32 %v4888, 0.6931472
        %v4890 = vlog2.pop %v4748
        %v4891 = vmul.f32 %v4890, 0.6931472
        %v4892 = vlog2.pop %v4749
        %v4893 = vmul.f32 %v4892, 0.6931472
        %v4894 = vlog2.pop %v4750
        %v4895 = vmul.f32 %v4894, 0.6931472
        %v4896 = vlog2.pop %v4751
        %v4897 = vmul.f32 %v4896, 0.6931472
        %v4898 = vlog2.pop %v4752
        %v4899 = vmul.f32 %v4898, 0.6931472
        %v4900 = vlog2.pop %v4753
        %v4901 = vmul.f32 %v4900, 0.6931472
        %v4902 = vlog2.pop %v4754
        %v4903 = vmul.f32 %v4902, 0.6931472
        %v4904 = vlog2.pop %v4755
        %v4905 = vmul.f32 %v4904, 0.6931472
        %v4906 = vlog2.pop %v4756
        %v4907 = vmul.f32 %v4906, 0.6931472
        %v4908 = vlog2.pop %v4757
        %v4909 = vmul.f32 %v4908, 0.6931472
        %v4910 = vlog2.pop %v4758
        %v4911 = vmul.f32 %v4910, 0.6931472
        %v4912 = vlog2.pop %v4759
        %v4913 = vmul.f32 %v4912, 0.6931472
        %v4914 = vlog2.pop %v4760
        %v4915 = vmul.f32 %v4914, 0.6931472
        %v4916 = vlog2.pop %v4761
        %v4917 = vmul.f32 %v4916, 0.6931472
        %v4918 = vlog2.pop %v4762
        %v4919 = vmul.f32 %v4918, 0.6931472
        %v4920 = vlog2.pop %v4763
        %v4921 = vmul.f32 %v4920, 0.6931472
        %v4922 = vlog2.pop %v4764
        %v4923 = vmul.f32 %v4922, 0.6931472
        %v4924 = vlog2.pop %v4765
        %v4925 = vmul.f32 %v4924, 0.6931472
        %v4926 = vadd.f32 %v4286, %v4767
        %v4927 = vadd.f32 %v4287, %v4769
        %v4928 = vadd.f32 %v4288, %v4771
        %v4929 = vadd.f32 %v4289, %v4773
        %v4930 = vadd.f32 %v4290, %v4775
        %v4931 = vadd.f32 %v4291, %v4777
        %v4932 = vadd.f32 %v4292, %v4779
        %v4933 = vadd.f32 %v4293, %v4781
        %v4934 = vadd.f32 %v4294, %v4783
        %v4935 = vadd.f32 %v4295, %v4785
        %v4936 = vadd.f32 %v4296, %v4787
        %v4937 = vadd.f32 %v4297, %v4789
        %v4938 = vadd.f32 %v4298, %v4791
        %v4939 = vadd.f32 %v4299, %v4793
        %v4940 = vadd.f32 %v4300, %v4795
        %v4941 = vadd.f32 %v4301, %v4797
        %v4942 = vadd.f32 %v4302, %v4799
        %v4943 = vadd.f32 %v4303, %v4801
        %v4944 = vadd.f32 %v4304, %v4803
        %v4945 = vadd.f32 %v4305, %v4805
        %v4946 = vadd.f32 %v4306, %v4807
        %v4947 = vadd.f32 %v4307, %v4809
        %v4948 = vadd.f32 %v4308, %v4811
        %v4949 = vadd.f32 %v4309, %v4813
        %v4950 = vadd.f32 %v4310, %v4815
        %v4951 = vadd.f32 %v4311, %v4817
        %v4952 = vadd.f32 %v4312, %v4819
        %v4953 = vadd.f32 %v4313, %v4821
        %v4954 = vadd.f32 %v4314, %v4823
        %v4955 = vadd.f32 %v4315, %v4825
        %v4956 = vadd.f32 %v4316, %v4827
        %v4957 = vadd.f32 %v4317, %v4829
        %v4958 = vadd.f32 %v4318, %v4831
        %v4959 = vadd.f32 %v4319, %v4833
        %v4960 = vadd.f32 %v4320, %v4835
        %v4961 = vadd.f32 %v4321, %v4837
        %v4962 = vadd.f32 %v4322, %v4839
        %v4963 = vadd.f32 %v4323, %v4841
        %v4964 = vadd.f32 %v4324, %v4843
        %v4965 = vadd.f32 %v4325, %v4845
        %v4966 = vadd.f32 %v4326, %v4847
        %v4967 = vadd.f32 %v4327, %v4849
        %v4968 = vadd.f32 %v4328, %v4851
        %v4969 = vadd.f32 %v4329, %v4853
        %v4970 = vadd.f32 %v4330, %v4855
        %v4971 = vadd.f32 %v4331, %v4857
        %v4972 = vadd.f32 %v4332, %v4859
        %v4973 = vadd.f32 %v4333, %v4861
        %v4974 = vadd.f32 %v4334, %v4863
        %v4975 = vadd.f32 %v4335, %v4865
        %v4976 = vadd.f32 %v4336, %v4867
        %v4977 = vadd.f32 %v4337, %v4869
        %v4978 = vadd.f32 %v4338, %v4871
        %v4979 = vadd.f32 %v4339, %v4873
        %v4980 = vadd.f32 %v4340, %v4875
        %v4981 = vadd.f32 %v4341, %v4877
        %v4982 = vadd.f32 %v4342, %v4879
        %v4983 = vadd.f32 %v4343, %v4881
        %v4984 = vadd.f32 %v4344, %v4883
        %v4985 = vadd.f32 %v4345, %v4885
        %v4986 = vadd.f32 %v4346, %v4887
        %v4987 = vadd.f32 %v4347, %v4889
        %v4988 = vadd.f32 %v4348, %v4891
        %v4989 = vadd.f32 %v4349, %v4893
        %v4990 = vadd.f32 %v4350, %v4895
        %v4991 = vadd.f32 %v4351, %v4897
        %v4992 = vadd.f32 %v4352, %v4899
        %v4993 = vadd.f32 %v4353, %v4901
        %v4994 = vadd.f32 %v4354, %v4903
        %v4995 = vadd.f32 %v4355, %v4905
        %v4996 = vadd.f32 %v4356, %v4907
        %v4997 = vadd.f32 %v4357, %v4909
        %v4998 = vadd.f32 %v4358, %v4911
        %v4999 = vadd.f32 %v4359, %v4913
        %v5000 = vadd.f32 %v4360, %v4915
        %v5001 = vadd.f32 %v4361, %v4917
        %v5002 = vadd.f32 %v4362, %v4919
        %v5003 = vadd.f32 %v4363, %v4921
        %v5004 = vadd.f32 %v4364, %v4923
        %v5005 = vadd.f32 %v4365, %v4925
        %vm5006 = vcmp.lt.f32.partialorder %v935, 0.01
        %vm5007 = vcmp.lt.f32.partialorder %v937, 0.01
        %vm5008 = vcmp.lt.f32.partialorder %v1068, 0.01
        %vm5009 = vcmp.lt.f32.partialorder %v1070, 0.01
        %vm5010 = vcmp.lt.f32.partialorder %v939, 0.01
        %vm5011 = vcmp.lt.f32.partialorder %v941, 0.01
        %vm5012 = vcmp.lt.f32.partialorder %v1072, 0.01
        %vm5013 = vcmp.lt.f32.partialorder %v1074, 0.01
        %vm5014 = vcmp.lt.f32.partialorder %v945, 0.01
        %vm5015 = vcmp.lt.f32.partialorder %v947, 0.01
        %vm5016 = vcmp.lt.f32.partialorder %v1078, 0.01
        %vm5017 = vcmp.lt.f32.partialorder %v1080, 0.01
        %vm5018 = vcmp.lt.f32.partialorder %v949, 0.01
        %vm5019 = vcmp.lt.f32.partialorder %v951, 0.01
        %vm5020 = vcmp.lt.f32.partialorder %v1082, 0.01
        %vm5021 = vcmp.lt.f32.partialorder %v1084, 0.01
        %vm5022 = vcmp.lt.f32.partialorder %v955, 0.01
        %vm5023 = vcmp.lt.f32.partialorder %v957, 0.01
        %vm5024 = vcmp.lt.f32.partialorder %v1088, 0.01
        %vm5025 = vcmp.lt.f32.partialorder %v1090, 0.01
        %vm5026 = vcmp.lt.f32.partialorder %v959, 0.01
        %vm5027 = vcmp.lt.f32.partialorder %v961, 0.01
        %vm5028 = vcmp.lt.f32.partialorder %v1092, 0.01
        %vm5029 = vcmp.lt.f32.partialorder %v1094, 0.01
        %vm5030 = vcmp.lt.f32.partialorder %v965, 0.01
        %vm5031 = vcmp.lt.f32.partialorder %v967, 0.01
        %vm5032 = vcmp.lt.f32.partialorder %v1098, 0.01
        %vm5033 = vcmp.lt.f32.partialorder %v1100, 0.01
        %vm5034 = vcmp.lt.f32.partialorder %v969, 0.01
        %vm5035 = vcmp.lt.f32.partialorder %v971, 0.01
        %vm5036 = vcmp.lt.f32.partialorder %v1102, 0.01
        %vm5037 = vcmp.lt.f32.partialorder %v1104, 0.01
        %vm5038 = vcmp.lt.f32.partialorder %v975, 0.01
        %vm5039 = vcmp.lt.f32.partialorder %v977, 0.01
        %vm5040 = vcmp.lt.f32.partialorder %v1108, 0.01
        %vm5041 = vcmp.lt.f32.partialorder %v1110, 0.01
        %vm5042 = vcmp.lt.f32.partialorder %v979, 0.01
        %vm5043 = vcmp.lt.f32.partialorder %v981, 0.01
        %vm5044 = vcmp.lt.f32.partialorder %v1112, 0.01
        %vm5045 = vcmp.lt.f32.partialorder %v1114, 0.01
        %vm5046 = vcmp.lt.f32.partialorder %v985, 0.01
        %vm5047 = vcmp.lt.f32.partialorder %v987, 0.01
        %vm5048 = vcmp.lt.f32.partialorder %v1118, 0.01
        %vm5049 = vcmp.lt.f32.partialorder %v1120, 0.01
        %vm5050 = vcmp.lt.f32.partialorder %v989, 0.01
        %vm5051 = vcmp.lt.f32.partialorder %v991, 0.01
        %vm5052 = vcmp.lt.f32.partialorder %v1122, 0.01
        %vm5053 = vcmp.lt.f32.partialorder %v1124, 0.01
        %vm5054 = vcmp.lt.f32.partialorder %v995, 0.01
        %vm5055 = vcmp.lt.f32.partialorder %v997, 0.01
        %vm5056 = vcmp.lt.f32.partialorder %v1128, 0.01
        %vm5057 = vcmp.lt.f32.partialorder %v1130, 0.01
        %vm5058 = vcmp.lt.f32.partialorder %v999, 0.01
        %vm5059 = vcmp.lt.f32.partialorder %v1001, 0.01
        %vm5060 = vcmp.lt.f32.partialorder %v1132, 0.01
        %vm5061 = vcmp.lt.f32.partialorder %v1134, 0.01
        %vm5062 = vcmp.lt.f32.partialorder %v1005, 0.01
        %vm5063 = vcmp.lt.f32.partialorder %v1007, 0.01
        %vm5064 = vcmp.lt.f32.partialorder %v1138, 0.01
        %vm5065 = vcmp.lt.f32.partialorder %v1140, 0.01
        %vm5066 = vcmp.lt.f32.partialorder %v1009, 0.01
        %vm5067 = vcmp.lt.f32.partialorder %v1011, 0.01
        %vm5068 = vcmp.lt.f32.partialorder %v1142, 0.01
        %vm5069 = vcmp.lt.f32.partialorder %v1144, 0.01
        %vm5070 = vcmp.lt.f32.partialorder %v1015, 0.01
        %vm5071 = vcmp.lt.f32.partialorder %v1017, 0.01
        %vm5072 = vcmp.lt.f32.partialorder %v1148, 0.01
        %vm5073 = vcmp.lt.f32.partialorder %v1150, 0.01
        %vm5074 = vcmp.lt.f32.partialorder %v1019, 0.01
        %vm5075 = vcmp.lt.f32.partialorder %v1021, 0.01
        %vm5076 = vcmp.lt.f32.partialorder %v1152, 0.01
        %vm5077 = vcmp.lt.f32.partialorder %v1154, 0.01
        %vm5078 = vcmp.lt.f32.partialorder %v1025, 0.01
        %vm5079 = vcmp.lt.f32.partialorder %v1027, 0.01
        %vm5080 = vcmp.lt.f32.partialorder %v1158, 0.01
        %vm5081 = vcmp.lt.f32.partialorder %v1160, 0.01
        %vm5082 = vcmp.lt.f32.partialorder %v1029, 0.01
        %vm5083 = vcmp.lt.f32.partialorder %v1031, 0.01
        %vm5084 = vcmp.lt.f32.partialorder %v1162, 0.01
        %vm5085 = vcmp.lt.f32.partialorder %v1164, 0.01
        %v5086 = vsel %vm5006, %v4126, %v4926
        %v5087 = vsel %vm5007, %v4127, %v4927
        %v5088 = vsel %vm5008, %v4128, %v4928
        %v5089 = vsel %vm5009, %v4129, %v4929
        %v5090 = vsel %vm5010, %v4130, %v4930
        %v5091 = vsel %vm5011, %v4131, %v4931
        %v5092 = vsel %vm5012, %v4132, %v4932
        %v5093 = vsel %vm5013, %v4133, %v4933
        %v5094 = vsel %vm5014, %v4134, %v4934
        %v5095 = vsel %vm5015, %v4135, %v4935
        %v5096 = vsel %vm5016, %v4136, %v4936
        %v5097 = vsel %vm5017, %v4137, %v4937
        %v5098 = vsel %vm5018, %v4138, %v4938
        %v5099 = vsel %vm5019, %v4139, %v4939
        %v5100 = vsel %vm5020, %v4140, %v4940
        %v5101 = vsel %vm5021, %v4141, %v4941
        %v5102 = vsel %vm5022, %v4142, %v4942
        %v5103 = vsel %vm5023, %v4143, %v4943
        %v5104 = vsel %vm5024, %v4144, %v4944
        %v5105 = vsel %vm5025, %v4145, %v4945
        %v5106 = vsel %vm5026, %v4146, %v4946
        %v5107 = vsel %vm5027, %v4147, %v4947
        %v5108 = vsel %vm5028, %v4148, %v4948
        %v5109 = vsel %vm5029, %v4149, %v4949
        %v5110 = vsel %vm5030, %v4150, %v4950
        %v5111 = vsel %vm5031, %v4151, %v4951
        %v5112 = vsel %vm5032, %v4152, %v4952
        %v5113 = vsel %vm5033, %v4153, %v4953
        %v5114 = vsel %vm5034, %v4154, %v4954
        %v5115 = vsel %vm5035, %v4155, %v4955
        %v5116 = vsel %vm5036, %v4156, %v4956
        %v5117 = vsel %vm5037, %v4157, %v4957
        %v5118 = vsel %vm5038, %v4158, %v4958
        %v5119 = vsel %vm5039, %v4159, %v4959
        %v5120 = vsel %vm5040, %v4160, %v4960
        %v5121 = vsel %vm5041, %v4161, %v4961
        %v5122 = vsel %vm5042, %v4162, %v4962
        %v5123 = vsel %vm5043, %v4163, %v4963
        %v5124 = vsel %vm5044, %v4164, %v4964
        %v5125 = vsel %vm5045, %v4165, %v4965
        %v5126 = vsel %vm5046, %v4166, %v4966
        %v5127 = vsel %vm5047, %v4167, %v4967
        %v5128 = vsel %vm5048, %v4168, %v4968
        %v5129 = vsel %vm5049, %v4169, %v4969
        %v5130 = vsel %vm5050, %v4170, %v4970
        %v5131 = vsel %vm5051, %v4171, %v4971
        %v5132 = vsel %vm5052, %v4172, %v4972
        %v5133 = vsel %vm5053, %v4173, %v4973
        %v5134 = vsel %vm5054, %v4174, %v4974
        %v5135 = vsel %vm5055, %v4175, %v4975
        %v5136 = vsel %vm5056, %v4176, %v4976
        %v5137 = vsel %vm5057, %v4177, %v4977
        %v5138 = vsel %vm5058, %v4178, %v4978
        %v5139 = vsel %vm5059, %v4179, %v4979
        %v5140 = vsel %vm5060, %v4180, %v4980
        %v5141 = vsel %vm5061, %v4181, %v4981
        %v5142 = vsel %vm5062, %v4182, %v4982
        %v5143 = vsel %vm5063, %v4183, %v4983
        %v5144 = vsel %vm5064, %v4184, %v4984
        %v5145 = vsel %vm5065, %v4185, %v4985
        %v5146 = vsel %vm5066, %v4186, %v4986
        %v5147 = vsel %vm5067, %v4187, %v4987
        %v5148 = vsel %vm5068, %v4188, %v4988
        %v5149 = vsel %vm5069, %v4189, %v4989
        %v5150 = vsel %vm5070, %v4190, %v4990
        %v5151 = vsel %vm5071, %v4191, %v4991
        %v5152 = vsel %vm5072, %v4192, %v4992
        %v5153 = vsel %vm5073, %v4193, %v4993
        %v5154 = vsel %vm5074, %v4194, %v4994
        %v5155 = vsel %vm5075, %v4195, %v4995
        %v5156 = vsel %vm5076, %v4196, %v4996
        %v5157 = vsel %vm5077, %v4197, %v4997
        %v5158 = vsel %vm5078, %v4198, %v4998
        %v5159 = vsel %vm5079, %v4199, %v4999
        %v5160 = vsel %vm5080, %v4200, %v5000
        %v5161 = vsel %vm5081, %v4201, %v5001
        %v5162 = vsel %vm5082, %v4202, %v5002
        %v5163 = vsel %vm5083, %v4203, %v5003
        %v5164 = vsel %vm5084, %v4204, %v5004
        %v5165 = vsel %vm5085, %v4205, %v5005
        %vm5166 = vcmp.gt.f32.partialorder %v935, 0.99
        %vm5167 = vcmp.gt.f32.partialorder %v937, 0.99
        %vm5168 = vcmp.gt.f32.partialorder %v1068, 0.99
        %vm5169 = vcmp.gt.f32.partialorder %v1070, 0.99
        %vm5170 = vcmp.gt.f32.partialorder %v939, 0.99
        %vm5171 = vcmp.gt.f32.partialorder %v941, 0.99
        %vm5172 = vcmp.gt.f32.partialorder %v1072, 0.99
        %vm5173 = vcmp.gt.f32.partialorder %v1074, 0.99
        %vm5174 = vcmp.gt.f32.partialorder %v945, 0.99
        %vm5175 = vcmp.gt.f32.partialorder %v947, 0.99
        %vm5176 = vcmp.gt.f32.partialorder %v1078, 0.99
        %vm5177 = vcmp.gt.f32.partialorder %v1080, 0.99
        %vm5178 = vcmp.gt.f32.partialorder %v949, 0.99
        %vm5179 = vcmp.gt.f32.partialorder %v951, 0.99
        %vm5180 = vcmp.gt.f32.partialorder %v1082, 0.99
        %vm5181 = vcmp.gt.f32.partialorder %v1084, 0.99
        %vm5182 = vcmp.gt.f32.partialorder %v955, 0.99
        %vm5183 = vcmp.gt.f32.partialorder %v957, 0.99
        %vm5184 = vcmp.gt.f32.partialorder %v1088, 0.99
        %vm5185 = vcmp.gt.f32.partialorder %v1090, 0.99
        %vm5186 = vcmp.gt.f32.partialorder %v959, 0.99
        %vm5187 = vcmp.gt.f32.partialorder %v961, 0.99
        %vm5188 = vcmp.gt.f32.partialorder %v1092, 0.99
        %vm5189 = vcmp.gt.f32.partialorder %v1094, 0.99
        %vm5190 = vcmp.gt.f32.partialorder %v965, 0.99
        %vm5191 = vcmp.gt.f32.partialorder %v967, 0.99
        %vm5192 = vcmp.gt.f32.partialorder %v1098, 0.99
        %vm5193 = vcmp.gt.f32.partialorder %v1100, 0.99
        %vm5194 = vcmp.gt.f32.partialorder %v969, 0.99
        %vm5195 = vcmp.gt.f32.partialorder %v971, 0.99
        %vm5196 = vcmp.gt.f32.partialorder %v1102, 0.99
        %vm5197 = vcmp.gt.f32.partialorder %v1104, 0.99
        %vm5198 = vcmp.gt.f32.partialorder %v975, 0.99
        %vm5199 = vcmp.gt.f32.partialorder %v977, 0.99
        %vm5200 = vcmp.gt.f32.partialorder %v1108, 0.99
        %vm5201 = vcmp.gt.f32.partialorder %v1110, 0.99
        %vm5202 = vcmp.gt.f32.partialorder %v979, 0.99
        %vm5203 = vcmp.gt.f32.partialorder %v981, 0.99
        %vm5204 = vcmp.gt.f32.partialorder %v1112, 0.99
        %vm5205 = vcmp.gt.f32.partialorder %v1114, 0.99
        %vm5206 = vcmp.gt.f32.partialorder %v985, 0.99
        %vm5207 = vcmp.gt.f32.partialorder %v987, 0.99
        %vm5208 = vcmp.gt.f32.partialorder %v1118, 0.99
        %vm5209 = vcmp.gt.f32.partialorder %v1120, 0.99
        %vm5210 = vcmp.gt.f32.partialorder %v989, 0.99
        %vm5211 = vcmp.gt.f32.partialorder %v991, 0.99
        %vm5212 = vcmp.gt.f32.partialorder %v1122, 0.99
        %vm5213 = vcmp.gt.f32.partialorder %v1124, 0.99
        %vm5214 = vcmp.gt.f32.partialorder %v995, 0.99
        %vm5215 = vcmp.gt.f32.partialorder %v997, 0.99
        %vm5216 = vcmp.gt.f32.partialorder %v1128, 0.99
        %vm5217 = vcmp.gt.f32.partialorder %v1130, 0.99
        %vm5218 = vcmp.gt.f32.partialorder %v999, 0.99
        %vm5219 = vcmp.gt.f32.partialorder %v1001, 0.99
        %vm5220 = vcmp.gt.f32.partialorder %v1132, 0.99
        %vm5221 = vcmp.gt.f32.partialorder %v1134, 0.99
        %vm5222 = vcmp.gt.f32.partialorder %v1005, 0.99
        %vm5223 = vcmp.gt.f32.partialorder %v1007, 0.99
        %vm5224 = vcmp.gt.f32.partialorder %v1138, 0.99
        %vm5225 = vcmp.gt.f32.partialorder %v1140, 0.99
        %vm5226 = vcmp.gt.f32.partialorder %v1009, 0.99
        %vm5227 = vcmp.gt.f32.partialorder %v1011, 0.99
        %vm5228 = vcmp.gt.f32.partialorder %v1142, 0.99
        %vm5229 = vcmp.gt.f32.partialorder %v1144, 0.99
        %vm5230 = vcmp.gt.f32.partialorder %v1015, 0.99
        %vm5231 = vcmp.gt.f32.partialorder %v1017, 0.99
        %vm5232 = vcmp.gt.f32.partialorder %v1148, 0.99
        %vm5233 = vcmp.gt.f32.partialorder %v1150, 0.99
        %vm5234 = vcmp.gt.f32.partialorder %v1019, 0.99
        %vm5235 = vcmp.gt.f32.partialorder %v1021, 0.99
        %vm5236 = vcmp.gt.f32.partialorder %v1152, 0.99
        %vm5237 = vcmp.gt.f32.partialorder %v1154, 0.99
        %vm5238 = vcmp.gt.f32.partialorder %v1025, 0.99
        %vm5239 = vcmp.gt.f32.partialorder %v1027, 0.99
        %vm5240 = vcmp.gt.f32.partialorder %v1158, 0.99
        %vm5241 = vcmp.gt.f32.partialorder %v1160, 0.99
        %vm5242 = vcmp.gt.f32.partialorder %v1029, 0.99
        %vm5243 = vcmp.gt.f32.partialorder %v1031, 0.99
        %vm5244 = vcmp.gt.f32.partialorder %v1162, 0.99
        %vm5245 = vcmp.gt.f32.partialorder %v1164, 0.99
        %v5246 = vmul.f32 %v4286, 1.442695
        %v5247 = vpow.pop %v5246
        %v5248 = vmul.f32 %v4287, 1.442695
        %v5249 = vpow.pop %v5248
        %v5250 = vmul.f32 %v4288, 1.442695
        %v5251 = vpow.pop %v5250
        %v5252 = vmul.f32 %v4289, 1.442695
        %v5253 = vpow.pop %v5252
        %v5254 = vmul.f32 %v4290, 1.442695
        %v5255 = vpow.pop %v5254
        %v5256 = vmul.f32 %v4291, 1.442695
        %v5257 = vpow.pop %v5256
        %v5258 = vmul.f32 %v4292, 1.442695
        %v5259 = vpow.pop %v5258
        %v5260 = vmul.f32 %v4293, 1.442695
        %v5261 = vpow.pop %v5260
        %v5262 = vmul.f32 %v4294, 1.442695
        %v5263 = vpow.pop %v5262
        %v5264 = vmul.f32 %v4295, 1.442695
        %v5265 = vpow.pop %v5264
        %v5266 = vmul.f32 %v4296, 1.442695
        %v5267 = vpow.pop %v5266
        %v5268 = vmul.f32 %v4297, 1.442695
        %v5269 = vpow.pop %v5268
        %v5270 = vmul.f32 %v4298, 1.442695
        %v5271 = vpow.pop %v5270
        %v5272 = vmul.f32 %v4299, 1.442695
        %v5273 = vpow.pop %v5272
        %v5274 = vmul.f32 %v4300, 1.442695
        %v5275 = vpow.pop %v5274
        %v5276 = vmul.f32 %v4301, 1.442695
        %v5277 = vpow.pop %v5276
        %v5278 = vmul.f32 %v4302, 1.442695
        %v5279 = vpow.pop %v5278
        %v5280 = vmul.f32 %v4303, 1.442695
        %v5281 = vpow.pop %v5280
        %v5282 = vmul.f32 %v4304, 1.442695
        %v5283 = vpow.pop %v5282
        %v5284 = vmul.f32 %v4305, 1.442695
        %v5285 = vpow.pop %v5284
        %v5286 = vmul.f32 %v4306, 1.442695
        %v5287 = vpow.pop %v5286
        %v5288 = vmul.f32 %v4307, 1.442695
        %v5289 = vpow.pop %v5288
        %v5290 = vmul.f32 %v4308, 1.442695
        %v5291 = vpow.pop %v5290
        %v5292 = vmul.f32 %v4309, 1.442695
        %v5293 = vpow.pop %v5292
        %v5294 = vmul.f32 %v4310, 1.442695
        %v5295 = vpow.pop %v5294
        %v5296 = vmul.f32 %v4311, 1.442695
        %v5297 = vpow.pop %v5296
        %v5298 = vmul.f32 %v4312, 1.442695
        %v5299 = vpow.pop %v5298
        %v5300 = vmul.f32 %v4313, 1.442695
        %v5301 = vpow.pop %v5300
        %v5302 = vmul.f32 %v4314, 1.442695
        %v5303 = vpow.pop %v5302
        %v5304 = vmul.f32 %v4315, 1.442695
        %v5305 = vpow.pop %v5304
        %v5306 = vmul.f32 %v4316, 1.442695
        %v5307 = vpow.pop %v5306
        %v5308 = vmul.f32 %v4317, 1.442695
        %v5309 = vpow.pop %v5308
        %v5310 = vmul.f32 %v4318, 1.442695
        %v5311 = vpow.pop %v5310
        %v5312 = vmul.f32 %v4319, 1.442695
        %v5313 = vpow.pop %v5312
        %v5314 = vmul.f32 %v4320, 1.442695
        %v5315 = vpow.pop %v5314
        %v5316 = vmul.f32 %v4321, 1.442695
        %v5317 = vpow.pop %v5316
        %v5318 = vmul.f32 %v4322, 1.442695
        %v5319 = vpow.pop %v5318
        %v5320 = vmul.f32 %v4323, 1.442695
        %v5321 = vpow.pop %v5320
        %v5322 = vmul.f32 %v4324, 1.442695
        %v5323 = vpow.pop %v5322
        %v5324 = vmul.f32 %v4325, 1.442695
        %v5325 = vpow.pop %v5324
        %v5326 = vmul.f32 %v4326, 1.442695
        %v5327 = vpow.pop %v5326
        %v5328 = vmul.f32 %v4327, 1.442695
        %v5329 = vpow.pop %v5328
        %v5330 = vmul.f32 %v4328, 1.442695
        %v5331 = vpow.pop %v5330
        %v5332 = vmul.f32 %v4329, 1.442695
        %v5333 = vpow.pop %v5332
        %v5334 = vmul.f32 %v4330, 1.442695
        %v5335 = vpow.pop %v5334
        %v5336 = vmul.f32 %v4331, 1.442695
        %v5337 = vpow.pop %v5336
        %v5338 = vmul.f32 %v4332, 1.442695
        %v5339 = vpow.pop %v5338
        %v5340 = vmul.f32 %v4333, 1.442695
        %v5341 = vpow.pop %v5340
        %v5342 = vmul.f32 %v4334, 1.442695
        %v5343 = vpow.pop %v5342
        %v5344 = vmul.f32 %v4335, 1.442695
        %v5345 = vpow.pop %v5344
        %v5346 = vmul.f32 %v4336, 1.442695
        %v5347 = vpow.pop %v5346
        %v5348 = vmul.f32 %v4337, 1.442695
        %v5349 = vpow.pop %v5348
        %v5350 = vmul.f32 %v4338, 1.442695
        %v5351 = vpow.pop %v5350
        %v5352 = vmul.f32 %v4339, 1.442695
        %v5353 = vpow.pop %v5352
        %v5354 = vmul.f32 %v4340, 1.442695
        %v5355 = vpow.pop %v5354
        %v5356 = vmul.f32 %v4341, 1.442695
        %v5357 = vpow.pop %v5356
        %v5358 = vmul.f32 %v4342, 1.442695
        %v5359 = vpow.pop %v5358
        %v5360 = vmul.f32 %v4343, 1.442695
        %v5361 = vpow.pop %v5360
        %v5362 = vmul.f32 %v4344, 1.442695
        %v5363 = vpow.pop %v5362
        %v5364 = vmul.f32 %v4345, 1.442695
        %v5365 = vpow.pop %v5364
        %v5366 = vmul.f32 %v4346, 1.442695
        %v5367 = vpow.pop %v5366
        %v5368 = vmul.f32 %v4347, 1.442695
        %v5369 = vpow.pop %v5368
        %v5370 = vmul.f32 %v4348, 1.442695
        %v5371 = vpow.pop %v5370
        %v5372 = vmul.f32 %v4349, 1.442695
        %v5373 = vpow.pop %v5372
        %v5374 = vmul.f32 %v4350, 1.442695
        %v5375 = vpow.pop %v5374
        %v5376 = vmul.f32 %v4351, 1.442695
        %v5377 = vpow.pop %v5376
        %v5378 = vmul.f32 %v4352, 1.442695
        %v5379 = vpow.pop %v5378
        %v5380 = vmul.f32 %v4353, 1.442695
        %v5381 = vpow.pop %v5380
        %v5382 = vmul.f32 %v4354, 1.442695
        %v5383 = vpow.pop %v5382
        %v5384 = vmul.f32 %v4355, 1.442695
        %v5385 = vpow.pop %v5384
        %v5386 = vmul.f32 %v4356, 1.442695
        %v5387 = vpow.pop %v5386
        %v5388 = vmul.f32 %v4357, 1.442695
        %v5389 = vpow.pop %v5388
        %v5390 = vmul.f32 %v4358, 1.442695
        %v5391 = vpow.pop %v5390
        %v5392 = vmul.f32 %v4359, 1.442695
        %v5393 = vpow.pop %v5392
        %v5394 = vmul.f32 %v4360, 1.442695
        %v5395 = vpow.pop %v5394
        %v5396 = vmul.f32 %v4361, 1.442695
        %v5397 = vpow.pop %v5396
        %v5398 = vmul.f32 %v4362, 1.442695
        %v5399 = vpow.pop %v5398
        %v5400 = vmul.f32 %v4363, 1.442695
        %v5401 = vpow.pop %v5400
        %v5402 = vmul.f32 %v4364, 1.442695
        %v5403 = vpow.pop %v5402
        %v5404 = vmul.f32 %v4365, 1.442695
        %v5405 = vpow.pop %v5404
        %v5406 = vsub.f32 1.0, %v5247
        %v5407 = vsub.f32 1.0, %v5249
        %v5408 = vsub.f32 1.0, %v5251
        %v5409 = vsub.f32 1.0, %v5253
        %v5410 = vsub.f32 1.0, %v5255
        %v5411 = vsub.f32 1.0, %v5257
        %v5412 = vsub.f32 1.0, %v5259
        %v5413 = vsub.f32 1.0, %v5261
        %v5414 = vsub.f32 1.0, %v5263
        %v5415 = vsub.f32 1.0, %v5265
        %v5416 = vsub.f32 1.0, %v5267
        %v5417 = vsub.f32 1.0, %v5269
        %v5418 = vsub.f32 1.0, %v5271
        %v5419 = vsub.f32 1.0, %v5273
        %v5420 = vsub.f32 1.0, %v5275
        %v5421 = vsub.f32 1.0, %v5277
        %v5422 = vsub.f32 1.0, %v5279
        %v5423 = vsub.f32 1.0, %v5281
        %v5424 = vsub.f32 1.0, %v5283
        %v5425 = vsub.f32 1.0, %v5285
        %v5426 = vsub.f32 1.0, %v5287
        %v5427 = vsub.f32 1.0, %v5289
        %v5428 = vsub.f32 1.0, %v5291
        %v5429 = vsub.f32 1.0, %v5293
        %v5430 = vsub.f32 1.0, %v5295
        %v5431 = vsub.f32 1.0, %v5297
        %v5432 = vsub.f32 1.0, %v5299
        %v5433 = vsub.f32 1.0, %v5301
        %v5434 = vsub.f32 1.0, %v5303
        %v5435 = vsub.f32 1.0, %v5305
        %v5436 = vsub.f32 1.0, %v5307
        %v5437 = vsub.f32 1.0, %v5309
        %v5438 = vsub.f32 1.0, %v5311
        %v5439 = vsub.f32 1.0, %v5313
        %v5440 = vsub.f32 1.0, %v5315
        %v5441 = vsub.f32 1.0, %v5317
        %v5442 = vsub.f32 1.0, %v5319
        %v5443 = vsub.f32 1.0, %v5321
        %v5444 = vsub.f32 1.0, %v5323
        %v5445 = vsub.f32 1.0, %v5325
        %v5446 = vsub.f32 1.0, %v5327
        %v5447 = vsub.f32 1.0, %v5329
        %v5448 = vsub.f32 1.0, %v5331
        %v5449 = vsub.f32 1.0, %v5333
        %v5450 = vsub.f32 1.0, %v5335
        %v5451 = vsub.f32 1.0, %v5337
        %v5452 = vsub.f32 1.0, %v5339
        %v5453 = vsub.f32 1.0, %v5341
        %v5454 = vsub.f32 1.0, %v5343
        %v5455 = vsub.f32 1.0, %v5345
        %v5456 = vsub.f32 1.0, %v5347
        %v5457 = vsub.f32 1.0, %v5349
        %v5458 = vsub.f32 1.0, %v5351
        %v5459 = vsub.f32 1.0, %v5353
        %v5460 = vsub.f32 1.0, %v5355
        %v5461 = vsub.f32 1.0, %v5357
        %v5462 = vsub.f32 1.0, %v5359
        %v5463 = vsub.f32 1.0, %v5361
        %v5464 = vsub.f32 1.0, %v5363
        %v5465 = vsub.f32 1.0, %v5365
        %v5466 = vsub.f32 1.0, %v5367
        %v5467 = vsub.f32 1.0, %v5369
        %v5468 = vsub.f32 1.0, %v5371
        %v5469 = vsub.f32 1.0, %v5373
        %v5470 = vsub.f32 1.0, %v5375
        %v5471 = vsub.f32 1.0, %v5377
        %v5472 = vsub.f32 1.0, %v5379
        %v5473 = vsub.f32 1.0, %v5381
        %v5474 = vsub.f32 1.0, %v5383
        %v5475 = vsub.f32 1.0, %v5385
        %v5476 = vsub.f32 1.0, %v5387
        %v5477 = vsub.f32 1.0, %v5389
        %v5478 = vsub.f32 1.0, %v5391
        %v5479 = vsub.f32 1.0, %v5393
        %v5480 = vsub.f32 1.0, %v5395
        %v5481 = vsub.f32 1.0, %v5397
        %v5482 = vsub.f32 1.0, %v5399
        %v5483 = vsub.f32 1.0, %v5401
        %v5484 = vsub.f32 1.0, %v5403
        %v5485 = vsub.f32 1.0, %v5405
        %v5486 = vadd.f32 %v5406, 1e-08
        %v5487 = vadd.f32 %v5407, 1e-08
        %v5488 = vadd.f32 %v5408, 1e-08
        %v5489 = vadd.f32 %v5409, 1e-08
        %v5490 = vadd.f32 %v5410, 1e-08
        %v5491 = vadd.f32 %v5411, 1e-08
        %v5492 = vadd.f32 %v5412, 1e-08
        %v5493 = vadd.f32 %v5413, 1e-08
        %v5494 = vadd.f32 %v5414, 1e-08
        %v5495 = vadd.f32 %v5415, 1e-08
        %v5496 = vadd.f32 %v5416, 1e-08
        %v5497 = vadd.f32 %v5417, 1e-08
        %v5498 = vadd.f32 %v5418, 1e-08
        %v5499 = vadd.f32 %v5419, 1e-08
        %v5500 = vadd.f32 %v5420, 1e-08
        %v5501 = vadd.f32 %v5421, 1e-08
        %v5502 = vadd.f32 %v5422, 1e-08
        %v5503 = vadd.f32 %v5423, 1e-08
        %v5504 = vadd.f32 %v5424, 1e-08
        %v5505 = vadd.f32 %v5425, 1e-08
        %v5506 = vadd.f32 %v5426, 1e-08
        %v5507 = vadd.f32 %v5427, 1e-08
        %v5508 = vadd.f32 %v5428, 1e-08
        %v5509 = vadd.f32 %v5429, 1e-08
        %v5510 = vadd.f32 %v5430, 1e-08
        %v5511 = vadd.f32 %v5431, 1e-08
        %v5512 = vadd.f32 %v5432, 1e-08
        %v5513 = vadd.f32 %v5433, 1e-08
        %v5514 = vadd.f32 %v5434, 1e-08
        %v5515 = vadd.f32 %v5435, 1e-08
        %v5516 = vadd.f32 %v5436, 1e-08
        %v5517 = vadd.f32 %v5437, 1e-08
        %v5518 = vadd.f32 %v5438, 1e-08
        %v5519 = vadd.f32 %v5439, 1e-08
        %v5520 = vadd.f32 %v5440, 1e-08
        %v5521 = vadd.f32 %v5441, 1e-08
        %v5522 = vadd.f32 %v5442, 1e-08
        %v5523 = vadd.f32 %v5443, 1e-08
        %v5524 = vadd.f32 %v5444, 1e-08
        %v5525 = vadd.f32 %v5445, 1e-08
        %v5526 = vadd.f32 %v5446, 1e-08
        %v5527 = vadd.f32 %v5447, 1e-08
        %v5528 = vadd.f32 %v5448, 1e-08
        %v5529 = vadd.f32 %v5449, 1e-08
        %v5530 = vadd.f32 %v5450, 1e-08
        %v5531 = vadd.f32 %v5451, 1e-08
        %v5532 = vadd.f32 %v5452, 1e-08
        %v5533 = vadd.f32 %v5453, 1e-08
        %v5534 = vadd.f32 %v5454, 1e-08
        %v5535 = vadd.f32 %v5455, 1e-08
        %v5536 = vadd.f32 %v5456, 1e-08
        %v5537 = vadd.f32 %v5457, 1e-08
        %v5538 = vadd.f32 %v5458, 1e-08
        %v5539 = vadd.f32 %v5459, 1e-08
        %v5540 = vadd.f32 %v5460, 1e-08
        %v5541 = vadd.f32 %v5461, 1e-08
        %v5542 = vadd.f32 %v5462, 1e-08
        %v5543 = vadd.f32 %v5463, 1e-08
        %v5544 = vadd.f32 %v5464, 1e-08
        %v5545 = vadd.f32 %v5465, 1e-08
        %v5546 = vadd.f32 %v5466, 1e-08
        %v5547 = vadd.f32 %v5467, 1e-08
        %v5548 = vadd.f32 %v5468, 1e-08
        %v5549 = vadd.f32 %v5469, 1e-08
        %v5550 = vadd.f32 %v5470, 1e-08
        %v5551 = vadd.f32 %v5471, 1e-08
        %v5552 = vadd.f32 %v5472, 1e-08
        %v5553 = vadd.f32 %v5473, 1e-08
        %v5554 = vadd.f32 %v5474, 1e-08
        %v5555 = vadd.f32 %v5475, 1e-08
        %v5556 = vadd.f32 %v5476, 1e-08
        %v5557 = vadd.f32 %v5477, 1e-08
        %v5558 = vadd.f32 %v5478, 1e-08
        %v5559 = vadd.f32 %v5479, 1e-08
        %v5560 = vadd.f32 %v5480, 1e-08
        %v5561 = vadd.f32 %v5481, 1e-08
        %v5562 = vadd.f32 %v5482, 1e-08
        %v5563 = vadd.f32 %v5483, 1e-08
        %v5564 = vadd.f32 %v5484, 1e-08
        %v5565 = vadd.f32 %v5485, 1e-08
        %v5566 = vlog2.pop %v5486
        %v5567 = vmul.f32 %v5566, 0.6931472
        %v5568 = vlog2.pop %v5487
        %v5569 = vmul.f32 %v5568, 0.6931472
        %v5570 = vlog2.pop %v5488
        %v5571 = vmul.f32 %v5570, 0.6931472
        %v5572 = vlog2.pop %v5489
        %v5573 = vmul.f32 %v5572, 0.6931472
        %v5574 = vlog2.pop %v5490
        %v5575 = vmul.f32 %v5574, 0.6931472
        %v5576 = vlog2.pop %v5491
        %v5577 = vmul.f32 %v5576, 0.6931472
        %v5578 = vlog2.pop %v5492
        %v5579 = vmul.f32 %v5578, 0.6931472
        %v5580 = vlog2.pop %v5493
        %v5581 = vmul.f32 %v5580, 0.6931472
        %v5582 = vlog2.pop %v5494
        %v5583 = vmul.f32 %v5582, 0.6931472
        %v5584 = vlog2.pop %v5495
        %v5585 = vmul.f32 %v5584, 0.6931472
        %v5586 = vlog2.pop %v5496
        %v5587 = vmul.f32 %v5586, 0.6931472
        %v5588 = vlog2.pop %v5497
        %v5589 = vmul.f32 %v5588, 0.6931472
        %v5590 = vlog2.pop %v5498
        %v5591 = vmul.f32 %v5590, 0.6931472
        %v5592 = vlog2.pop %v5499
        %v5593 = vmul.f32 %v5592, 0.6931472
        %v5594 = vlog2.pop %v5500
        %v5595 = vmul.f32 %v5594, 0.6931472
        %v5596 = vlog2.pop %v5501
        %v5597 = vmul.f32 %v5596, 0.6931472
        %v5598 = vlog2.pop %v5502
        %v5599 = vmul.f32 %v5598, 0.6931472
        %v5600 = vlog2.pop %v5503
        %v5601 = vmul.f32 %v5600, 0.6931472
        %v5602 = vlog2.pop %v5504
        %v5603 = vmul.f32 %v5602, 0.6931472
        %v5604 = vlog2.pop %v5505
        %v5605 = vmul.f32 %v5604, 0.6931472
        %v5606 = vlog2.pop %v5506
        %v5607 = vmul.f32 %v5606, 0.6931472
        %v5608 = vlog2.pop %v5507
        %v5609 = vmul.f32 %v5608, 0.6931472
        %v5610 = vlog2.pop %v5508
        %v5611 = vmul.f32 %v5610, 0.6931472
        %v5612 = vlog2.pop %v5509
        %v5613 = vmul.f32 %v5612, 0.6931472
        %v5614 = vlog2.pop %v5510
        %v5615 = vmul.f32 %v5614, 0.6931472
        %v5616 = vlog2.pop %v5511
        %v5617 = vmul.f32 %v5616, 0.6931472
        %v5618 = vlog2.pop %v5512
        %v5619 = vmul.f32 %v5618, 0.6931472
        %v5620 = vlog2.pop %v5513
        %v5621 = vmul.f32 %v5620, 0.6931472
        %v5622 = vlog2.pop %v5514
        %v5623 = vmul.f32 %v5622, 0.6931472
        %v5624 = vlog2.pop %v5515
        %v5625 = vmul.f32 %v5624, 0.6931472
        %v5626 = vlog2.pop %v5516
        %v5627 = vmul.f32 %v5626, 0.6931472
        %v5628 = vlog2.pop %v5517
        %v5629 = vmul.f32 %v5628, 0.6931472
        %v5630 = vlog2.pop %v5518
        %v5631 = vmul.f32 %v5630, 0.6931472
        %v5632 = vlog2.pop %v5519
        %v5633 = vmul.f32 %v5632, 0.6931472
        %v5634 = vlog2.pop %v5520
        %v5635 = vmul.f32 %v5634, 0.6931472
        %v5636 = vlog2.pop %v5521
        %v5637 = vmul.f32 %v5636, 0.6931472
        %v5638 = vlog2.pop %v5522
        %v5639 = vmul.f32 %v5638, 0.6931472
        %v5640 = vlog2.pop %v5523
        %v5641 = vmul.f32 %v5640, 0.6931472
        %v5642 = vlog2.pop %v5524
        %v5643 = vmul.f32 %v5642, 0.6931472
        %v5644 = vlog2.pop %v5525
        %v5645 = vmul.f32 %v5644, 0.6931472
        %v5646 = vlog2.pop %v5526
        %v5647 = vmul.f32 %v5646, 0.6931472
        %v5648 = vlog2.pop %v5527
        %v5649 = vmul.f32 %v5648, 0.6931472
        %v5650 = vlog2.pop %v5528
        %v5651 = vmul.f32 %v5650, 0.6931472
        %v5652 = vlog2.pop %v5529
        %v5653 = vmul.f32 %v5652, 0.6931472
        %v5654 = vlog2.pop %v5530
        %v5655 = vmul.f32 %v5654, 0.6931472
        %v5656 = vlog2.pop %v5531
        %v5657 = vmul.f32 %v5656, 0.6931472
        %v5658 = vlog2.pop %v5532
        %v5659 = vmul.f32 %v5658, 0.6931472
        %v5660 = vlog2.pop %v5533
        %v5661 = vmul.f32 %v5660, 0.6931472
        %v5662 = vlog2.pop %v5534
        %v5663 = vmul.f32 %v5662, 0.6931472
        %v5664 = vlog2.pop %v5535
        %v5665 = vmul.f32 %v5664, 0.6931472
        %v5666 = vlog2.pop %v5536
        %v5667 = vmul.f32 %v5666, 0.6931472
        %v5668 = vlog2.pop %v5537
        %v5669 = vmul.f32 %v5668, 0.6931472
        %v5670 = vlog2.pop %v5538
        %v5671 = vmul.f32 %v5670, 0.6931472
        %v5672 = vlog2.pop %v5539
        %v5673 = vmul.f32 %v5672, 0.6931472
        %v5674 = vlog2.pop %v5540
        %v5675 = vmul.f32 %v5674, 0.6931472
        %v5676 = vlog2.pop %v5541
        %v5677 = vmul.f32 %v5676, 0.6931472
        %v5678 = vlog2.pop %v5542
        %v5679 = vmul.f32 %v5678, 0.6931472
        %v5680 = vlog2.pop %v5543
        %v5681 = vmul.f32 %v5680, 0.6931472
        %v5682 = vlog2.pop %v5544
        %v5683 = vmul.f32 %v5682, 0.6931472
        %v5684 = vlog2.pop %v5545
        %v5685 = vmul.f32 %v5684, 0.6931472
        %v5686 = vlog2.pop %v5546
        %v5687 = vmul.f32 %v5686, 0.6931472
        %v5688 = vlog2.pop %v5547
        %v5689 = vmul.f32 %v5688, 0.6931472
        %v5690 = vlog2.pop %v5548
        %v5691 = vmul.f32 %v5690, 0.6931472
        %v5692 = vlog2.pop %v5549
        %v5693 = vmul.f32 %v5692, 0.6931472
        %v5694 = vlog2.pop %v5550
        %v5695 = vmul.f32 %v5694, 0.6931472
        %v5696 = vlog2.pop %v5551
        %v5697 = vmul.f32 %v5696, 0.6931472
        %v5698 = vlog2.pop %v5552
        %v5699 = vmul.f32 %v5698, 0.6931472
        %v5700 = vlog2.pop %v5553
        %v5701 = vmul.f32 %v5700, 0.6931472
        %v5702 = vlog2.pop %v5554
        %v5703 = vmul.f32 %v5702, 0.6931472
        %v5704 = vlog2.pop %v5555
        %v5705 = vmul.f32 %v5704, 0.6931472
        %v5706 = vlog2.pop %v5556
        %v5707 = vmul.f32 %v5706, 0.6931472
        %v5708 = vlog2.pop %v5557
        %v5709 = vmul.f32 %v5708, 0.6931472
        %v5710 = vlog2.pop %v5558
        %v5711 = vmul.f32 %v5710, 0.6931472
        %v5712 = vlog2.pop %v5559
        %v5713 = vmul.f32 %v5712, 0.6931472
        %v5714 = vlog2.pop %v5560
        %v5715 = vmul.f32 %v5714, 0.6931472
        %v5716 = vlog2.pop %v5561
        %v5717 = vmul.f32 %v5716, 0.6931472
        %v5718 = vlog2.pop %v5562
        %v5719 = vmul.f32 %v5718, 0.6931472
        %v5720 = vlog2.pop %v5563
        %v5721 = vmul.f32 %v5720, 0.6931472
        %v5722 = vlog2.pop %v5564
        %v5723 = vmul.f32 %v5722, 0.6931472
        %v5724 = vlog2.pop %v5565
        %v5725 = vmul.f32 %v5724, 0.6931472
        %v5726 = vsel %vm5166, %v5567, %v5086
        %v5727 = vsel %vm5167, %v5569, %v5087
        %v5728 = vsel %vm5168, %v5571, %v5088
        %v5729 = vsel %vm5169, %v5573, %v5089
        %v5730 = vsel %vm5170, %v5575, %v5090
        %v5731 = vsel %vm5171, %v5577, %v5091
        %v5732 = vsel %vm5172, %v5579, %v5092
        %v5733 = vsel %vm5173, %v5581, %v5093
        %v5734 = vsel %vm5174, %v5583, %v5094
        %v5735 = vsel %vm5175, %v5585, %v5095
        %v5736 = vsel %vm5176, %v5587, %v5096
        %v5737 = vsel %vm5177, %v5589, %v5097
        %v5738 = vsel %vm5178, %v5591, %v5098
        %v5739 = vsel %vm5179, %v5593, %v5099
        %v5740 = vsel %vm5180, %v5595, %v5100
        %v5741 = vsel %vm5181, %v5597, %v5101
        %v5742 = vsel %vm5182, %v5599, %v5102
        %v5743 = vsel %vm5183, %v5601, %v5103
        %v5744 = vsel %vm5184, %v5603, %v5104
        %v5745 = vsel %vm5185, %v5605, %v5105
        %v5746 = vsel %vm5186, %v5607, %v5106
        %v5747 = vsel %vm5187, %v5609, %v5107
        %v5748 = vsel %vm5188, %v5611, %v5108
        %v5749 = vsel %vm5189, %v5613, %v5109
        %v5750 = vsel %vm5190, %v5615, %v5110
        %v5751 = vsel %vm5191, %v5617, %v5111
        %v5752 = vsel %vm5192, %v5619, %v5112
        %v5753 = vsel %vm5193, %v5621, %v5113
        %v5754 = vsel %vm5194, %v5623, %v5114
        %v5755 = vsel %vm5195, %v5625, %v5115
        %v5756 = vsel %vm5196, %v5627, %v5116
        %v5757 = vsel %vm5197, %v5629, %v5117
        %v5758 = vsel %vm5198, %v5631, %v5118
        %v5759 = vsel %vm5199, %v5633, %v5119
        %v5760 = vsel %vm5200, %v5635, %v5120
        %v5761 = vsel %vm5201, %v5637, %v5121
        %v5762 = vsel %vm5202, %v5639, %v5122
        %v5763 = vsel %vm5203, %v5641, %v5123
        %v5764 = vsel %vm5204, %v5643, %v5124
        %v5765 = vsel %vm5205, %v5645, %v5125
        %v5766 = vsel %vm5206, %v5647, %v5126
        %v5767 = vsel %vm5207, %v5649, %v5127
        %v5768 = vsel %vm5208, %v5651, %v5128
        %v5769 = vsel %vm5209, %v5653, %v5129
        %v5770 = vsel %vm5210, %v5655, %v5130
        %v5771 = vsel %vm5211, %v5657, %v5131
        %v5772 = vsel %vm5212, %v5659, %v5132
        %v5773 = vsel %vm5213, %v5661, %v5133
        %v5774 = vsel %vm5214, %v5663, %v5134
        %v5775 = vsel %vm5215, %v5665, %v5135
        %v5776 = vsel %vm5216, %v5667, %v5136
        %v5777 = vsel %vm5217, %v5669, %v5137
        %v5778 = vsel %vm5218, %v5671, %v5138
        %v5779 = vsel %vm5219, %v5673, %v5139
        %v5780 = vsel %vm5220, %v5675, %v5140
        %v5781 = vsel %vm5221, %v5677, %v5141
        %v5782 = vsel %vm5222, %v5679, %v5142
        %v5783 = vsel %vm5223, %v5681, %v5143
        %v5784 = vsel %vm5224, %v5683, %v5144
        %v5785 = vsel %vm5225, %v5685, %v5145
        %v5786 = vsel %vm5226, %v5687, %v5146
        %v5787 = vsel %vm5227, %v5689, %v5147
        %v5788 = vsel %vm5228, %v5691, %v5148
        %v5789 = vsel %vm5229, %v5693, %v5149
        %v5790 = vsel %vm5230, %v5695, %v5150
        %v5791 = vsel %vm5231, %v5697, %v5151
        %v5792 = vsel %vm5232, %v5699, %v5152
        %v5793 = vsel %vm5233, %v5701, %v5153
        %v5794 = vsel %vm5234, %v5703, %v5154
        %v5795 = vsel %vm5235, %v5705, %v5155
        %v5796 = vsel %vm5236, %v5707, %v5156
        %v5797 = vsel %vm5237, %v5709, %v5157
        %v5798 = vsel %vm5238, %v5711, %v5158
        %v5799 = vsel %vm5239, %v5713, %v5159
        %v5800 = vsel %vm5240, %v5715, %v5160
        %v5801 = vsel %vm5241, %v5717, %v5161
        %v5802 = vsel %vm5242, %v5719, %v5162
        %v5803 = vsel %vm5243, %v5721, %v5163
        %v5804 = vsel %vm5244, %v5723, %v5164
        %v5805 = vsel %vm5245, %v5725, %v5165
        %5806 = vst [vmem:[%s211] sm:$0xff] %v5726
        %5807 = vst [vmem:[%s211 + $0x8] sm:$0xff] %v5727
        %5808 = vst [vmem:[%s211 + $0x10] sm:$0xff] %v5728
        %5809 = vst [vmem:[%s211 + $0x18] sm:$0xff] %v5729
        %5810 = vst [vmem:[%s211 + $0x20] sm:$0xff] %v5730
        %5811 = vst [vmem:[%s211 + $0x28] sm:$0xff] %v5731
        %5812 = vst [vmem:[%s211 + $0x30] sm:$0xff] %v5732
        %5813 = vst [vmem:[%s211 + $0x38] sm:$0xff] %v5733
        %5814 = vst [vmem:[%s211 + $0x40] sm:$0xff] %v5734
        %5815 = vst [vmem:[%s211 + $0x48] sm:$0xff] %v5735
        %5816 = vst [vmem:[%s211 + $0x50] sm:$0xff] %v5736
        %5817 = vst [vmem:[%s211 + $0x58] sm:$0xff] %v5737
        %5818 = vst [vmem:[%s211 + $0x60] sm:$0xff] %v5738
        %5819 = vst [vmem:[%s211 + $0x68] sm:$0xff] %v5739
        %5820 = vst [vmem:[%s211 + $0x70] sm:$0xff] %v5740
        %5821 = vst [vmem:[%s211 + $0x78] sm:$0xff] %v5741
        %5822 = vst [vmem:[%s211 + $0x80] sm:$0xff] %v5742
        %5823 = vst [vmem:[%s211 + $0x88] sm:$0xff] %v5743
        %5824 = vst [vmem:[%s211 + $0x90] sm:$0xff] %v5744
        %5825 = vst [vmem:[%s211 + $0x98] sm:$0xff] %v5745
        %5826 = vst [vmem:[%s211 + $0xa0] sm:$0xff] %v5746
        %5827 = vst [vmem:[%s211 + $0xa8] sm:$0xff] %v5747
        %5828 = vst [vmem:[%s211 + $0xb0] sm:$0xff] %v5748
        %5829 = vst [vmem:[%s211 + $0xb8] sm:$0xff] %v5749
        %5830 = vst [vmem:[%s211 + $0xc0] sm:$0xff] %v5750
        %5831 = vst [vmem:[%s211 + $0xc8] sm:$0xff] %v5751
        %5832 = vst [vmem:[%s211 + $0xd0] sm:$0xff] %v5752
        %5833 = vst [vmem:[%s211 + $0xd8] sm:$0xff] %v5753
        %5834 = vst [vmem:[%s211 + $0xe0] sm:$0xff] %v5754
        %5835 = vst [vmem:[%s211 + $0xe8] sm:$0xff] %v5755
        %5836 = vst [vmem:[%s211 + $0xf0] sm:$0xff] %v5756
        %5837 = vst [vmem:[%s211 + $0xf8] sm:$0xff] %v5757
        %5838 = vst [vmem:[%s211 + $0x100] sm:$0xff] %v5758
        %5839 = vst [vmem:[%s211 + $0x108] sm:$0xff] %v5759
        %5840 = vst [vmem:[%s211 + $0x110] sm:$0xff] %v5760
        %5841 = vst [vmem:[%s211 + $0x118] sm:$0xff] %v5761
        %5842 = vst [vmem:[%s211 + $0x120] sm:$0xff] %v5762
        %5843 = vst [vmem:[%s211 + $0x128] sm:$0xff] %v5763
        %5844 = vst [vmem:[%s211 + $0x130] sm:$0xff] %v5764
        %5845 = vst [vmem:[%s211 + $0x138] sm:$0xff] %v5765
        %5846 = vst [vmem:[%s211 + $0x140] sm:$0xff] %v5766
        %5847 = vst [vmem:[%s211 + $0x148] sm:$0xff] %v5767
        %5848 = vst [vmem:[%s211 + $0x150] sm:$0xff] %v5768
        %5849 = vst [vmem:[%s211 + $0x158] sm:$0xff] %v5769
        %5850 = vst [vmem:[%s211 + $0x160] sm:$0xff] %v5770
        %5851 = vst [vmem:[%s211 + $0x168] sm:$0xff] %v5771
        %5852 = vst [vmem:[%s211 + $0x170] sm:$0xff] %v5772
        %5853 = vst [vmem:[%s211 + $0x178] sm:$0xff] %v5773
        %5854 = vst [vmem:[%s211 + $0x180] sm:$0xff] %v5774
        %5855 = vst [vmem:[%s211 + $0x188] sm:$0xff] %v5775
        %5856 = vst [vmem:[%s211 + $0x190] sm:$0xff] %v5776
        %5857 = vst [vmem:[%s211 + $0x198] sm:$0xff] %v5777
        %5858 = vst [vmem:[%s211 + $0x1a0] sm:$0xff] %v5778
        %5859 = vst [vmem:[%s211 + $0x1a8] sm:$0xff] %v5779
        %5860 = vst [vmem:[%s211 + $0x1b0] sm:$0xff] %v5780
        %5861 = vst [vmem:[%s211 + $0x1b8] sm:$0xff] %v5781
        %5862 = vst [vmem:[%s211 + $0x1c0] sm:$0xff] %v5782
        %5863 = vst [vmem:[%s211 + $0x1c8] sm:$0xff] %v5783
        %5864 = vst [vmem:[%s211 + $0x1d0] sm:$0xff] %v5784
        %5865 = vst [vmem:[%s211 + $0x1d8] sm:$0xff] %v5785
        %5866 = vst [vmem:[%s211 + $0x1e0] sm:$0xff] %v5786
        %5867 = vst [vmem:[%s211 + $0x1e8] sm:$0xff] %v5787
        %5868 = vst [vmem:[%s211 + $0x1f0] sm:$0xff] %v5788
        %5869 = vst [vmem:[%s211 + $0x1f8] sm:$0xff] %v5789
        %5870 = vst [vmem:[%s211 + $0x200] sm:$0xff] %v5790
        %5871 = vst [vmem:[%s211 + $0x208] sm:$0xff] %v5791
        %5872 = vst [vmem:[%s211 + $0x210] sm:$0xff] %v5792
        %5873 = vst [vmem:[%s211 + $0x218] sm:$0xff] %v5793
        %5874 = vst [vmem:[%s211 + $0x220] sm:$0xff] %v5794
        %5875 = vst [vmem:[%s211 + $0x228] sm:$0xff] %v5795
        %5876 = vst [vmem:[%s211 + $0x230] sm:$0xff] %v5796
        %5877 = vst [vmem:[%s211 + $0x238] sm:$0xff] %v5797
        %5878 = vst [vmem:[%s211 + $0x240] sm:$0xff] %v5798
        %5879 = vst [vmem:[%s211 + $0x248] sm:$0xff] %v5799
        %5880 = vst [vmem:[%s211 + $0x250] sm:$0xff] %v5800
        %5881 = vst [vmem:[%s211 + $0x258] sm:$0xff] %v5801
        %5882 = vst [vmem:[%s211 + $0x260] sm:$0xff] %v5802
        %5883 = vst [vmem:[%s211 + $0x268] sm:$0xff] %v5803
        %5884 = vst [vmem:[%s211 + $0x270] sm:$0xff] %v5804
        %5885 = vst [vmem:[%s211 + $0x278] sm:$0xff] %v5805
        %s5886 = sand.u32 %s118, 1
        %s5887 = scalar_lea.sflag [#allocation3], %s5886
        %s5888 = sand.u32 %s118, 1
        %s5889 = smul.addr %s5888, 640
        %s5890 = scalar_lea.vmem [#allocation2], %s5889
        // Predicated region
        $region33: #{_forward.1} parent=31 // pred_check
          %p5891 = pneg %p128
        $region34: #{_forward.1} parent=31 // pred_check_branch
          %5893 = sbr.rel (%p5891) target = $region36
        $region35: #{_forward.1} parent=31 // pred_region
          %s5894 = smul.u32 20, %s22
          %s5895 = smul.u32 4, %s23
          %s5896 = ssub.s32 41, %s5894
          %p5897 = scmp.lt.s32.totalorder %s5896, 20
          %s5898 = scalar_select %p5897, %s5896, 20
          %s5899 = smul.u32 128, %s5898
          %s5900 = smul.u32 %s5899, 4
          %s5902 = ssub.s32 10240, %s5900
          %5903 = vsyncadd %s5887, %s5902
          %p5904 = scmp.ne.s32.totalorder 0, %s5900
          %s5905 = smul.addr %s5894, 8
          %s5906 = sadd.s32 %s5895, %s5905
          %s5907 = smul.addr %s5906, 128
          %s5908 = scalar_lea.hbm %s4, %s5907
          %s5909 = smul.u32 32, %s5898
          %s5910 = sshll.u32 %s5890, 4
          %s5911 = int_to_ptr.vmem [resolvable:$true] %s5910
          %s5912 = sshll.u32 %s5909, 4
          %5916 = dma.vmem_to_hbm [thread:$0]  (%p5904), %s5911, %s5912, %s5908, %s5887, 512, 1024, 32
        $region36: #{_forward.1} parent=31 // pred_fallthru
          _
      $region32: #{_forward.1} parent=5 // pred_fallthru
        _
      %p5917 = scmp.le.s32.totalorder 2, %s13
      // Predicated region
      $region37: #{_forward.1} parent=5 // pred_check
        %p5918 = pneg %p5917
      $region38: #{_forward.1} parent=5 // pred_check_branch
        %5920 = sbr.rel (%p5918) target = $region40
      $region39: #{_forward.1} parent=5 // pred_region
        %s5921 = ssub.s32 %s13, 2
        // Predicated region
        $region41: #{_forward.1} parent=39 // pred_check
          %p5922 = pneg %p134
        $region42: #{_forward.1} parent=39 // pred_check_branch
          %5924 = sbr.rel (%p5922) target = $region44
        $region43: #{_forward.1} parent=39 // pred_region
          %s5925 = sand.u32 %s119, 1
          %s5926 = scalar_lea.sflag [#allocation3], %s5925
          %s5927 = sand.u32 %s119, 1
          %s5928 = smul.addr %s5927, 640
          %s5929 = scalar_lea.vmem [#allocation2], %s5928
          %5930 = dma.done %s5926, 10240
        $region44: #{_forward.1} parent=39 // pred_fallthru
          _
      $region40: #{_forward.1} parent=5 // pred_fallthru
        _
    $region6: #{_forward.1} parent=1 // loop_footer
      %s17 = sadd.s32 1, %s13
    $region7: #{_forward.1} parent=1 // loop_footer_branch
      %12 = sbr.rel target = $region3
    $region8: #{_forward.1} parent=1 // loop_exit
      _
    %5931 = vsyncpa [#allocation3], 1
    %s5932 = scalar_lea.sflag [#allocation3], 1
    %5933 = vsyncpa %s5932, 1

</llo_original>
